<compile_context>
chip_gen: v6e
topology: v6e:2x2x1
jax: 0.10.0
libtpu: 0.0.40
codegen_flags: <defaults>
</compile_context>

<pallas_src>
import math

import jax
import jax.numpy as jnp
from jax import lax
from jax.experimental import pallas as pl
from jax.experimental.pallas import tpu as pltpu

N = 8        # instances (patches) per bag
D = 32       # input_dim
C = 4        # output_dim (number of classes)
M = 128      # d_model of the attention "q" branch

CC = C * C           # Conv1d taps per instance after folding the feature dim
C_PAD = 128          # lane padding so classes / q1 slices sit on 128-lane edges
WF = C_PAD + M + CC  # fused first-layer weight width (272)

_INV_SQRT_M = 1.0 / math.sqrt(M)


def dsmil_kernel(feats_ref, wf_ref, bf_ref, wq2_ref, bq2_ref, rep_ref, grp_ref,
                 bc_ref, out_ref):
    bb, n, d = feats_ref.shape
    rows = bb * n
    # [BB, N, D] -> [BB*N, D]: layout-preserving (N == 8 == f32 sublane tile).
    feats = feats_ref[...].reshape(rows, d)

    # ---- fused first pass: one [rows, D] @ [D, 272] matmul -------------------
    #   lanes [0, C)           i_classifier logits                (classes)
    #   lanes [128, 256)       first q-layer pre-activation       (h)
    #   lanes [256, 256+CC)    feats . wconv[o, c, :] conv taps   (hconv)
    z = jnp.dot(feats, wf_ref[...], preferred_element_type=jnp.float32) + bf_ref[...]
    classes = z[:, :C]                                    # [rows, C]
    h = jnp.maximum(z[:, C_PAD:C_PAD + M], 0.0)           # [rows, M]
    hconv = z[:, C_PAD + M:]                              # [rows, CC]

    # ---- q(.) second layer + tanh --------------------------------------------
    Q = jnp.tanh(jnp.dot(h, wq2_ref[...], preferred_element_type=jnp.float32)
                 + bq2_ref[...])                          # [rows, M]

    classes_b = classes.reshape(bb, n, C)                 # sublane-aligned split
    Q_b = Q.reshape(bb, n, M)

    # ---- per-bag critical instance: first-occurrence argmax over axis 1 ------
    max_vals = jnp.max(classes_b, axis=1, keepdims=True)          # [bb, 1, C]
    iota_f = lax.broadcasted_iota(jnp.int32, (bb, n, C), 1).astype(jnp.float32)
    cand = jnp.where(classes_b == max_vals, iota_f, jnp.float32(n))
    m_idx = jnp.min(cand, axis=1, keepdims=True)                  # [bb, 1, C]
    onehot = (iota_f == m_idx).astype(jnp.float32)                # [bb, n, C]

    # ---- attention: q is row-wise so q(feats[m_idx]) == Q[m_idx] --------------
    # Gram matrix + one-hot gather keeps both contractions in canonical
    # batched-matmul form.
    S = jnp.einsum('bnm,bkm->bnk', Q_b, Q_b,
                   preferred_element_type=jnp.float32)            # [bb, n, n]
    A = jnp.einsum('bnk,bkc->bnc', S, onehot,
                   preferred_element_type=jnp.float32) * _INV_SQRT_M

    # softmax over instances; scores are tanh-bounded (|.| <= sqrt(M)) so the
    # max-subtraction is unnecessary for f32 range safety.
    A = jnp.exp(A)
    A = A * pl.reciprocal(jnp.sum(A, axis=1, keepdims=True), approx=False)

    # ---- bag prediction (Conv1d over B = A^T @ feats, sums reassociated) -----
    # pred[b,o] = bc[o] + sum_{n,c} A[b,n,c] * hconv[b,n, o*C + c]
    a_rep = jnp.dot(A.reshape(rows, C), rep_ref[...],
                    preferred_element_type=jnp.float32)           # [rows, CC]
    r = jnp.sum((a_rep * hconv).reshape(bb, n, CC), axis=1)       # [bb, CC]
    out_ref[...] = jnp.dot(r, grp_ref[...],
                           preferred_element_type=jnp.float32) + bc_ref[...]


def init_params(key):
    ks = jax.random.split(key, 8)
    return {
        # i_classifier Linear(D, C)
        'wi': jax.random.normal(ks[0], (D, C), jnp.float32) * 0.1,
        'bi': jax.random.normal(ks[1], (C,), jnp.float32) * 0.1,
        # b_classifier.q : Linear(D, M) -> ReLU -> Linear(M, M) -> Tanh
        'wq1': jax.random.normal(ks[2], (D, M), jnp.float32) * 0.1,
        'bq1': jax.random.normal(ks[3], (M,), jnp.float32) * 0.1,
        'wq2': jax.random.normal(ks[4], (M, M), jnp.float32) * 0.05,
        'bq2': jax.random.normal(ks[5], (M,), jnp.float32) * 0.05,
        # fcc: Conv1d(C, C, kernel_size=D) -> weight [C_out, C_in, D], bias [C]
        'wconv': jax.random.normal(ks[6], (C, C, D), jnp.float32) * 0.1,
        'bconv': jax.random.normal(ks[7], (C,), jnp.float32) * 0.1,
    }


def prepare_params(p):
    """One-time re-layout of params into kernel form (hoisted out of forward)."""
    # Conv taps arranged so column (o*C + c) holds wconv[o, c, :].
    wck = jnp.transpose(p['wconv'], (2, 0, 1)).reshape(D, CC)      # [D, CC]
    wf = jnp.zeros((D, WF), jnp.float32)
    wf = wf.at[:, :C].set(p['wi'])
    wf = wf.at[:, C_PAD:C_PAD + M].set(p['wq1'])
    wf = wf.at[:, C_PAD + M:].set(wck)
    bf = jnp.zeros((1, WF), jnp.float32)
    bf = bf.at[0, :C].set(p['bi'])
    bf = bf.at[0, C_PAD:C_PAD + M].set(p['bq1'])
    eye = jnp.eye(C, dtype=jnp.float32)
    return {
        'wf': wf,                                 # [D, 272] fused weight
        'bf': bf,                                 # [1, 272] fused bias
        'wq2': p['wq2'],                          # [M, M]
        'bq2': p['bq2'].reshape(1, M),            # [1, M]
        'rep': jnp.tile(eye, (1, C)),             # [C, CC]  A[:,c] -> column o*C+c
        'grp': jnp.repeat(eye, C, axis=0),        # [CC, C]  sum lane groups of C
        'bc': p['bconv'].reshape(1, C),           # [1, C]
    }


def _bag_block(bags):
    if bags >= 32:
        return 16            # 128 instance rows per grid step
    if bags >= 16:
        return 8             # keep >= 2 grid steps (v7x has 2 TensorCores)
    return bags              # single step; block == full array


def dsmil_forward(x, kp):
    """x['patch_features'] is [N, D] (single bag) or [BAGS, N, D] (batched)."""
    feats = x['patch_features']
    if feats.ndim == 2:
        feats = feats[None]                               # [1, N, D]
    bags, n, d = feats.shape

    bb = _bag_block(bags)
    padded = ((bags + bb - 1) // bb) * bb
    if padded != bags:
        # Padded bags compute on zeros (no NaNs) and are sliced off below.
        feats = jnp.pad(feats, ((0, padded - bags), (0, 0), (0, 0)))

    def wspec(a):
        return pl.BlockSpec(a.shape, lambda i: (0, 0))

    out = pl.pallas_call(
        dsmil_kernel,
        out_shape=jax.ShapeDtypeStruct((padded, C), jnp.float32),
        grid=(padded // bb,),
        in_specs=[
            pl.BlockSpec((bb, n, d), lambda i: (i, 0, 0)),   # per-step bag block
            wspec(kp['wf']), wspec(kp['bf']),
            wspec(kp['wq2']), wspec(kp['bq2']),
            wspec(kp['rep']), wspec(kp['grp']), wspec(kp['bc']),
        ],
        out_specs=pl.BlockSpec((bb, C), lambda i: (i, 0)),   # lane-dense per step
        compiler_params=pltpu.CompilerParams(
            dimension_semantics=("parallel",)),              # shard bags over TCs
    )(feats, kp['wf'], kp['bf'], kp['wq2'], kp['bq2'],
      kp['rep'], kp['grp'], kp['bc'])

    return {'output': out[:bags]}                            # [BAGS, C]


def dsmil_ref(feats, p):
    """Pure-JAX single-bag reference mirroring the PyTorch module."""
    classes = feats @ p['wi'] + p['bi']

    def q_fn(z):
        return jnp.tanh(jnp.maximum(z @ p['wq1'] + p['bq1'], 0.0) @ p['wq2'] + p['bq2'])

    Q = q_fn(feats)
    m_idx = jnp.argmax(classes, axis=0)
    m_feats = feats[m_idx]
    q_max = q_fn(m_feats)
    A = jax.nn.softmax(Q @ q_max.T / jnp.sqrt(jnp.float32(M)), axis=0)
    B = A.T @ feats
    pred = jnp.einsum('cd,ocd->o', B, p['wconv']) + p['bconv']
    return pred.reshape(1, -1)


if __name__ == "__main__":
    key = jax.random.PRNGKey(0)
    k_param, k_data = jax.random.split(key)
    params = init_params(k_param)
    kparams = prepare_params(params)             # hoisted: done once, not per call

    BAGS = 32
    feats = jax.random.normal(k_data, (BAGS, N, D), jnp.float32)

    # batched path: 16 bags (128 instance rows) per grid step, 2 grid steps
    out = dsmil_forward({'patch_features': feats}, kparams)
    jax.block_until_ready(out['output'])
    assert out['output'].shape == (BAGS, C)

    for b in range(BAGS):
        ref = dsmil_ref(feats[b], params)
        assert jnp.allclose(out['output'][b:b + 1], ref, atol=2e-3, rtol=2e-3), (
            b, out['output'][b], ref)

    # single-bag path matches the original module interface ([N, D] -> [1, C])
    out1 = dsmil_forward({'patch_features': feats[0]}, kparams)
    jax.block_until_ready(out1['output'])
    assert out1['output'].shape == (1, C)
    assert jnp.allclose(out1['output'], dsmil_ref(feats[0], params),
                        atol=2e-3, rtol=2e-3)

    print("KERNEL_OK")
</pallas_src>

<mosaic_0001>
module attributes {stable_mosaic.version = 11 : i64} {
  func.func @dsmil_kernel(%arg0: i32, %arg1: memref<16x8x32xf32, #tpu.memory_space<vmem>>, %arg2: memref<32x272xf32, #tpu.memory_space<vmem>>, %arg3: memref<1x272xf32, #tpu.memory_space<vmem>>, %arg4: memref<128x128xf32, #tpu.memory_space<vmem>>, %arg5: memref<1x128xf32, #tpu.memory_space<vmem>>, %arg6: memref<4x16xf32, #tpu.memory_space<vmem>>, %arg7: memref<16x4xf32, #tpu.memory_space<vmem>>, %arg8: memref<1x4xf32, #tpu.memory_space<vmem>>, %arg9: memref<16x4xf32, #tpu.memory_space<vmem>>) attributes {dimension_semantics = [#tpu.dimension_semantics<parallel>], iteration_bounds = array<i64: 2>, scalar_prefetch = 0 : i64, scratch_operands = 0 : i64, tpu.core_type = #tpu.core_type<tc>, window_params = [{transform_indices = @transform_0, window_bounds = array<i64: 16, 8, 32>}, {pipeline_mode = #tpu.pipeline_mode<synchronous>, transform_indices = @transform_1, window_bounds = array<i64: 32, 272>}, {pipeline_mode = #tpu.pipeline_mode<synchronous>, transform_indices = @transform_2, window_bounds = array<i64: 1, 272>}, {pipeline_mode = #tpu.pipeline_mode<synchronous>, transform_indices = @transform_3, window_bounds = array<i64: 128, 128>}, {pipeline_mode = #tpu.pipeline_mode<synchronous>, transform_indices = @transform_4, window_bounds = array<i64: 1, 128>}, {pipeline_mode = #tpu.pipeline_mode<synchronous>, transform_indices = @transform_5, window_bounds = array<i64: 4, 16>}, {pipeline_mode = #tpu.pipeline_mode<synchronous>, transform_indices = @transform_6, window_bounds = array<i64: 16, 4>}, {pipeline_mode = #tpu.pipeline_mode<synchronous>, transform_indices = @transform_7, window_bounds = array<i64: 1, 4>}, {transform_indices = @transform_8, window_bounds = array<i64: 16, 4>}]} {
    %c0 = arith.constant 0 : index
    %c0_0 = arith.constant 0 : index
    %c0_1 = arith.constant 0 : index
    %0 = vector.load %arg1[%c0, %c0_0, %c0_1] : memref<16x8x32xf32, #tpu.memory_space<vmem>>, vector<16x8x32xf32>
    %1 = vector.shape_cast %0 : vector<16x8x32xf32> to vector<128x32xf32>
    %c0_2 = arith.constant 0 : index
    %c0_3 = arith.constant 0 : index
    %2 = vector.load %arg2[%c0_2, %c0_3] : memref<32x272xf32, #tpu.memory_space<vmem>>, vector<32x272xf32>
    %cst = arith.constant dense<0.000000e+00> : vector<128x272xf32>
    %3 = tpu.matmul %1, %2, %cst {dimension_numbers = #tpu.dot_dimension_numbers<[1], [0], [0], [1], [0, 0, 1, 1], [], []>} : vector<128x32xf32>, vector<32x272xf32>, vector<128x272xf32> -> vector<128x272xf32>
    %c0_4 = arith.constant 0 : index
    %c0_5 = arith.constant 0 : index
    %4 = vector.load %arg3[%c0_4, %c0_5] : memref<1x272xf32, #tpu.memory_space<vmem>>, vector<1x272xf32>
    %5 = vector.broadcast %4 : vector<1x272xf32> to vector<128x272xf32>
    %6 = arith.addf %3, %5 : vector<128x272xf32>
    %7 = vector.extract_strided_slice %6 {offsets = [0, 0], sizes = [128, 4], strides = [1, 1]} : vector<128x272xf32> to vector<128x4xf32>
    %8 = vector.extract_strided_slice %6 {offsets = [0, 128], sizes = [128, 128], strides = [1, 1]} : vector<128x272xf32> to vector<128x128xf32>
    %cst_6 = arith.constant 0.000000e+00 : f32
    %9 = vector.broadcast %cst_6 : f32 to vector<128x128xf32>
    %10 = arith.maximumf %8, %9 : vector<128x128xf32>
    %11 = vector.extract_strided_slice %6 {offsets = [0, 256], sizes = [128, 16], strides = [1, 1]} : vector<128x272xf32> to vector<128x16xf32>
    %c0_7 = arith.constant 0 : index
    %c0_8 = arith.constant 0 : index
    %12 = vector.load %arg4[%c0_7, %c0_8] : memref<128x128xf32, #tpu.memory_space<vmem>>, vector<128x128xf32>
    %cst_9 = arith.constant dense<0.000000e+00> : vector<128x128xf32>
    %13 = tpu.matmul %10, %12, %cst_9 {dimension_numbers = #tpu.dot_dimension_numbers<[1], [0], [0], [1], [0, 0, 1, 1], [], []>} : vector<128x128xf32>, vector<128x128xf32>, vector<128x128xf32> -> vector<128x128xf32>
    %c0_10 = arith.constant 0 : index
    %c0_11 = arith.constant 0 : index
    %14 = vector.load %arg5[%c0_10, %c0_11] : memref<1x128xf32, #tpu.memory_space<vmem>>, vector<1x128xf32>
    %15 = vector.broadcast %14 : vector<1x128xf32> to vector<128x128xf32>
    %16 = arith.addf %13, %15 : vector<128x128xf32>
    %17 = math.tanh %16 : vector<128x128xf32>
    %18 = vector.shape_cast %7 : vector<128x4xf32> to vector<16x8x4xf32>
    %19 = vector.shape_cast %17 : vector<128x128xf32> to vector<16x8x128xf32>
    %cst_12 = arith.constant dense<0xFF800000> : vector<16x4xf32>
    %20 = vector.multi_reduction <maximumf>, %18, %cst_12 [1] : vector<16x8x4xf32> to vector<16x4xf32>
    %21 = vector.shape_cast %20 : vector<16x4xf32> to vector<16x1x4xf32>
    %22 = tpu.iota {dimensions = array<i32: 1>} : vector<16x8x4xi32>
    %23 = arith.sitofp %22 : vector<16x8x4xi32> to vector<16x8x4xf32>
    %24 = vector.broadcast %21 : vector<16x1x4xf32> to vector<16x8x4xf32>
    %25 = arith.cmpf oeq, %18, %24 : vector<16x8x4xf32>
    %cst_13 = arith.constant 8.000000e+00 : f32
    %26 = vector.broadcast %cst_13 : f32 to vector<16x8x4xf32>
    %27 = arith.select %25, %23, %26 : vector<16x8x4xi1>, vector<16x8x4xf32>
    %cst_14 = arith.constant dense<0x7F800000> : vector<16x4xf32>
    %28 = vector.multi_reduction <minimumf>, %27, %cst_14 [1] : vector<16x8x4xf32> to vector<16x4xf32>
    %29 = vector.shape_cast %28 : vector<16x4xf32> to vector<16x1x4xf32>
    %30 = vector.broadcast %29 : vector<16x1x4xf32> to vector<16x8x4xf32>
    %31 = arith.cmpf oeq, %23, %30 : vector<16x8x4xf32>
    %32 = arith.extui %31 : vector<16x8x4xi1> to vector<16x8x4xi32>
    %33 = arith.sitofp %32 : vector<16x8x4xi32> to vector<16x8x4xf32>
    "tpu.trace_start"() <{level = 10 : i32, message = "bnm,bkm->bnk"}> : () -> ()
    %cst_15 = arith.constant dense<0.000000e+00> : vector<16x8x8xf32>
    %34 = tpu.matmul %19, %19, %cst_15 {dimension_numbers = #tpu.dot_dimension_numbers<[2], [2], [1], [1], [0, 0, 0, 1, 1, 1], [0], [0]>} : vector<16x8x128xf32>, vector<16x8x128xf32>, vector<16x8x8xf32> -> vector<16x8x8xf32>
    "tpu.trace_stop"() : () -> ()
    "tpu.trace_start"() <{level = 10 : i32, message = "bnk,bkc->bnc"}> : () -> ()
    %cst_16 = arith.constant dense<0.000000e+00> : vector<16x8x4xf32>
    %35 = tpu.matmul %34, %33, %cst_16 {dimension_numbers = #tpu.dot_dimension_numbers<[2], [1], [1], [2], [0, 0, 0, 1, 1, 2], [0], [0]>} : vector<16x8x8xf32>, vector<16x8x4xf32>, vector<16x8x4xf32> -> vector<16x8x4xf32>
    "tpu.trace_stop"() : () -> ()
    %cst_17 = arith.constant 0.0883883461 : f32
    %36 = vector.broadcast %cst_17 : f32 to vector<16x8x4xf32>
    %37 = arith.mulf %35, %36 : vector<16x8x4xf32>
    %38 = math.exp %37 : vector<16x8x4xf32>
    %cst_18 = arith.constant dense<0.000000e+00> : vector<16x4xf32>
    %39 = vector.multi_reduction <add>, %38, %cst_18 [1] : vector<16x8x4xf32> to vector<16x4xf32>
    %40 = vector.shape_cast %39 : vector<16x4xf32> to vector<16x1x4xf32>
    %41 = tpu.reciprocal %40 : vector<16x1x4xf32> -> vector<16x1x4xf32>
    %42 = vector.broadcast %41 : vector<16x1x4xf32> to vector<16x8x4xf32>
    %43 = arith.mulf %38, %42 : vector<16x8x4xf32>
    %44 = vector.shape_cast %43 : vector<16x8x4xf32> to vector<128x4xf32>
    %c0_19 = arith.constant 0 : index
    %c0_20 = arith.constant 0 : index
    %45 = vector.load %arg6[%c0_19, %c0_20] : memref<4x16xf32, #tpu.memory_space<vmem>>, vector<4x16xf32>
    %cst_21 = arith.constant dense<0.000000e+00> : vector<128x16xf32>
    %46 = tpu.matmul %44, %45, %cst_21 {dimension_numbers = #tpu.dot_dimension_numbers<[1], [0], [0], [1], [0, 0, 1, 1], [], []>} : vector<128x4xf32>, vector<4x16xf32>, vector<128x16xf32> -> vector<128x16xf32>
    %47 = arith.mulf %46, %11 : vector<128x16xf32>
    %48 = vector.shape_cast %47 : vector<128x16xf32> to vector<16x8x16xf32>
    %cst_22 = arith.constant dense<0.000000e+00> : vector<16x16xf32>
    %49 = vector.multi_reduction <add>, %48, %cst_22 [1] : vector<16x8x16xf32> to vector<16x16xf32>
    %c0_23 = arith.constant 0 : index
    %c0_24 = arith.constant 0 : index
    %50 = vector.load %arg7[%c0_23, %c0_24] : memref<16x4xf32, #tpu.memory_space<vmem>>, vector<16x4xf32>
    %cst_25 = arith.constant dense<0.000000e+00> : vector<16x4xf32>
    %51 = tpu.matmul %49, %50, %cst_25 {dimension_numbers = #tpu.dot_dimension_numbers<[1], [0], [0], [1], [0, 0, 1, 1], [], []>} : vector<16x16xf32>, vector<16x4xf32>, vector<16x4xf32> -> vector<16x4xf32>
    %c0_26 = arith.constant 0 : index
    %c0_27 = arith.constant 0 : index
    %52 = vector.load %arg8[%c0_26, %c0_27] : memref<1x4xf32, #tpu.memory_space<vmem>>, vector<1x4xf32>
    %53 = vector.broadcast %52 : vector<1x4xf32> to vector<16x4xf32>
    %54 = arith.addf %51, %53 : vector<16x4xf32>
    %c0_28 = arith.constant 0 : index
    %c0_29 = arith.constant 0 : index
    %55 = vector.load %arg9[%c0_28, %c0_29] : memref<16x4xf32, #tpu.memory_space<vmem>>, vector<16x4xf32>
    tpu.vector_store %arg9[%c0_28, %c0_29], %54 {strides = array<i32>} : memref<16x4xf32, #tpu.memory_space<vmem>>, vector<16x4xf32>,
    return
  }
  func.func @transform_0(%arg0: i32) -> (i32, i32, i32) {
    %c0_i32 = arith.constant 0 : i32
    %c0_i32_0 = arith.constant 0 : i32
    %c0_i32_1 = arith.constant 0 : i32
    return %arg0, %c0_i32, %c0_i32_0 : i32, i32, i32
  }
  func.func @transform_1(%arg0: i32) -> (i32, i32) {
    %c0_i32 = arith.constant 0 : i32
    %c0_i32_0 = arith.constant 0 : i32
    %c0_i32_1 = arith.constant 0 : i32
    return %c0_i32, %c0_i32_0 : i32, i32
  }
  func.func @transform_2(%arg0: i32) -> (i32, i32) {
    %c0_i32 = arith.constant 0 : i32
    %c0_i32_0 = arith.constant 0 : i32
    %c0_i32_1 = arith.constant 0 : i32
    return %c0_i32, %c0_i32_0 : i32, i32
  }
  func.func @transform_3(%arg0: i32) -> (i32, i32) {
    %c0_i32 = arith.constant 0 : i32
    %c0_i32_0 = arith.constant 0 : i32
    %c0_i32_1 = arith.constant 0 : i32
    return %c0_i32, %c0_i32_0 : i32, i32
  }
  func.func @transform_4(%arg0: i32) -> (i32, i32) {
    %c0_i32 = arith.constant 0 : i32
    %c0_i32_0 = arith.constant 0 : i32
    %c0_i32_1 = arith.constant 0 : i32
    return %c0_i32, %c0_i32_0 : i32, i32
  }
  func.func @transform_5(%arg0: i32) -> (i32, i32) {
    %c0_i32 = arith.constant 0 : i32
    %c0_i32_0 = arith.constant 0 : i32
    %c0_i32_1 = arith.constant 0 : i32
    return %c0_i32, %c0_i32_0 : i32, i32
  }
  func.func @transform_6(%arg0: i32) -> (i32, i32) {
    %c0_i32 = arith.constant 0 : i32
    %c0_i32_0 = arith.constant 0 : i32
    %c0_i32_1 = arith.constant 0 : i32
    return %c0_i32, %c0_i32_0 : i32, i32
  }
  func.func @transform_7(%arg0: i32) -> (i32, i32) {
    %c0_i32 = arith.constant 0 : i32
    %c0_i32_0 = arith.constant 0 : i32
    %c0_i32_1 = arith.constant 0 : i32
    return %c0_i32, %c0_i32_0 : i32, i32
  }
  func.func @transform_8(%arg0: i32) -> (i32, i32) {
    %c0_i32 = arith.constant 0 : i32
    %c0_i32_0 = arith.constant 0 : i32
    return %arg0, %c0_i32 : i32, i32
  }
}

</mosaic_0001>

<llo_original>
// kernel: tpu_custom_call.1
$region0: #{tpu_custom_call.1}
  #allocation0 [shape = 'u32[]', space=smem, size = 0x4, offset = 0x4, fixed_abs, tag = 'smem constant byte address 0x4 - core index']
  #allocation1 [shape = 'u32[144,128]{1,0:T(1,128)}', space=vmem, size = 0x12000, scoped, tag = 'internal scratch']
  %s0 = inlined_call_operand.hbm [shape: f32[32,8,32], index: 0, kind: input, shape index: {}]
  %s1 = inlined_call_operand.hbm [shape: f32[32,272], index: 1, kind: input, shape index: {}]
  %s2 = inlined_call_operand.vmem [shape: f32[1,272], index: 2, kind: input, shape index: {}]
  %s3 = inlined_call_operand.hbm [shape: f32[128,128], index: 3, kind: input, shape index: {}]
  %s4 = inlined_call_operand.vmem [shape: f32[1,128], index: 4, kind: input, shape index: {}]
  %s5 = inlined_call_operand.vmem [shape: f32[4,16], index: 5, kind: input, shape index: {}]
  %s6 = inlined_call_operand.vmem [shape: f32[16,4], index: 6, kind: input, shape index: {}]
  %s7 = inlined_call_operand.vmem [shape: f32[1,4], index: 7, kind: input, shape index: {}]
  %s8 = inlined_call_operand.vmem [shape: f32[32,4], index: 8, kind: output, shape index: {}]
  %s9 = sld [smem:[#allocation0]]
  $region77: #{tpu_custom_call.1} parent=0
    _
  %s11 = ssub.s32 1, %s9
  %s12 = scalar_select 0, %s11, %s9
  $region1: #{tpu_custom_call.1} parent=0
    #allocation2 [shape = 'u8[131072]{0}', space=vmem, size = 0x20000, scoped, tag = 'input window, operand 0']
    #allocation3 [shape = 's32[2]{0}', space=sflag, size = 0x8, scoped, tag = 'scoped memory for tpu_custom_call.1']
    #allocation4 [shape = 'u8[49152]{0}', space=vmem, size = 0xc000, scoped, tag = 'input window, operand 1, single buffered']
    #allocation5 [shape = 's32[1]{0}', space=sflag, size = 0x4, scoped, tag = 'scoped memory for tpu_custom_call.1']
    #allocation6 [shape = 'u8[65536]{0}', space=vmem, size = 0x10000, scoped, tag = 'input window, operand 3, single buffered']
    %13 = vsyncpa [#allocation3], 0
    %s14 = scalar_lea.sflag [#allocation3], 1
    %15 = vsyncpa %s14, 0
    %16 = vsyncpa [#allocation5], 0
    loop: start=0, step=1, limit=4
    $region2: #{tpu_custom_call.1} parent=1 // loop_pre_header
      _
    $region3: #{tpu_custom_call.1} parent=1 // loop_header
      %s18 = sphi 0, %s22
      %p19 = scmp.ge.s32.totalorder %s18, 4
      %s28 = sphi 0, %s30
      %s31 = sphi 0, %s28
      %s32 = sphi 0, %s31
      %s48 = sphi 0, %s32
      %s52 = sphi 0, %s52
      %s54 = sphi 0, %s52
      %s55 = sphi 0, %s54
      %s69 = sphi 0, %s55
      %s73 = sphi 0, %s73
      %s75 = sphi 0, %s73
      %s76 = sphi 0, %s75
      %s90 = sphi 0, %s76
      %s94 = sphi 0, %s94
      %s96 = sphi 0, %s94
      %s97 = sphi 0, %s96
      %s111 = sphi 0, %s97
      %s115 = sphi 0, %s115
      %s117 = sphi 0, %s115
      %s118 = sphi 0, %s117
      %s132 = sphi 0, %s118
      %s136 = sphi 0, %s136
      %s138 = sphi 0, %s136
      %s139 = sphi 0, %s138
      %s153 = sphi 0, %s139
      %s157 = sphi 0, %s157
      %s159 = sphi 0, %s157
      %s160 = sphi 0, %s159
      %s174 = sphi 0, %s160
      %s178 = sphi 0, %s178
      %s180 = sphi 0, %s178
      %s181 = sphi 0, %s180
      %s195 = sphi 0, %s181
      %s201 = sphi 0, %s203
      %s204 = sphi 0, %s201
      %s205 = sphi 0, %s204
      %s221 = sphi 0, %s205
    $region4: #{tpu_custom_call.1} parent=1 // loop_header_branch
      %21 = sbr.rel (%p19) target = $region8
    $region5: #{tpu_custom_call.1} parent=1 // loop_body
      %s23 = ssub.s32 %s18, 1
      %s24 = ssub.s32 %s18, 2
      %s25 = sadd.s32 %s18, 1
      %s26 = ssub.s32 %s18, %s25
      %p27 = scmp.eq.s32.totalorder %s26, 0
      %s29 = sadd.s32 %s28, 1
      %s30 = scalar_select %p27, %s28, %s29
      %p33 = pneg %p27
      %p34 = scmp.eq.s32.totalorder %s18, 1
      %p35 = por %p33, %p34
      %p36 = scmp.ne.s32.totalorder %s28, %s31
      %p37 = scmp.eq.s32.totalorder %s18, 0
      %p38 = por %p36, %p37
      %p39 = scmp.ne.s32.totalorder %s28, %s31
      %p40 = scmp.eq.s32.totalorder %s23, 1
      %p41 = por %p39, %p40
      %p42 = scmp.ne.s32.totalorder %s31, %s32
      %p43 = scmp.eq.s32.totalorder %s23, 0
      %p44 = por %p42, %p43
      %p45 = scmp.ne.s32.totalorder %s31, %s32
      %p46 = scmp.eq.s32.totalorder %s24, 1
      %p47 = por %p45, %p46
      %p49 = scmp.ne.s32.totalorder %s32, %s48
      %p50 = scmp.eq.s32.totalorder %s24, 0
      %p51 = por %p49, %p50
      %s53 = sadd.s32 %s52, 1
      %p56 = scmp.eq.s32.totalorder %s18, 1
      %p57 = scmp.ne.s32.totalorder %s52, %s54
      %p58 = scmp.eq.s32.totalorder %s18, 0
      %p59 = por %p57, %p58
      %p60 = scmp.ne.s32.totalorder %s52, %s54
      %p61 = scmp.eq.s32.totalorder %s23, 1
      %p62 = por %p60, %p61
      %p63 = scmp.ne.s32.totalorder %s54, %s55
      %p64 = scmp.eq.s32.totalorder %s23, 0
      %p65 = por %p63, %p64
      %p66 = scmp.ne.s32.totalorder %s54, %s55
      %p67 = scmp.eq.s32.totalorder %s24, 1
      %p68 = por %p66, %p67
      %p70 = scmp.ne.s32.totalorder %s55, %s69
      %p71 = scmp.eq.s32.totalorder %s24, 0
      %p72 = por %p70, %p71
      %s74 = sadd.s32 %s73, 1
      %p77 = scmp.eq.s32.totalorder %s18, 1
      %p78 = scmp.ne.s32.totalorder %s73, %s75
      %p79 = scmp.eq.s32.totalorder %s18, 0
      %p80 = por %p78, %p79
      %p81 = scmp.ne.s32.totalorder %s73, %s75
      %p82 = scmp.eq.s32.totalorder %s23, 1
      %p83 = por %p81, %p82
      %p84 = scmp.ne.s32.totalorder %s75, %s76
      %p85 = scmp.eq.s32.totalorder %s23, 0
      %p86 = por %p84, %p85
      %p87 = scmp.ne.s32.totalorder %s75, %s76
      %p88 = scmp.eq.s32.totalorder %s24, 1
      %p89 = por %p87, %p88
      %p91 = scmp.ne.s32.totalorder %s76, %s90
      %p92 = scmp.eq.s32.totalorder %s24, 0
      %p93 = por %p91, %p92
      %s95 = sadd.s32 %s94, 1
      %p98 = scmp.eq.s32.totalorder %s18, 1
      %p99 = scmp.ne.s32.totalorder %s94, %s96
      %p100 = scmp.eq.s32.totalorder %s18, 0
      %p101 = por %p99, %p100
      %p102 = scmp.ne.s32.totalorder %s94, %s96
      %p103 = scmp.eq.s32.totalorder %s23, 1
      %p104 = por %p102, %p103
      %p105 = scmp.ne.s32.totalorder %s96, %s97
      %p106 = scmp.eq.s32.totalorder %s23, 0
      %p107 = por %p105, %p106
      %p108 = scmp.ne.s32.totalorder %s96, %s97
      %p109 = scmp.eq.s32.totalorder %s24, 1
      %p110 = por %p108, %p109
      %p112 = scmp.ne.s32.totalorder %s97, %s111
      %p113 = scmp.eq.s32.totalorder %s24, 0
      %p114 = por %p112, %p113
      %s116 = sadd.s32 %s115, 1
      %p119 = scmp.eq.s32.totalorder %s18, 1
      %p120 = scmp.ne.s32.totalorder %s115, %s117
      %p121 = scmp.eq.s32.totalorder %s18, 0
      %p122 = por %p120, %p121
      %p123 = scmp.ne.s32.totalorder %s115, %s117
      %p124 = scmp.eq.s32.totalorder %s23, 1
      %p125 = por %p123, %p124
      %p126 = scmp.ne.s32.totalorder %s117, %s118
      %p127 = scmp.eq.s32.totalorder %s23, 0
      %p128 = por %p126, %p127
      %p129 = scmp.ne.s32.totalorder %s117, %s118
      %p130 = scmp.eq.s32.totalorder %s24, 1
      %p131 = por %p129, %p130
      %p133 = scmp.ne.s32.totalorder %s118, %s132
      %p134 = scmp.eq.s32.totalorder %s24, 0
      %p135 = por %p133, %p134
      %s137 = sadd.s32 %s136, 1
      %p140 = scmp.eq.s32.totalorder %s18, 1
      %p141 = scmp.ne.s32.totalorder %s136, %s138
      %p142 = scmp.eq.s32.totalorder %s18, 0
      %p143 = por %p141, %p142
      %p144 = scmp.ne.s32.totalorder %s136, %s138
      %p145 = scmp.eq.s32.totalorder %s23, 1
      %p146 = por %p144, %p145
      %p147 = scmp.ne.s32.totalorder %s138, %s139
      %p148 = scmp.eq.s32.totalorder %s23, 0
      %p149 = por %p147, %p148
      %p150 = scmp.ne.s32.totalorder %s138, %s139
      %p151 = scmp.eq.s32.totalorder %s24, 1
      %p152 = por %p150, %p151
      %p154 = scmp.ne.s32.totalorder %s139, %s153
      %p155 = scmp.eq.s32.totalorder %s24, 0
      %p156 = por %p154, %p155
      %s158 = sadd.s32 %s157, 1
      %p161 = scmp.eq.s32.totalorder %s18, 1
      %p162 = scmp.ne.s32.totalorder %s157, %s159
      %p163 = scmp.eq.s32.totalorder %s18, 0
      %p164 = por %p162, %p163
      %p165 = scmp.ne.s32.totalorder %s157, %s159
      %p166 = scmp.eq.s32.totalorder %s23, 1
      %p167 = por %p165, %p166
      %p168 = scmp.ne.s32.totalorder %s159, %s160
      %p169 = scmp.eq.s32.totalorder %s23, 0
      %p170 = por %p168, %p169
      %p171 = scmp.ne.s32.totalorder %s159, %s160
      %p172 = scmp.eq.s32.totalorder %s24, 1
      %p173 = por %p171, %p172
      %p175 = scmp.ne.s32.totalorder %s160, %s174
      %p176 = scmp.eq.s32.totalorder %s24, 0
      %p177 = por %p175, %p176
      %s179 = sadd.s32 %s178, 1
      %p182 = scmp.eq.s32.totalorder %s18, 1
      %p183 = scmp.ne.s32.totalorder %s178, %s180
      %p184 = scmp.eq.s32.totalorder %s18, 0
      %p185 = por %p183, %p184
      %p186 = scmp.ne.s32.totalorder %s178, %s180
      %p187 = scmp.eq.s32.totalorder %s23, 1
      %p188 = por %p186, %p187
      %p189 = scmp.ne.s32.totalorder %s180, %s181
      %p190 = scmp.eq.s32.totalorder %s23, 0
      %p191 = por %p189, %p190
      %p192 = scmp.ne.s32.totalorder %s180, %s181
      %p193 = scmp.eq.s32.totalorder %s24, 1
      %p194 = por %p192, %p193
      %p196 = scmp.ne.s32.totalorder %s181, %s195
      %p197 = scmp.eq.s32.totalorder %s24, 0
      %p198 = por %p196, %p197
      %s199 = ssub.s32 %s18, %s25
      %p200 = scmp.eq.s32.totalorder %s199, 0
      %s202 = sadd.s32 %s201, 1
      %s203 = scalar_select %p200, %s201, %s202
      %p206 = pneg %p200
      %p207 = scmp.eq.s32.totalorder %s18, 1
      %p208 = por %p206, %p207
      %p209 = scmp.ne.s32.totalorder %s201, %s204
      %p210 = scmp.eq.s32.totalorder %s18, 0
      %p211 = por %p209, %p210
      %p212 = scmp.ne.s32.totalorder %s201, %s204
      %p213 = scmp.eq.s32.totalorder %s23, 1
      %p214 = por %p212, %p213
      %p215 = scmp.ne.s32.totalorder %s204, %s205
      %p216 = scmp.eq.s32.totalorder %s23, 0
      %p217 = por %p215, %p216
      %p218 = scmp.ne.s32.totalorder %s204, %s205
      %p219 = scmp.eq.s32.totalorder %s24, 1
      %p220 = por %p218, %p219
      %p222 = scmp.ne.s32.totalorder %s205, %s221
      %p223 = scmp.eq.s32.totalorder %s24, 0
      %p224 = por %p222, %p223
      %p225 = scmp.le.s32.totalorder 1, %s18
      %p226 = scmp.lt.s32.totalorder %s18, 3
      %p227 = pnand %p225, %p226
      %p228 = pneg %p227
      // Predicated region
      $region9: #{tpu_custom_call.1} parent=5 // pred_check
        _
      $region10: #{tpu_custom_call.1} parent=5 // pred_check_branch
        %230 = sbr.rel (%p227) target = $region12
      $region11: #{tpu_custom_call.1} parent=5 // pred_region
        %s231 = ssub.s32 %s18, 1
        // Predicated region
        $region13: #{tpu_custom_call.1} parent=11 // pred_check
          %p232 = pneg %p65
        $region14: #{tpu_custom_call.1} parent=11 // pred_check_branch
          %234 = sbr.rel (%p232) target = $region16
        $region15: #{tpu_custom_call.1} parent=11 // pred_region
          %s236 = ssub.s32 1536, 1536
          %237 = vsyncadd [#allocation5], %s236
          %s238 = sshll.u32 [#allocation4], 4
          %s239 = int_to_ptr.vmem [resolvable:$true] %s238
          %244 = dma.hbm_to_vmem [thread:$0]  %s1, 1536, %s239, [#allocation5], 384, 384, 24
        $region16: #{tpu_custom_call.1} parent=11 // pred_fallthru
          _
        // Predicated region
        $region17: #{tpu_custom_call.1} parent=11 // pred_check
          %p245 = pneg %p86
        $region18: #{tpu_custom_call.1} parent=11 // pred_check_branch
          %247 = sbr.rel (%p245) target = $region20
        $region19: #{tpu_custom_call.1} parent=11 // pred_region
          _
        $region20: #{tpu_custom_call.1} parent=11 // pred_fallthru
          _
        // Predicated region
        $region21: #{tpu_custom_call.1} parent=11 // pred_check
          %p248 = pneg %p107
        $region22: #{tpu_custom_call.1} parent=11 // pred_check_branch
          %250 = sbr.rel (%p248) target = $region24
        $region23: #{tpu_custom_call.1} parent=11 // pred_region
          %s252 = ssub.s32 2048, 2048
          %253 = vsyncadd [#allocation5], %s252
          %s254 = sshll.u32 [#allocation6], 4
          %s255 = int_to_ptr.vmem [resolvable:$true] %s254
          %260 = dma.hbm_to_vmem [thread:$0]  %s3, 2048, %s255, [#allocation5], 128, 128, 8
        $region24: #{tpu_custom_call.1} parent=11 // pred_fallthru
          _
        // Predicated region
        $region25: #{tpu_custom_call.1} parent=11 // pred_check
          %p261 = pneg %p128
        $region26: #{tpu_custom_call.1} parent=11 // pred_check_branch
          %263 = sbr.rel (%p261) target = $region28
        $region27: #{tpu_custom_call.1} parent=11 // pred_region
          _
        $region28: #{tpu_custom_call.1} parent=11 // pred_fallthru
          _
        // Predicated region
        $region29: #{tpu_custom_call.1} parent=11 // pred_check
          %p264 = pneg %p149
        $region30: #{tpu_custom_call.1} parent=11 // pred_check_branch
          %266 = sbr.rel (%p264) target = $region32
        $region31: #{tpu_custom_call.1} parent=11 // pred_region
          _
        $region32: #{tpu_custom_call.1} parent=11 // pred_fallthru
          _
        // Predicated region
        $region33: #{tpu_custom_call.1} parent=11 // pred_check
          %p267 = pneg %p170
        $region34: #{tpu_custom_call.1} parent=11 // pred_check_branch
          %269 = sbr.rel (%p267) target = $region36
        $region35: #{tpu_custom_call.1} parent=11 // pred_region
          _
        $region36: #{tpu_custom_call.1} parent=11 // pred_fallthru
          _
        // Predicated region
        $region37: #{tpu_custom_call.1} parent=11 // pred_check
          %p270 = pneg %p191
        $region38: #{tpu_custom_call.1} parent=11 // pred_check_branch
          %272 = sbr.rel (%p270) target = $region40
        $region39: #{tpu_custom_call.1} parent=11 // pred_region
          _
        $region40: #{tpu_custom_call.1} parent=11 // pred_fallthru
          _
      $region12: #{tpu_custom_call.1} parent=5 // pred_fallthru
        _
      %p273 = scmp.lt.s32.totalorder %s18, 2
      // Predicated region
      $region41: #{tpu_custom_call.1} parent=5 // pred_check
        %p274 = pneg %p273
      $region42: #{tpu_custom_call.1} parent=5 // pred_check_branch
        %276 = sbr.rel (%p274) target = $region44
      $region43: #{tpu_custom_call.1} parent=5 // pred_region
        // Predicated region
        $region45: #{tpu_custom_call.1} parent=43 // pred_check
          %p277 = pneg %p38
        $region46: #{tpu_custom_call.1} parent=43 // pred_check_branch
          %279 = sbr.rel (%p277) target = $region48
        $region47: #{tpu_custom_call.1} parent=43 // pred_region
          %s280 = sand.u32 %s28, 1
          %s281 = scalar_lea.sflag [#allocation3], %s280
          %s282 = sand.u32 %s28, 1
          %s283 = smul.addr %s282, 128
          %s284 = scalar_lea.vmem [#allocation2], %s283
          %s285 = smul.u32 16, %s18
          %s287 = ssub.s32 2048, 2048
          %288 = vsyncadd %s281, %s287
          %s289 = smul.addr %s285, 128
          %s290 = scalar_lea.hbm %s0, %s289
          %s291 = sshll.u32 %s284, 4
          %s292 = int_to_ptr.vmem [resolvable:$true] %s291
          %297 = dma.hbm_to_vmem [thread:$0]  %s290, 2048, %s292, %s281, 128, 128, 8
        $region48: #{tpu_custom_call.1} parent=43 // pred_fallthru
          _
      $region44: #{tpu_custom_call.1} parent=5 // pred_fallthru
        _
      %p298 = scmp.le.s32.totalorder 1, %s18
      %p299 = scmp.lt.s32.totalorder %s18, 3
      %p300 = pnand %p298, %p299
      %p301 = pneg %p300
      // Predicated region
      $region49: #{tpu_custom_call.1} parent=5 // pred_check
        _
      $region50: #{tpu_custom_call.1} parent=5 // pred_check_branch
        %303 = sbr.rel (%p300) target = $region52
      $region51: #{tpu_custom_call.1} parent=5 // pred_region
        %s304 = ssub.s32 %s18, 1
        %s305 = sand.u32 %s31, 1
        %s306 = scalar_lea.sflag [#allocation3], %s305
        %s307 = sand.u32 %s31, 1
        %s308 = smul.addr %s307, 128
        %s309 = scalar_lea.vmem [#allocation2], %s308
        // Predicated region
        $region53: #{tpu_custom_call.1} parent=51 // pred_check
          %p310 = pneg %p44
        $region54: #{tpu_custom_call.1} parent=51 // pred_check_branch
          %312 = sbr.rel (%p310) target = $region56
        $region55: #{tpu_custom_call.1} parent=51 // pred_region
          %313 = dma.done %s306, 2048
        $region56: #{tpu_custom_call.1} parent=51 // pred_fallthru
          _
        // Predicated region
        $region57: #{tpu_custom_call.1} parent=51 // pred_check
          %p314 = pneg %p65
        $region58: #{tpu_custom_call.1} parent=51 // pred_check_branch
          %316 = sbr.rel (%p314) target = $region60
        $region59: #{tpu_custom_call.1} parent=51 // pred_region
          %317 = dma.done [#allocation5], 1536
        $region60: #{tpu_custom_call.1} parent=51 // pred_fallthru
          _
        // Predicated region
        $region61: #{tpu_custom_call.1} parent=51 // pred_check
          %p318 = pneg %p107
        $region62: #{tpu_custom_call.1} parent=51 // pred_check_branch
          %320 = sbr.rel (%p318) target = $region64
        $region63: #{tpu_custom_call.1} parent=51 // pred_region
          %321 = dma.done [#allocation5], 2048
        $region64: #{tpu_custom_call.1} parent=51 // pred_fallthru
          _
        %s322 = sand.u32 %s31, 1
        %s323 = scalar_lea.sflag [#allocation3], %s322
        %s324 = sand.u32 %s31, 1
        %s325 = smul.addr %s324, 128
        %s326 = scalar_lea.vmem [#allocation2], %s325
        %p327 = pneg %p44
        %p328 = pneg %p41
        %p329 = pneg %p65
        %p330 = pneg %p62
        %p331 = pneg %p86
        %p332 = pneg %p83
        %p333 = pneg %p107
        %p334 = pneg %p104
        %p335 = pneg %p128
        %p336 = pneg %p125
        %p337 = pneg %p149
        %p338 = pneg %p146
        %p339 = pneg %p170
        %p340 = pneg %p167
        %p341 = pneg %p191
        %p342 = pneg %p188
        %p343 = pneg %p217
        %p344 = pneg %p214
        %s345 = smul.u32 2, %s23
        %p346 = scmp.lt.s32.totalorder %s345, 3
        %s347 = scalar_select %p346, %s345, 3
        %s348 = smul.addr %s347, 8
        %s349 = scalar_lea.vmem %s8, %s348
        %s350 = smul.u32 16, %s23
        %s351 = smul.u32 2, %s23
        %p352 = scmp.lt.s32.totalorder %s351, 3
        %s353 = scalar_select %p352, %s351, 3
        %s354 = smul.addr %s353, 8
        %s355 = scalar_lea.vmem %s8, %s354
        %s356 = smul.u32 2, %s23
        %v357 = vld [vmem:[%s309] sm:$0xff]
        %v358 = vld [vmem:[%s309 + $0x8] sm:$0xff]
        %v359 = vld [vmem:[%s309 + $0x10] sm:$0xff]
        %v360 = vld [vmem:[%s309 + $0x18] sm:$0xff]
        %v361 = vld [vmem:[%s309 + $0x20] sm:$0xff]
        %v362 = vld [vmem:[%s309 + $0x28] sm:$0xff]
        %v363 = vld [vmem:[%s309 + $0x30] sm:$0xff]
        %v364 = vld [vmem:[%s309 + $0x38] sm:$0xff]
        %v365 = vld [vmem:[%s309 + $0x40] sm:$0xff]
        %v366 = vld [vmem:[%s309 + $0x48] sm:$0xff]
        %v367 = vld [vmem:[%s309 + $0x50] sm:$0xff]
        %v368 = vld [vmem:[%s309 + $0x58] sm:$0xff]
        %v369 = vld [vmem:[%s309 + $0x60] sm:$0xff]
        %v370 = vld [vmem:[%s309 + $0x68] sm:$0xff]
        %v371 = vld [vmem:[%s309 + $0x70] sm:$0xff]
        %v372 = vld [vmem:[%s309 + $0x78] sm:$0xff]
        %v373 = vld [vmem:[#allocation4] sm:$0xff]
        %v374 = vld [vmem:[#allocation4 + $0x8] sm:$0xff]
        %v375 = vld [vmem:[#allocation4 + $0x10] sm:$0xff]
        %v376 = vld [vmem:[#allocation4 + $0x18] sm:$0xff]
        %v377 = vld [vmem:[#allocation4 + $0x20] sm:$0xff]
        %v378 = vld [vmem:[#allocation4 + $0x28] sm:$0xff]
        %v379 = vld [vmem:[#allocation4 + $0x30] sm:$0xff]
        %v380 = vld [vmem:[#allocation4 + $0x38] sm:$0xff]
        %v381 = vld [vmem:[#allocation4 + $0x40] sm:$0xff]
        %v382 = vld [vmem:[#allocation4 + $0x48] sm:$0xff]
        %v383 = vld [vmem:[#allocation4 + $0x50] sm:$0xff]
        %v384 = vld [vmem:[#allocation4 + $0x58] sm:$0xff]
        %v385 = vld [vmem:[%s2] sm:$0x7]
        %v387 = vlaneseq
        %v388 = vshrl.u32 %v387, 7
        %v389 = vsub.s32 0, %v388
        %v390 = vrot.slane %v385, %v389
        %v391 = vlaneseq
        %v392 = vshrl.u32 %v391, 7
        %v393 = vsub.s32 1, %v392
        %v394 = vrot.slane %v385, %v393
        %v395 = vlaneseq
        %v396 = vshrl.u32 %v395, 7
        %v397 = vsub.s32 2, %v396
        %v398 = vrot.slane %v385, %v397
        %vm402 = vcmask 261120
        %v404 = vsel %vm402, %v357, 0
        %v407 = vsel %vm402, %v358, 0
        %v410 = vsel %vm402, %v359, 0
        %v413 = vsel %vm402, %v360, 0
        %v416 = vsel %vm402, %v361, 0
        %v419 = vsel %vm402, %v362, 0
        %v422 = vsel %vm402, %v363, 0
        %v425 = vsel %vm402, %v364, 0
        %v428 = vsel %vm402, %v365, 0
        %v431 = vsel %vm402, %v366, 0
        %v434 = vsel %vm402, %v367, 0
        %v437 = vsel %vm402, %v368, 0
        %v440 = vsel %vm402, %v369, 0
        %v443 = vsel %vm402, %v370, 0
        %v446 = vsel %vm402, %v371, 0
        %v449 = vsel %vm402, %v372, 0
        %451 = vmatprep.subr.mxu0 0.0
        %452 = vmatpush1.msra.mxu0 0.0
        %453 = vmatprep.subr.mxu0 0.0
        %454 = vmatpush1.msra.mxu0 0.0
        %455 = vmatprep.subr.mxu0 0.0
        %456 = vmatpush1.msra.mxu0 0.0
        %457 = vmatprep.subr.mxu0 0.0
        %458 = vmatpush1.msra.mxu0 0.0
        %459 = vmatprep.subr.mxu0 0.0
        %460 = vmatpush1.msra.mxu0 0.0
        %461 = vmatprep.subr.mxu0 0.0
        %462 = vmatpush1.msra.mxu0 0.0
        %463 = vmatprep.subr.mxu0 0.0
        %464 = vmatpush1.msra.mxu0 0.0
        %465 = vmatprep.subr.mxu0 0.0
        %466 = vmatpush1.msra.mxu0 0.0
        %467 = vmatprep.subr.mxu0 0.0
        %468 = vmatpush1.msra.mxu0 0.0
        %469 = vmatprep.subr.mxu0 0.0
        %470 = vmatpush1.msra.mxu0 0.0
        %471 = vmatprep.subr.mxu0 0.0
        %472 = vmatpush1.msra.mxu0 0.0
        %473 = vmatprep.subr.mxu0 0.0
        %474 = vmatpush1.msra.mxu0 0.0
        %475 = vmatprep.subr.mxu0 %v383
        %476 = vmatpush1.msra.mxu0 %v382
        %477 = vmatprep.subr.mxu0 %v380
        %478 = vmatpush1.msra.mxu0 %v379
        %479 = vmatprep.subr.mxu0 %v377
        %480 = vmatpush1.msra.mxu0 %v376
        %481 = vmatprep.subr.mxu0 %v374
        %482 = vmatpush1.msra.mxu0 %v373
        %483 = vmatprep.subr.mxu0 0.0
        %484 = vmatpush2.msra.mxu0 0.0
        %485 = vmatprep.subr.mxu0 0.0
        %486 = vmatpush2.msra.mxu0 0.0
        %487 = vmatprep.subr.mxu0 0.0
        %488 = vmatpush2.msra.mxu0 0.0
        %489 = vmatprep.subr.mxu0 0.0
        %490 = vmatpush2.msra.mxu0 0.0
        %491 = vmatprep.subr.mxu0 0.0
        %492 = vmatpush2.msra.mxu0 0.0
        %493 = vmatprep.subr.mxu0 0.0
        %494 = vmatpush2.msra.mxu0 0.0
        %495 = vmatprep.subr.mxu0 0.0
        %496 = vmatpush2.msra.mxu0 0.0
        %497 = vmatprep.subr.mxu0 0.0
        %498 = vmatpush2.msra.mxu0 0.0
        %499 = vmatprep.subr.mxu0 0.0
        %500 = vmatpush2.msra.mxu0 0.0
        %501 = vmatprep.subr.mxu0 0.0
        %502 = vmatpush2.msra.mxu0 0.0
        %503 = vmatprep.subr.mxu0 0.0
        %504 = vmatpush2.msra.mxu0 0.0
        %505 = vmatprep.subr.mxu0 0.0
        %506 = vmatpush2.msra.mxu0 0.0
        %507 = vmatprep.subr.mxu0 0.0
        %508 = vmatpush2.msra.mxu0 0.0
        %509 = vmatprep.subr.mxu0 0.0
        %510 = vmatpush2.msra.mxu0 0.0
        %511 = vmatprep.subr.mxu0 0.0
        %512 = vmatpush2.msra.mxu0 0.0
        %513 = vmatprep.subr.mxu0 0.0
        %514 = vmatpush2.msra.mxu0 0.0
        %515 = vmatprep.mubr.f32.mxu0 0.0
        %516 = vmatmul.mubr.f32.gmra.mxu0 %v404
        %v517 = vpop.f32.mrf.mxu0
        %v518 = vadd.f32 %v390, %v517
        %v519 = vpop.f32.mrf.mxu0
        %v520 = vadd.f32 %v394, %v519
        %521 = vmatprep.mubr.f32.mxu0 0.0
        %522 = vmatmul.mubr.f32.gmra.mxu0 %v407
        %v523 = vpop.f32.mrf.mxu0
        %v524 = vadd.f32 %v390, %v523
        %v525 = vpop.f32.mrf.mxu0
        %v526 = vadd.f32 %v394, %v525
        %527 = vmatprep.mubr.f32.mxu0 0.0
        %528 = vmatmul.mubr.f32.gmra.mxu0 %v410
        %v529 = vpop.f32.mrf.mxu0
        %v530 = vadd.f32 %v390, %v529
        %v531 = vpop.f32.mrf.mxu0
        %v532 = vadd.f32 %v394, %v531
        %533 = vmatprep.mubr.f32.mxu0 0.0
        %534 = vmatmul.mubr.f32.gmra.mxu0 %v413
        %v535 = vpop.f32.mrf.mxu0
        %v536 = vadd.f32 %v390, %v535
        %v537 = vpop.f32.mrf.mxu0
        %v538 = vadd.f32 %v394, %v537
        %539 = vmatprep.mubr.f32.mxu0 0.0
        %540 = vmatmul.mubr.f32.gmra.mxu0 %v416
        %v541 = vpop.f32.mrf.mxu0
        %v542 = vadd.f32 %v390, %v541
        %v543 = vpop.f32.mrf.mxu0
        %v544 = vadd.f32 %v394, %v543
        %545 = vmatprep.mubr.f32.mxu0 0.0
        %546 = vmatmul.mubr.f32.gmra.mxu0 %v419
        %v547 = vpop.f32.mrf.mxu0
        %v548 = vadd.f32 %v390, %v547
        %v549 = vpop.f32.mrf.mxu0
        %v550 = vadd.f32 %v394, %v549
        %551 = vmatprep.mubr.f32.mxu0 0.0
        %552 = vmatmul.mubr.f32.gmra.mxu0 %v422
        %v553 = vpop.f32.mrf.mxu0
        %v554 = vadd.f32 %v390, %v553
        %v555 = vpop.f32.mrf.mxu0
        %v556 = vadd.f32 %v394, %v555
        %557 = vmatprep.mubr.f32.mxu0 0.0
        %558 = vmatmul.mubr.f32.gmra.mxu0 %v425
        %v559 = vpop.f32.mrf.mxu0
        %v560 = vadd.f32 %v390, %v559
        %v561 = vpop.f32.mrf.mxu0
        %v562 = vadd.f32 %v394, %v561
        %563 = vmatprep.mubr.f32.mxu0 0.0
        %564 = vmatmul.mubr.f32.gmra.mxu0 %v428
        %v565 = vpop.f32.mrf.mxu0
        %v566 = vadd.f32 %v390, %v565
        %v567 = vpop.f32.mrf.mxu0
        %v568 = vadd.f32 %v394, %v567
        %569 = vmatprep.mubr.f32.mxu0 0.0
        %570 = vmatmul.mubr.f32.gmra.mxu0 %v431
        %v571 = vpop.f32.mrf.mxu0
        %v572 = vadd.f32 %v390, %v571
        %v573 = vpop.f32.mrf.mxu0
        %v574 = vadd.f32 %v394, %v573
        %575 = vmatprep.mubr.f32.mxu0 0.0
        %576 = vmatmul.mubr.f32.gmra.mxu0 %v434
        %v577 = vpop.f32.mrf.mxu0
        %v578 = vadd.f32 %v390, %v577
        %v579 = vpop.f32.mrf.mxu0
        %v580 = vadd.f32 %v394, %v579
        %581 = vmatprep.mubr.f32.mxu0 0.0
        %582 = vmatmul.mubr.f32.gmra.mxu0 %v437
        %v583 = vpop.f32.mrf.mxu0
        %v584 = vadd.f32 %v390, %v583
        %v585 = vpop.f32.mrf.mxu0
        %v586 = vadd.f32 %v394, %v585
        %587 = vmatprep.mubr.f32.mxu0 0.0
        %588 = vmatmul.mubr.f32.gmra.mxu0 %v440
        %v589 = vpop.f32.mrf.mxu0
        %v590 = vadd.f32 %v390, %v589
        %v591 = vpop.f32.mrf.mxu0
        %v592 = vadd.f32 %v394, %v591
        %593 = vmatprep.mubr.f32.mxu0 0.0
        %594 = vmatmul.mubr.f32.gmra.mxu0 %v443
        %v595 = vpop.f32.mrf.mxu0
        %v596 = vadd.f32 %v390, %v595
        %v597 = vpop.f32.mrf.mxu0
        %v598 = vadd.f32 %v394, %v597
        %599 = vmatprep.mubr.f32.mxu0 0.0
        %600 = vmatmul.mubr.f32.gmra.mxu0 %v446
        %v601 = vpop.f32.mrf.mxu0
        %v602 = vadd.f32 %v390, %v601
        %v603 = vpop.f32.mrf.mxu0
        %v604 = vadd.f32 %v394, %v603
        %605 = vmatprep.mubr.f32.mxu0 0.0
        %606 = vmatmul.mubr.f32.gmra.mxu0 %v449
        %v607 = vpop.f32.mrf.mxu0
        %v608 = vadd.f32 %v390, %v607
        %v609 = vpop.f32.mrf.mxu0
        %v610 = vadd.f32 %v394, %v609
        %611 = vdwg.mxu0
        %612 = vmatprep.subr.mxu0 0.0
        %613 = vmatpush1.msra.mxu0 0.0
        %614 = vmatprep.subr.mxu0 0.0
        %615 = vmatpush1.msra.mxu0 0.0
        %616 = vmatprep.subr.mxu0 0.0
        %617 = vmatpush1.msra.mxu0 0.0
        %618 = vmatprep.subr.mxu0 0.0
        %619 = vmatpush1.msra.mxu0 0.0
        %620 = vmatprep.subr.mxu0 0.0
        %621 = vmatpush1.msra.mxu0 0.0
        %622 = vmatprep.subr.mxu0 0.0
        %623 = vmatpush1.msra.mxu0 0.0
        %624 = vmatprep.subr.mxu0 0.0
        %625 = vmatpush1.msra.mxu0 0.0
        %626 = vmatprep.subr.mxu0 0.0
        %627 = vmatpush1.msra.mxu0 0.0
        %628 = vmatprep.subr.mxu0 0.0
        %629 = vmatpush1.msra.mxu0 0.0
        %630 = vmatprep.subr.mxu0 0.0
        %631 = vmatpush1.msra.mxu0 0.0
        %632 = vmatprep.subr.mxu0 0.0
        %633 = vmatpush1.msra.mxu0 0.0
        %634 = vmatprep.subr.mxu0 0.0
        %635 = vmatpush1.msra.mxu0 0.0
        %636 = vmatprep.subr.mxu0 0.0
        %637 = vmatpush1.msra.mxu0 %v384
        %638 = vmatprep.subr.mxu0 0.0
        %639 = vmatpush1.msra.mxu0 %v381
        %640 = vmatprep.subr.mxu0 0.0
        %641 = vmatpush1.msra.mxu0 %v378
        %642 = vmatprep.subr.mxu0 0.0
        %643 = vmatpush1.msra.mxu0 %v375
        %644 = vmatprep.subr.mxu0 0.0
        %645 = vmatpush2.msra.mxu0 0.0
        %646 = vmatprep.subr.mxu0 0.0
        %647 = vmatpush2.msra.mxu0 0.0
        %648 = vmatprep.subr.mxu0 0.0
        %649 = vmatpush2.msra.mxu0 0.0
        %650 = vmatprep.subr.mxu0 0.0
        %651 = vmatpush2.msra.mxu0 0.0
        %652 = vmatprep.subr.mxu0 0.0
        %653 = vmatpush2.msra.mxu0 0.0
        %654 = vmatprep.subr.mxu0 0.0
        %655 = vmatpush2.msra.mxu0 0.0
        %656 = vmatprep.subr.mxu0 0.0
        %657 = vmatpush2.msra.mxu0 0.0
        %658 = vmatprep.subr.mxu0 0.0
        %659 = vmatpush2.msra.mxu0 0.0
        %660 = vmatprep.subr.mxu0 0.0
        %661 = vmatpush2.msra.mxu0 0.0
        %662 = vmatprep.subr.mxu0 0.0
        %663 = vmatpush2.msra.mxu0 0.0
        %664 = vmatprep.subr.mxu0 0.0
        %665 = vmatpush2.msra.mxu0 0.0
        %666 = vmatprep.subr.mxu0 0.0
        %667 = vmatpush2.msra.mxu0 0.0
        %668 = vmatprep.subr.mxu0 0.0
        %669 = vmatpush2.msra.mxu0 0.0
        %670 = vmatprep.subr.mxu0 0.0
        %671 = vmatpush2.msra.mxu0 0.0
        %672 = vmatprep.subr.mxu0 0.0
        %673 = vmatpush2.msra.mxu0 0.0
        %674 = vmatprep.subr.mxu0 0.0
        %675 = vmatpush2.msra.mxu0 0.0
        %676 = vmatprep.mubr.f32.mxu0 0.0
        %677 = vmatmul.mubr.f32.gmra.mxu0 %v404
        %v678 = vpop.f32.mrf.mxu0
        %v679 = vadd.f32 %v398, %v678
        %v680 = vpop.f32.mrf.mxu0
        %681 = vmatprep.mubr.f32.mxu0 0.0
        %682 = vmatmul.mubr.f32.gmra.mxu0 %v407
        %v683 = vpop.f32.mrf.mxu0
        %v684 = vadd.f32 %v398, %v683
        %v685 = vpop.f32.mrf.mxu0
        %686 = vmatprep.mubr.f32.mxu0 0.0
        %687 = vmatmul.mubr.f32.gmra.mxu0 %v410
        %v688 = vpop.f32.mrf.mxu0
        %v689 = vadd.f32 %v398, %v688
        %v690 = vpop.f32.mrf.mxu0
        %691 = vmatprep.mubr.f32.mxu0 0.0
        %692 = vmatmul.mubr.f32.gmra.mxu0 %v413
        %v693 = vpop.f32.mrf.mxu0
        %v694 = vadd.f32 %v398, %v693
        %v695 = vpop.f32.mrf.mxu0
        %696 = vmatprep.mubr.f32.mxu0 0.0
        %697 = vmatmul.mubr.f32.gmra.mxu0 %v416
        %v698 = vpop.f32.mrf.mxu0
        %v699 = vadd.f32 %v398, %v698
        %v700 = vpop.f32.mrf.mxu0
        %701 = vmatprep.mubr.f32.mxu0 0.0
        %702 = vmatmul.mubr.f32.gmra.mxu0 %v419
        %v703 = vpop.f32.mrf.mxu0
        %v704 = vadd.f32 %v398, %v703
        %v705 = vpop.f32.mrf.mxu0
        %706 = vmatprep.mubr.f32.mxu0 0.0
        %707 = vmatmul.mubr.f32.gmra.mxu0 %v422
        %v708 = vpop.f32.mrf.mxu0
        %v709 = vadd.f32 %v398, %v708
        %v710 = vpop.f32.mrf.mxu0
        %711 = vmatprep.mubr.f32.mxu0 0.0
        %712 = vmatmul.mubr.f32.gmra.mxu0 %v425
        %v713 = vpop.f32.mrf.mxu0
        %v714 = vadd.f32 %v398, %v713
        %v715 = vpop.f32.mrf.mxu0
        %716 = vmatprep.mubr.f32.mxu0 0.0
        %717 = vmatmul.mubr.f32.gmra.mxu0 %v428
        %v718 = vpop.f32.mrf.mxu0
        %v719 = vadd.f32 %v398, %v718
        %v720 = vpop.f32.mrf.mxu0
        %721 = vmatprep.mubr.f32.mxu0 0.0
        %722 = vmatmul.mubr.f32.gmra.mxu0 %v431
        %v723 = vpop.f32.mrf.mxu0
        %v724 = vadd.f32 %v398, %v723
        %v725 = vpop.f32.mrf.mxu0
        %726 = vmatprep.mubr.f32.mxu0 0.0
        %727 = vmatmul.mubr.f32.gmra.mxu0 %v434
        %v728 = vpop.f32.mrf.mxu0
        %v729 = vadd.f32 %v398, %v728
        %v730 = vpop.f32.mrf.mxu0
        %731 = vmatprep.mubr.f32.mxu0 0.0
        %732 = vmatmul.mubr.f32.gmra.mxu0 %v437
        %v733 = vpop.f32.mrf.mxu0
        %v734 = vadd.f32 %v398, %v733
        %v735 = vpop.f32.mrf.mxu0
        %736 = vmatprep.mubr.f32.mxu0 0.0
        %737 = vmatmul.mubr.f32.gmra.mxu0 %v440
        %v738 = vpop.f32.mrf.mxu0
        %v739 = vadd.f32 %v398, %v738
        %v740 = vpop.f32.mrf.mxu0
        %741 = vmatprep.mubr.f32.mxu0 0.0
        %742 = vmatmul.mubr.f32.gmra.mxu0 %v443
        %v743 = vpop.f32.mrf.mxu0
        %v744 = vadd.f32 %v398, %v743
        %v745 = vpop.f32.mrf.mxu0
        %746 = vmatprep.mubr.f32.mxu0 0.0
        %747 = vmatmul.mubr.f32.gmra.mxu0 %v446
        %v748 = vpop.f32.mrf.mxu0
        %v749 = vadd.f32 %v398, %v748
        %v750 = vpop.f32.mrf.mxu0
        %751 = vmatprep.mubr.f32.mxu0 0.0
        %752 = vmatmul.mubr.f32.gmra.mxu0 %v449
        %v753 = vpop.f32.mrf.mxu0
        %v754 = vadd.f32 %v398, %v753
        %v755 = vpop.f32.mrf.mxu0
        %756 = vdwg.mxu0
        %v757 = vmax.f32 %v520, 0.0
        %v758 = vmax.f32 %v526, 0.0
        %v759 = vmax.f32 %v532, 0.0
        %v760 = vmax.f32 %v538, 0.0
        %v761 = vmax.f32 %v544, 0.0
        %v762 = vmax.f32 %v550, 0.0
        %v763 = vmax.f32 %v556, 0.0
        %v764 = vmax.f32 %v562, 0.0
        %v765 = vmax.f32 %v568, 0.0
        %v766 = vmax.f32 %v574, 0.0
        %v767 = vmax.f32 %v580, 0.0
        %v768 = vmax.f32 %v586, 0.0
        %v769 = vmax.f32 %v592, 0.0
        %v770 = vmax.f32 %v598, 0.0
        %v771 = vmax.f32 %v604, 0.0
        %v772 = vmax.f32 %v610, 0.0
        %v773 = vld [vmem:[#allocation6] sm:$0xff]
        %v774 = vld [vmem:[#allocation6 + $0x8] sm:$0xff]
        %v775 = vld [vmem:[#allocation6 + $0x10] sm:$0xff]
        %v776 = vld [vmem:[#allocation6 + $0x18] sm:$0xff]
        %v777 = vld [vmem:[#allocation6 + $0x20] sm:$0xff]
        %v778 = vld [vmem:[#allocation6 + $0x28] sm:$0xff]
        %v779 = vld [vmem:[#allocation6 + $0x30] sm:$0xff]
        %v780 = vld [vmem:[#allocation6 + $0x38] sm:$0xff]
        %v781 = vld [vmem:[#allocation6 + $0x40] sm:$0xff]
        %v782 = vld [vmem:[#allocation6 + $0x48] sm:$0xff]
        %v783 = vld [vmem:[#allocation6 + $0x50] sm:$0xff]
        %v784 = vld [vmem:[#allocation6 + $0x58] sm:$0xff]
        %v785 = vld [vmem:[#allocation6 + $0x60] sm:$0xff]
        %v786 = vld [vmem:[#allocation6 + $0x68] sm:$0xff]
        %v787 = vld [vmem:[#allocation6 + $0x70] sm:$0xff]
        %v788 = vld [vmem:[#allocation6 + $0x78] sm:$0xff]
        %v789 = vld [vmem:[%s4] sm:$0x1]
        %v791 = vlaneseq
        %v792 = vshrl.u32 %v791, 7
        %v793 = vsub.s32 0, %v792
        %v794 = vrot.slane %v789, %v793
        %796 = vmatprep.subr.mxu0 0.0
        %797 = vmatpush1.msra.mxu0 %v788
        %798 = vmatprep.subr.mxu0 0.0
        %799 = vmatpush1.msra.mxu0 %v787
        %800 = vmatprep.subr.mxu0 0.0
        %801 = vmatpush1.msra.mxu0 %v786
        %802 = vmatprep.subr.mxu0 0.0
        %803 = vmatpush1.msra.mxu0 %v785
        %804 = vmatprep.subr.mxu0 0.0
        %805 = vmatpush1.msra.mxu0 %v784
        %806 = vmatprep.subr.mxu0 0.0
        %807 = vmatpush1.msra.mxu0 %v783
        %808 = vmatprep.subr.mxu0 0.0
        %809 = vmatpush1.msra.mxu0 %v782
        %810 = vmatprep.subr.mxu0 0.0
        %811 = vmatpush1.msra.mxu0 %v781
        %812 = vmatprep.subr.mxu0 0.0
        %813 = vmatpush1.msra.mxu0 %v780
        %814 = vmatprep.subr.mxu0 0.0
        %815 = vmatpush1.msra.mxu0 %v779
        %816 = vmatprep.subr.mxu0 0.0
        %817 = vmatpush1.msra.mxu0 %v778
        %818 = vmatprep.subr.mxu0 0.0
        %819 = vmatpush1.msra.mxu0 %v777
        %820 = vmatprep.subr.mxu0 0.0
        %821 = vmatpush1.msra.mxu0 %v776
        %822 = vmatprep.subr.mxu0 0.0
        %823 = vmatpush1.msra.mxu0 %v775
        %824 = vmatprep.subr.mxu0 0.0
        %825 = vmatpush1.msra.mxu0 %v774
        %826 = vmatprep.subr.mxu0 0.0
        %827 = vmatpush1.msra.mxu0 %v773
        %828 = vmatprep.subr.mxu0 0.0
        %829 = vmatpush2.msra.mxu0 0.0
        %830 = vmatprep.subr.mxu0 0.0
        %831 = vmatpush2.msra.mxu0 0.0
        %832 = vmatprep.subr.mxu0 0.0
        %833 = vmatpush2.msra.mxu0 0.0
        %834 = vmatprep.subr.mxu0 0.0
        %835 = vmatpush2.msra.mxu0 0.0
        %836 = vmatprep.subr.mxu0 0.0
        %837 = vmatpush2.msra.mxu0 0.0
        %838 = vmatprep.subr.mxu0 0.0
        %839 = vmatpush2.msra.mxu0 0.0
        %840 = vmatprep.subr.mxu0 0.0
        %841 = vmatpush2.msra.mxu0 0.0
        %842 = vmatprep.subr.mxu0 0.0
        %843 = vmatpush2.msra.mxu0 0.0
        %844 = vmatprep.subr.mxu0 0.0
        %845 = vmatpush2.msra.mxu0 0.0
        %846 = vmatprep.subr.mxu0 0.0
        %847 = vmatpush2.msra.mxu0 0.0
        %848 = vmatprep.subr.mxu0 0.0
        %849 = vmatpush2.msra.mxu0 0.0
        %850 = vmatprep.subr.mxu0 0.0
        %851 = vmatpush2.msra.mxu0 0.0
        %852 = vmatprep.subr.mxu0 0.0
        %853 = vmatpush2.msra.mxu0 0.0
        %854 = vmatprep.subr.mxu0 0.0
        %855 = vmatpush2.msra.mxu0 0.0
        %856 = vmatprep.subr.mxu0 0.0
        %857 = vmatpush2.msra.mxu0 0.0
        %858 = vmatprep.subr.mxu0 0.0
        %859 = vmatpush2.msra.mxu0 0.0
        %860 = vmatprep.mubr.f32.mxu0 0.0
        %861 = vmatmul.mubr.f32.gmra.mxu0 %v757
        %v862 = vpop.f32.mrf.mxu0
        %v863 = vadd.f32 %v794, %v862
        %v864 = vpop.f32.mrf.mxu0
        %865 = vmatprep.mubr.f32.mxu0 0.0
        %866 = vmatmul.mubr.f32.gmra.mxu0 %v758
        %v867 = vpop.f32.mrf.mxu0
        %v868 = vadd.f32 %v794, %v867
        %v869 = vpop.f32.mrf.mxu0
        %870 = vmatprep.mubr.f32.mxu0 0.0
        %871 = vmatmul.mubr.f32.gmra.mxu0 %v759
        %v872 = vpop.f32.mrf.mxu0
        %v873 = vadd.f32 %v794, %v872
        %v874 = vpop.f32.mrf.mxu0
        %875 = vmatprep.mubr.f32.mxu0 0.0
        %876 = vmatmul.mubr.f32.gmra.mxu0 %v760
        %v877 = vpop.f32.mrf.mxu0
        %v878 = vadd.f32 %v794, %v877
        %v879 = vpop.f32.mrf.mxu0
        %880 = vmatprep.mubr.f32.mxu0 0.0
        %881 = vmatmul.mubr.f32.gmra.mxu0 %v761
        %v882 = vpop.f32.mrf.mxu0
        %v883 = vadd.f32 %v794, %v882
        %v884 = vpop.f32.mrf.mxu0
        %885 = vmatprep.mubr.f32.mxu0 0.0
        %886 = vmatmul.mubr.f32.gmra.mxu0 %v762
        %v887 = vpop.f32.mrf.mxu0
        %v888 = vadd.f32 %v794, %v887
        %v889 = vpop.f32.mrf.mxu0
        %890 = vmatprep.mubr.f32.mxu0 0.0
        %891 = vmatmul.mubr.f32.gmra.mxu0 %v763
        %v892 = vpop.f32.mrf.mxu0
        %v893 = vadd.f32 %v794, %v892
        %v894 = vpop.f32.mrf.mxu0
        %895 = vmatprep.mubr.f32.mxu0 0.0
        %896 = vmatmul.mubr.f32.gmra.mxu0 %v764
        %v897 = vpop.f32.mrf.mxu0
        %v898 = vadd.f32 %v794, %v897
        %v899 = vpop.f32.mrf.mxu0
        %900 = vmatprep.mubr.f32.mxu0 0.0
        %901 = vmatmul.mubr.f32.gmra.mxu0 %v765
        %v902 = vpop.f32.mrf.mxu0
        %v903 = vadd.f32 %v794, %v902
        %v904 = vpop.f32.mrf.mxu0
        %905 = vmatprep.mubr.f32.mxu0 0.0
        %906 = vmatmul.mubr.f32.gmra.mxu0 %v766
        %v907 = vpop.f32.mrf.mxu0
        %v908 = vadd.f32 %v794, %v907
        %v909 = vpop.f32.mrf.mxu0
        %910 = vmatprep.mubr.f32.mxu0 0.0
        %911 = vmatmul.mubr.f32.gmra.mxu0 %v767
        %v912 = vpop.f32.mrf.mxu0
        %v913 = vadd.f32 %v794, %v912
        %v914 = vpop.f32.mrf.mxu0
        %915 = vmatprep.mubr.f32.mxu0 0.0
        %916 = vmatmul.mubr.f32.gmra.mxu0 %v768
        %v917 = vpop.f32.mrf.mxu0
        %v918 = vadd.f32 %v794, %v917
        %v919 = vpop.f32.mrf.mxu0
        %920 = vmatprep.mubr.f32.mxu0 0.0
        %921 = vmatmul.mubr.f32.gmra.mxu0 %v769
        %v922 = vpop.f32.mrf.mxu0
        %v923 = vadd.f32 %v794, %v922
        %v924 = vpop.f32.mrf.mxu0
        %925 = vmatprep.mubr.f32.mxu0 0.0
        %926 = vmatmul.mubr.f32.gmra.mxu0 %v770
        %v927 = vpop.f32.mrf.mxu0
        %v928 = vadd.f32 %v794, %v927
        %v929 = vpop.f32.mrf.mxu0
        %930 = vmatprep.mubr.f32.mxu0 0.0
        %931 = vmatmul.mubr.f32.gmra.mxu0 %v771
        %v932 = vpop.f32.mrf.mxu0
        %v933 = vadd.f32 %v794, %v932
        %v934 = vpop.f32.mrf.mxu0
        %935 = vmatprep.mubr.f32.mxu0 0.0
        %936 = vmatmul.mubr.f32.gmra.mxu0 %v772
        %v937 = vpop.f32.mrf.mxu0
        %v938 = vadd.f32 %v794, %v937
        %v939 = vpop.f32.mrf.mxu0
        %940 = vdwg.mxu0
        %v941 = vtanh.pop %v863
        %v942 = vtanh.pop %v868
        %v943 = vtanh.pop %v873
        %v944 = vtanh.pop %v878
        %v945 = vtanh.pop %v883
        %v946 = vtanh.pop %v888
        %v947 = vtanh.pop %v893
        %v948 = vtanh.pop %v898
        %v949 = vtanh.pop %v903
        %v950 = vtanh.pop %v908
        %v951 = vtanh.pop %v913
        %v952 = vtanh.pop %v918
        %v953 = vtanh.pop %v923
        %v954 = vtanh.pop %v928
        %v955 = vtanh.pop %v933
        %v956 = vtanh.pop %v938
        %vm957 = vcmask 31744
        %v958 = vsel %vm957, %v518, -inf
        %v959 = vrot.slane %v958, 4
        %v960 = vmax.f32 %v958, %v959
        %v961 = vrot.slane %v960, 2
        %v962 = vmax.f32 %v960, %v961
        %v963 = vrot.slane %v962, 1
        %v964 = vmax.f32 %v962, %v963
        %v965 = vsel %vm957, %v524, -inf
        %v966 = vrot.slane %v965, 4
        %v967 = vmax.f32 %v965, %v966
        %v968 = vrot.slane %v967, 2
        %v969 = vmax.f32 %v967, %v968
        %v970 = vrot.slane %v969, 1
        %v971 = vmax.f32 %v969, %v970
        %v972 = vsel %vm957, %v530, -inf
        %v973 = vrot.slane %v972, 4
        %v974 = vmax.f32 %v972, %v973
        %v975 = vrot.slane %v974, 2
        %v976 = vmax.f32 %v974, %v975
        %v977 = vrot.slane %v976, 1
        %v978 = vmax.f32 %v976, %v977
        %v979 = vsel %vm957, %v536, -inf
        %v980 = vrot.slane %v979, 4
        %v981 = vmax.f32 %v979, %v980
        %v982 = vrot.slane %v981, 2
        %v983 = vmax.f32 %v981, %v982
        %v984 = vrot.slane %v983, 1
        %v985 = vmax.f32 %v983, %v984
        %v986 = vsel %vm957, %v542, -inf
        %v987 = vrot.slane %v986, 4
        %v988 = vmax.f32 %v986, %v987
        %v989 = vrot.slane %v988, 2
        %v990 = vmax.f32 %v988, %v989
        %v991 = vrot.slane %v990, 1
        %v992 = vmax.f32 %v990, %v991
        %v993 = vsel %vm957, %v548, -inf
        %v994 = vrot.slane %v993, 4
        %v995 = vmax.f32 %v993, %v994
        %v996 = vrot.slane %v995, 2
        %v997 = vmax.f32 %v995, %v996
        %v998 = vrot.slane %v997, 1
        %v999 = vmax.f32 %v997, %v998
        %v1000 = vsel %vm957, %v554, -inf
        %v1001 = vrot.slane %v1000, 4
        %v1002 = vmax.f32 %v1000, %v1001
        %v1003 = vrot.slane %v1002, 2
        %v1004 = vmax.f32 %v1002, %v1003
        %v1005 = vrot.slane %v1004, 1
        %v1006 = vmax.f32 %v1004, %v1005
        %v1007 = vsel %vm957, %v560, -inf
        %v1008 = vrot.slane %v1007, 4
        %v1009 = vmax.f32 %v1007, %v1008
        %v1010 = vrot.slane %v1009, 2
        %v1011 = vmax.f32 %v1009, %v1010
        %v1012 = vrot.slane %v1011, 1
        %v1013 = vmax.f32 %v1011, %v1012
        %v1014 = vsel %vm957, %v566, -inf
        %v1015 = vrot.slane %v1014, 4
        %v1016 = vmax.f32 %v1014, %v1015
        %v1017 = vrot.slane %v1016, 2
        %v1018 = vmax.f32 %v1016, %v1017
        %v1019 = vrot.slane %v1018, 1
        %v1020 = vmax.f32 %v1018, %v1019
        %v1021 = vsel %vm957, %v572, -inf
        %v1022 = vrot.slane %v1021, 4
        %v1023 = vmax.f32 %v1021, %v1022
        %v1024 = vrot.slane %v1023, 2
        %v1025 = vmax.f32 %v1023, %v1024
        %v1026 = vrot.slane %v1025, 1
        %v1027 = vmax.f32 %v1025, %v1026
        %v1028 = vsel %vm957, %v578, -inf
        %v1029 = vrot.slane %v1028, 4
        %v1030 = vmax.f32 %v1028, %v1029
        %v1031 = vrot.slane %v1030, 2
        %v1032 = vmax.f32 %v1030, %v1031
        %v1033 = vrot.slane %v1032, 1
        %v1034 = vmax.f32 %v1032, %v1033
        %v1035 = vsel %vm957, %v584, -inf
        %v1036 = vrot.slane %v1035, 4
        %v1037 = vmax.f32 %v1035, %v1036
        %v1038 = vrot.slane %v1037, 2
        %v1039 = vmax.f32 %v1037, %v1038
        %v1040 = vrot.slane %v1039, 1
        %v1041 = vmax.f32 %v1039, %v1040
        %v1042 = vsel %vm957, %v590, -inf
        %v1043 = vrot.slane %v1042, 4
        %v1044 = vmax.f32 %v1042, %v1043
        %v1045 = vrot.slane %v1044, 2
        %v1046 = vmax.f32 %v1044, %v1045
        %v1047 = vrot.slane %v1046, 1
        %v1048 = vmax.f32 %v1046, %v1047
        %v1049 = vsel %vm957, %v596, -inf
        %v1050 = vrot.slane %v1049, 4
        %v1051 = vmax.f32 %v1049, %v1050
        %v1052 = vrot.slane %v1051, 2
        %v1053 = vmax.f32 %v1051, %v1052
        %v1054 = vrot.slane %v1053, 1
        %v1055 = vmax.f32 %v1053, %v1054
        %v1056 = vsel %vm957, %v602, -inf
        %v1057 = vrot.slane %v1056, 4
        %v1058 = vmax.f32 %v1056, %v1057
        %v1059 = vrot.slane %v1058, 2
        %v1060 = vmax.f32 %v1058, %v1059
        %v1061 = vrot.slane %v1060, 1
        %v1062 = vmax.f32 %v1060, %v1061
        %v1063 = vsel %vm957, %v608, -inf
        %v1064 = vrot.slane %v1063, 4
        %v1065 = vmax.f32 %v1063, %v1064
        %v1066 = vrot.slane %v1065, 2
        %v1067 = vmax.f32 %v1065, %v1066
        %v1068 = vrot.slane %v1067, 1
        %v1069 = vmax.f32 %v1067, %v1068
        %v1070 = vlaneseq
        %v1071 = vshrl.u32 %v1070, 7
        %v1072 = vcvt.s32.f32 %v1071
        %vm1073 = vcmp.eq.f32.partialorder %v518, %v964
        %vm1074 = vcmp.eq.f32.partialorder %v524, %v971
        %vm1075 = vcmp.eq.f32.partialorder %v530, %v978
        %vm1076 = vcmp.eq.f32.partialorder %v536, %v985
        %vm1077 = vcmp.eq.f32.partialorder %v542, %v992
        %vm1078 = vcmp.eq.f32.partialorder %v548, %v999
        %vm1079 = vcmp.eq.f32.partialorder %v554, %v1006
        %vm1080 = vcmp.eq.f32.partialorder %v560, %v1013
        %vm1081 = vcmp.eq.f32.partialorder %v566, %v1020
        %vm1082 = vcmp.eq.f32.partialorder %v572, %v1027
        %vm1083 = vcmp.eq.f32.partialorder %v578, %v1034
        %vm1084 = vcmp.eq.f32.partialorder %v584, %v1041
        %vm1085 = vcmp.eq.f32.partialorder %v590, %v1048
        %vm1086 = vcmp.eq.f32.partialorder %v596, %v1055
        %vm1087 = vcmp.eq.f32.partialorder %v602, %v1062
        %vm1088 = vcmp.eq.f32.partialorder %v608, %v1069
        %v1089 = vsel %vm1073, %v1072, 8.0
        %v1090 = vsel %vm1074, %v1072, 8.0
        %v1091 = vsel %vm1075, %v1072, 8.0
        %v1092 = vsel %vm1076, %v1072, 8.0
        %v1093 = vsel %vm1077, %v1072, 8.0
        %v1094 = vsel %vm1078, %v1072, 8.0
        %v1095 = vsel %vm1079, %v1072, 8.0
        %v1096 = vsel %vm1080, %v1072, 8.0
        %v1097 = vsel %vm1081, %v1072, 8.0
        %v1098 = vsel %vm1082, %v1072, 8.0
        %v1099 = vsel %vm1083, %v1072, 8.0
        %v1100 = vsel %vm1084, %v1072, 8.0
        %v1101 = vsel %vm1085, %v1072, 8.0
        %v1102 = vsel %vm1086, %v1072, 8.0
        %v1103 = vsel %vm1087, %v1072, 8.0
        %v1104 = vsel %vm1088, %v1072, 8.0
        %v1105 = vsel %vm957, %v1089, inf
        %v1106 = vrot.slane %v1105, 4
        %v1107 = vmin.f32 %v1105, %v1106
        %v1108 = vrot.slane %v1107, 2
        %v1109 = vmin.f32 %v1107, %v1108
        %v1110 = vrot.slane %v1109, 1
        %v1111 = vmin.f32 %v1109, %v1110
        %v1112 = vsel %vm957, %v1090, inf
        %v1113 = vrot.slane %v1112, 4
        %v1114 = vmin.f32 %v1112, %v1113
        %v1115 = vrot.slane %v1114, 2
        %v1116 = vmin.f32 %v1114, %v1115
        %v1117 = vrot.slane %v1116, 1
        %v1118 = vmin.f32 %v1116, %v1117
        %v1119 = vsel %vm957, %v1091, inf
        %v1120 = vrot.slane %v1119, 4
        %v1121 = vmin.f32 %v1119, %v1120
        %v1122 = vrot.slane %v1121, 2
        %v1123 = vmin.f32 %v1121, %v1122
        %v1124 = vrot.slane %v1123, 1
        %v1125 = vmin.f32 %v1123, %v1124
        %v1126 = vsel %vm957, %v1092, inf
        %v1127 = vrot.slane %v1126, 4
        %v1128 = vmin.f32 %v1126, %v1127
        %v1129 = vrot.slane %v1128, 2
        %v1130 = vmin.f32 %v1128, %v1129
        %v1131 = vrot.slane %v1130, 1
        %v1132 = vmin.f32 %v1130, %v1131
        %v1133 = vsel %vm957, %v1093, inf
        %v1134 = vrot.slane %v1133, 4
        %v1135 = vmin.f32 %v1133, %v1134
        %v1136 = vrot.slane %v1135, 2
        %v1137 = vmin.f32 %v1135, %v1136
        %v1138 = vrot.slane %v1137, 1
        %v1139 = vmin.f32 %v1137, %v1138
        %v1140 = vsel %vm957, %v1094, inf
        %v1141 = vrot.slane %v1140, 4
        %v1142 = vmin.f32 %v1140, %v1141
        %v1143 = vrot.slane %v1142, 2
        %v1144 = vmin.f32 %v1142, %v1143
        %v1145 = vrot.slane %v1144, 1
        %v1146 = vmin.f32 %v1144, %v1145
        %v1147 = vsel %vm957, %v1095, inf
        %v1148 = vrot.slane %v1147, 4
        %v1149 = vmin.f32 %v1147, %v1148
        %v1150 = vrot.slane %v1149, 2
        %v1151 = vmin.f32 %v1149, %v1150
        %v1152 = vrot.slane %v1151, 1
        %v1153 = vmin.f32 %v1151, %v1152
        %v1154 = vsel %vm957, %v1096, inf
        %v1155 = vrot.slane %v1154, 4
        %v1156 = vmin.f32 %v1154, %v1155
        %v1157 = vrot.slane %v1156, 2
        %v1158 = vmin.f32 %v1156, %v1157
        %v1159 = vrot.slane %v1158, 1
        %v1160 = vmin.f32 %v1158, %v1159
        %v1161 = vsel %vm957, %v1097, inf
        %v1162 = vrot.slane %v1161, 4
        %v1163 = vmin.f32 %v1161, %v1162
        %v1164 = vrot.slane %v1163, 2
        %v1165 = vmin.f32 %v1163, %v1164
        %v1166 = vrot.slane %v1165, 1
        %v1167 = vmin.f32 %v1165, %v1166
        %v1168 = vsel %vm957, %v1098, inf
        %v1169 = vrot.slane %v1168, 4
        %v1170 = vmin.f32 %v1168, %v1169
        %v1171 = vrot.slane %v1170, 2
        %v1172 = vmin.f32 %v1170, %v1171
        %v1173 = vrot.slane %v1172, 1
        %v1174 = vmin.f32 %v1172, %v1173
        %v1175 = vsel %vm957, %v1099, inf
        %v1176 = vrot.slane %v1175, 4
        %v1177 = vmin.f32 %v1175, %v1176
        %v1178 = vrot.slane %v1177, 2
        %v1179 = vmin.f32 %v1177, %v1178
        %v1180 = vrot.slane %v1179, 1
        %v1181 = vmin.f32 %v1179, %v1180
        %v1182 = vsel %vm957, %v1100, inf
        %v1183 = vrot.slane %v1182, 4
        %v1184 = vmin.f32 %v1182, %v1183
        %v1185 = vrot.slane %v1184, 2
        %v1186 = vmin.f32 %v1184, %v1185
        %v1187 = vrot.slane %v1186, 1
        %v1188 = vmin.f32 %v1186, %v1187
        %v1189 = vsel %vm957, %v1101, inf
        %v1190 = vrot.slane %v1189, 4
        %v1191 = vmin.f32 %v1189, %v1190
        %v1192 = vrot.slane %v1191, 2
        %v1193 = vmin.f32 %v1191, %v1192
        %v1194 = vrot.slane %v1193, 1
        %v1195 = vmin.f32 %v1193, %v1194
        %v1196 = vsel %vm957, %v1102, inf
        %v1197 = vrot.slane %v1196, 4
        %v1198 = vmin.f32 %v1196, %v1197
        %v1199 = vrot.slane %v1198, 2
        %v1200 = vmin.f32 %v1198, %v1199
        %v1201 = vrot.slane %v1200, 1
        %v1202 = vmin.f32 %v1200, %v1201
        %v1203 = vsel %vm957, %v1103, inf
        %v1204 = vrot.slane %v1203, 4
        %v1205 = vmin.f32 %v1203, %v1204
        %v1206 = vrot.slane %v1205, 2
        %v1207 = vmin.f32 %v1205, %v1206
        %v1208 = vrot.slane %v1207, 1
        %v1209 = vmin.f32 %v1207, %v1208
        %v1210 = vsel %vm957, %v1104, inf
        %v1211 = vrot.slane %v1210, 4
        %v1212 = vmin.f32 %v1210, %v1211
        %v1213 = vrot.slane %v1212, 2
        %v1214 = vmin.f32 %v1212, %v1213
        %v1215 = vrot.slane %v1214, 1
        %v1216 = vmin.f32 %v1214, %v1215
        %vm1217 = vcmp.eq.f32.partialorder %v1072, %v1111
        %vm1218 = vcmp.eq.f32.partialorder %v1072, %v1118
        %vm1219 = vcmp.eq.f32.partialorder %v1072, %v1125
        %vm1220 = vcmp.eq.f32.partialorder %v1072, %v1132
        %vm1221 = vcmp.eq.f32.partialorder %v1072, %v1139
        %vm1222 = vcmp.eq.f32.partialorder %v1072, %v1146
        %vm1223 = vcmp.eq.f32.partialorder %v1072, %v1153
        %vm1224 = vcmp.eq.f32.partialorder %v1072, %v1160
        %vm1225 = vcmp.eq.f32.partialorder %v1072, %v1167
        %vm1226 = vcmp.eq.f32.partialorder %v1072, %v1174
        %vm1227 = vcmp.eq.f32.partialorder %v1072, %v1181
        %vm1228 = vcmp.eq.f32.partialorder %v1072, %v1188
        %vm1229 = vcmp.eq.f32.partialorder %v1072, %v1195
        %vm1230 = vcmp.eq.f32.partialorder %v1072, %v1202
        %vm1231 = vcmp.eq.f32.partialorder %v1072, %v1209
        %vm1232 = vcmp.eq.f32.partialorder %v1072, %v1216
        %v1233 = vsel %vm1217, 1, 0
        %v1234 = vsel %vm1218, 1, 0
        %v1235 = vsel %vm1219, 1, 0
        %v1236 = vsel %vm1220, 1, 0
        %v1237 = vsel %vm1221, 1, 0
        %v1238 = vsel %vm1222, 1, 0
        %v1239 = vsel %vm1223, 1, 0
        %v1240 = vsel %vm1224, 1, 0
        %v1241 = vsel %vm1225, 1, 0
        %v1242 = vsel %vm1226, 1, 0
        %v1243 = vsel %vm1227, 1, 0
        %v1244 = vsel %vm1228, 1, 0
        %v1245 = vsel %vm1229, 1, 0
        %v1246 = vsel %vm1230, 1, 0
        %v1247 = vsel %vm1231, 1, 0
        %v1248 = vsel %vm1232, 1, 0
        %v1249 = vcvt.s32.f32 %v1233
        %v1250 = vcvt.s32.f32 %v1234
        %v1251 = vcvt.s32.f32 %v1235
        %v1252 = vcvt.s32.f32 %v1236
        %v1253 = vcvt.s32.f32 %v1237
        %v1254 = vcvt.s32.f32 %v1238
        %v1255 = vcvt.s32.f32 %v1239
        %v1256 = vcvt.s32.f32 %v1240
        %v1257 = vcvt.s32.f32 %v1241
        %v1258 = vcvt.s32.f32 %v1242
        %v1259 = vcvt.s32.f32 %v1243
        %v1260 = vcvt.s32.f32 %v1244
        %v1261 = vcvt.s32.f32 %v1245
        %v1262 = vcvt.s32.f32 %v1246
        %v1263 = vcvt.s32.f32 %v1247
        %v1264 = vcvt.s32.f32 %v1248
        %1265 = vmatprep.subr.mxu0 0.0
        %1266 = vmatpush1.xpose.msra.mxu0 0.0
        %1267 = vmatprep.subr.mxu0 0.0
        %1268 = vmatpush1.xpose.msra.mxu0 0.0
        %1269 = vmatprep.subr.mxu0 0.0
        %1270 = vmatpush1.xpose.msra.mxu0 0.0
        %1271 = vmatprep.subr.mxu0 0.0
        %1272 = vmatpush1.xpose.msra.mxu0 0.0
        %1273 = vmatprep.subr.mxu0 0.0
        %1274 = vmatpush1.xpose.msra.mxu0 0.0
        %1275 = vmatprep.subr.mxu0 0.0
        %1276 = vmatpush1.xpose.msra.mxu0 0.0
        %1277 = vmatprep.subr.mxu0 0.0
        %1278 = vmatpush1.xpose.msra.mxu0 0.0
        %1279 = vmatprep.subr.mxu0 0.0
        %1280 = vmatpush1.xpose.msra.mxu0 0.0
        %1281 = vmatprep.subr.mxu0 0.0
        %1282 = vmatpush1.xpose.msra.mxu0 0.0
        %1283 = vmatprep.subr.mxu0 0.0
        %1284 = vmatpush1.xpose.msra.mxu0 0.0
        %1285 = vmatprep.subr.mxu0 0.0
        %1286 = vmatpush1.xpose.msra.mxu0 0.0
        %1287 = vmatprep.subr.mxu0 0.0
        %1288 = vmatpush1.xpose.msra.mxu0 0.0
        %1289 = vmatprep.subr.mxu0 0.0
        %1290 = vmatpush1.xpose.msra.mxu0 0.0
        %1291 = vmatprep.subr.mxu0 0.0
        %1292 = vmatpush1.xpose.msra.mxu0 0.0
        %1293 = vmatprep.subr.mxu0 0.0
        %1294 = vmatpush1.xpose.msra.mxu0 0.0
        %1295 = vmatprep.subr.mxu0 0.0
        %1296 = vmatpush1.xpose.msra.mxu0 %v941
        %1297 = vmatprep.subr.mxu0 0.0
        %1298 = vmatpush2.xpose.msra.mxu0 0.0
        %1299 = vmatprep.subr.mxu0 0.0
        %1300 = vmatpush2.xpose.msra.mxu0 0.0
        %1301 = vmatprep.subr.mxu0 0.0
        %1302 = vmatpush2.xpose.msra.mxu0 0.0
        %1303 = vmatprep.subr.mxu0 0.0
        %1304 = vmatpush2.xpose.msra.mxu0 0.0
        %1305 = vmatprep.subr.mxu0 0.0
        %1306 = vmatpush2.xpose.msra.mxu0 0.0
        %1307 = vmatprep.subr.mxu0 0.0
        %1308 = vmatpush2.xpose.msra.mxu0 0.0
        %1309 = vmatprep.subr.mxu0 0.0
        %1310 = vmatpush2.xpose.msra.mxu0 0.0
        %1311 = vmatprep.subr.mxu0 0.0
        %1312 = vmatpush2.xpose.msra.mxu0 0.0
        %1313 = vmatprep.subr.mxu0 0.0
        %1314 = vmatpush2.xpose.msra.mxu0 0.0
        %1315 = vmatprep.subr.mxu0 0.0
        %1316 = vmatpush2.xpose.msra.mxu0 0.0
        %1317 = vmatprep.subr.mxu0 0.0
        %1318 = vmatpush2.xpose.msra.mxu0 0.0
        %1319 = vmatprep.subr.mxu0 0.0
        %1320 = vmatpush2.xpose.msra.mxu0 0.0
        %1321 = vmatprep.subr.mxu0 0.0
        %1322 = vmatpush2.xpose.msra.mxu0 0.0
        %1323 = vmatprep.subr.mxu0 0.0
        %1324 = vmatpush2.xpose.msra.mxu0 0.0
        %1325 = vmatprep.subr.mxu0 0.0
        %1326 = vmatpush2.xpose.msra.mxu0 0.0
        %1327 = vmatprep.subr.mxu0 0.0
        %1328 = vmatpush2.xpose.msra.mxu0 0.0
        %1329 = vmatprep.mubr.f32.mxu0 0.0
        %1330 = vmatmul.mubr.f32.gmra.mxu0 %v941
        %v1331 = vpop.f32.mrf.mxu0
        %v1332 = vadd.f32 0.0, %v1331
        %v1333 = vpop.f32.mrf.mxu0
        %1334 = vdwg.mxu0
        %1335 = vmatprep.subr.mxu0 0.0
        %1336 = vmatpush1.xpose.msra.mxu0 0.0
        %1337 = vmatprep.subr.mxu0 0.0
        %1338 = vmatpush1.xpose.msra.mxu0 0.0
        %1339 = vmatprep.subr.mxu0 0.0
        %1340 = vmatpush1.xpose.msra.mxu0 0.0
        %1341 = vmatprep.subr.mxu0 0.0
        %1342 = vmatpush1.xpose.msra.mxu0 0.0
        %1343 = vmatprep.subr.mxu0 0.0
        %1344 = vmatpush1.xpose.msra.mxu0 0.0
        %1345 = vmatprep.subr.mxu0 0.0
        %1346 = vmatpush1.xpose.msra.mxu0 0.0
        %1347 = vmatprep.subr.mxu0 0.0
        %1348 = vmatpush1.xpose.msra.mxu0 0.0
        %1349 = vmatprep.subr.mxu0 0.0
        %1350 = vmatpush1.xpose.msra.mxu0 0.0
        %1351 = vmatprep.subr.mxu0 0.0
        %1352 = vmatpush1.xpose.msra.mxu0 0.0
        %1353 = vmatprep.subr.mxu0 0.0
        %1354 = vmatpush1.xpose.msra.mxu0 0.0
        %1355 = vmatprep.subr.mxu0 0.0
        %1356 = vmatpush1.xpose.msra.mxu0 0.0
        %1357 = vmatprep.subr.mxu0 0.0
        %1358 = vmatpush1.xpose.msra.mxu0 0.0
        %1359 = vmatprep.subr.mxu0 0.0
        %1360 = vmatpush1.xpose.msra.mxu0 0.0
        %1361 = vmatprep.subr.mxu0 0.0
        %1362 = vmatpush1.xpose.msra.mxu0 0.0
        %1363 = vmatprep.subr.mxu0 0.0
        %1364 = vmatpush1.xpose.msra.mxu0 0.0
        %1365 = vmatprep.subr.mxu0 0.0
        %1366 = vmatpush1.xpose.msra.mxu0 %v942
        %1367 = vmatprep.subr.mxu0 0.0
        %1368 = vmatpush2.xpose.msra.mxu0 0.0
        %1369 = vmatprep.subr.mxu0 0.0
        %1370 = vmatpush2.xpose.msra.mxu0 0.0
        %1371 = vmatprep.subr.mxu0 0.0
        %1372 = vmatpush2.xpose.msra.mxu0 0.0
        %1373 = vmatprep.subr.mxu0 0.0
        %1374 = vmatpush2.xpose.msra.mxu0 0.0
        %1375 = vmatprep.subr.mxu0 0.0
        %1376 = vmatpush2.xpose.msra.mxu0 0.0
        %1377 = vmatprep.subr.mxu0 0.0
        %1378 = vmatpush2.xpose.msra.mxu0 0.0
        %1379 = vmatprep.subr.mxu0 0.0
        %1380 = vmatpush2.xpose.msra.mxu0 0.0
        %1381 = vmatprep.subr.mxu0 0.0
        %1382 = vmatpush2.xpose.msra.mxu0 0.0
        %1383 = vmatprep.subr.mxu0 0.0
        %1384 = vmatpush2.xpose.msra.mxu0 0.0
        %1385 = vmatprep.subr.mxu0 0.0
        %1386 = vmatpush2.xpose.msra.mxu0 0.0
        %1387 = vmatprep.subr.mxu0 0.0
        %1388 = vmatpush2.xpose.msra.mxu0 0.0
        %1389 = vmatprep.subr.mxu0 0.0
        %1390 = vmatpush2.xpose.msra.mxu0 0.0
        %1391 = vmatprep.subr.mxu0 0.0
        %1392 = vmatpush2.xpose.msra.mxu0 0.0
        %1393 = vmatprep.subr.mxu0 0.0
        %1394 = vmatpush2.xpose.msra.mxu0 0.0
        %1395 = vmatprep.subr.mxu0 0.0
        %1396 = vmatpush2.xpose.msra.mxu0 0.0
        %1397 = vmatprep.subr.mxu0 0.0
        %1398 = vmatpush2.xpose.msra.mxu0 0.0
        %1399 = vmatprep.mubr.f32.mxu0 0.0
        %1400 = vmatmul.mubr.f32.gmra.mxu0 %v942
        %v1401 = vpop.f32.mrf.mxu0
        %v1402 = vadd.f32 0.0, %v1401
        %v1403 = vpop.f32.mrf.mxu0
        %1404 = vdwg.mxu0
        %1405 = vmatprep.subr.mxu0 0.0
        %1406 = vmatpush1.xpose.msra.mxu0 0.0
        %1407 = vmatprep.subr.mxu0 0.0
        %1408 = vmatpush1.xpose.msra.mxu0 0.0
        %1409 = vmatprep.subr.mxu0 0.0
        %1410 = vmatpush1.xpose.msra.mxu0 0.0
        %1411 = vmatprep.subr.mxu0 0.0
        %1412 = vmatpush1.xpose.msra.mxu0 0.0
        %1413 = vmatprep.subr.mxu0 0.0
        %1414 = vmatpush1.xpose.msra.mxu0 0.0
        %1415 = vmatprep.subr.mxu0 0.0
        %1416 = vmatpush1.xpose.msra.mxu0 0.0
        %1417 = vmatprep.subr.mxu0 0.0
        %1418 = vmatpush1.xpose.msra.mxu0 0.0
        %1419 = vmatprep.subr.mxu0 0.0
        %1420 = vmatpush1.xpose.msra.mxu0 0.0
        %1421 = vmatprep.subr.mxu0 0.0
        %1422 = vmatpush1.xpose.msra.mxu0 0.0
        %1423 = vmatprep.subr.mxu0 0.0
        %1424 = vmatpush1.xpose.msra.mxu0 0.0
        %1425 = vmatprep.subr.mxu0 0.0
        %1426 = vmatpush1.xpose.msra.mxu0 0.0
        %1427 = vmatprep.subr.mxu0 0.0
        %1428 = vmatpush1.xpose.msra.mxu0 0.0
        %1429 = vmatprep.subr.mxu0 0.0
        %1430 = vmatpush1.xpose.msra.mxu0 0.0
        %1431 = vmatprep.subr.mxu0 0.0
        %1432 = vmatpush1.xpose.msra.mxu0 0.0
        %1433 = vmatprep.subr.mxu0 0.0
        %1434 = vmatpush1.xpose.msra.mxu0 0.0
        %1435 = vmatprep.subr.mxu0 0.0
        %1436 = vmatpush1.xpose.msra.mxu0 %v943
        %1437 = vmatprep.subr.mxu0 0.0
        %1438 = vmatpush2.xpose.msra.mxu0 0.0
        %1439 = vmatprep.subr.mxu0 0.0
        %1440 = vmatpush2.xpose.msra.mxu0 0.0
        %1441 = vmatprep.subr.mxu0 0.0
        %1442 = vmatpush2.xpose.msra.mxu0 0.0
        %1443 = vmatprep.subr.mxu0 0.0
        %1444 = vmatpush2.xpose.msra.mxu0 0.0
        %1445 = vmatprep.subr.mxu0 0.0
        %1446 = vmatpush2.xpose.msra.mxu0 0.0
        %1447 = vmatprep.subr.mxu0 0.0
        %1448 = vmatpush2.xpose.msra.mxu0 0.0
        %1449 = vmatprep.subr.mxu0 0.0
        %1450 = vmatpush2.xpose.msra.mxu0 0.0
        %1451 = vmatprep.subr.mxu0 0.0
        %1452 = vmatpush2.xpose.msra.mxu0 0.0
        %1453 = vmatprep.subr.mxu0 0.0
        %1454 = vmatpush2.xpose.msra.mxu0 0.0
        %1455 = vmatprep.subr.mxu0 0.0
        %1456 = vmatpush2.xpose.msra.mxu0 0.0
        %1457 = vmatprep.subr.mxu0 0.0
        %1458 = vmatpush2.xpose.msra.mxu0 0.0
        %1459 = vmatprep.subr.mxu0 0.0
        %1460 = vmatpush2.xpose.msra.mxu0 0.0
        %1461 = vmatprep.subr.mxu0 0.0
        %1462 = vmatpush2.xpose.msra.mxu0 0.0
        %1463 = vmatprep.subr.mxu0 0.0
        %1464 = vmatpush2.xpose.msra.mxu0 0.0
        %1465 = vmatprep.subr.mxu0 0.0
        %1466 = vmatpush2.xpose.msra.mxu0 0.0
        %1467 = vmatprep.subr.mxu0 0.0
        %1468 = vmatpush2.xpose.msra.mxu0 0.0
        %1469 = vmatprep.mubr.f32.mxu0 0.0
        %1470 = vmatmul.mubr.f32.gmra.mxu0 %v943
        %v1471 = vpop.f32.mrf.mxu0
        %v1472 = vadd.f32 0.0, %v1471
        %v1473 = vpop.f32.mrf.mxu0
        %1474 = vdwg.mxu0
        %1475 = vmatprep.subr.mxu0 0.0
        %1476 = vmatpush1.xpose.msra.mxu0 0.0
        %1477 = vmatprep.subr.mxu0 0.0
        %1478 = vmatpush1.xpose.msra.mxu0 0.0
        %1479 = vmatprep.subr.mxu0 0.0
        %1480 = vmatpush1.xpose.msra.mxu0 0.0
        %1481 = vmatprep.subr.mxu0 0.0
        %1482 = vmatpush1.xpose.msra.mxu0 0.0
        %1483 = vmatprep.subr.mxu0 0.0
        %1484 = vmatpush1.xpose.msra.mxu0 0.0
        %1485 = vmatprep.subr.mxu0 0.0
        %1486 = vmatpush1.xpose.msra.mxu0 0.0
        %1487 = vmatprep.subr.mxu0 0.0
        %1488 = vmatpush1.xpose.msra.mxu0 0.0
        %1489 = vmatprep.subr.mxu0 0.0
        %1490 = vmatpush1.xpose.msra.mxu0 0.0
        %1491 = vmatprep.subr.mxu0 0.0
        %1492 = vmatpush1.xpose.msra.mxu0 0.0
        %1493 = vmatprep.subr.mxu0 0.0
        %1494 = vmatpush1.xpose.msra.mxu0 0.0
        %1495 = vmatprep.subr.mxu0 0.0
        %1496 = vmatpush1.xpose.msra.mxu0 0.0
        %1497 = vmatprep.subr.mxu0 0.0
        %1498 = vmatpush1.xpose.msra.mxu0 0.0
        %1499 = vmatprep.subr.mxu0 0.0
        %1500 = vmatpush1.xpose.msra.mxu0 0.0
        %1501 = vmatprep.subr.mxu0 0.0
        %1502 = vmatpush1.xpose.msra.mxu0 0.0
        %1503 = vmatprep.subr.mxu0 0.0
        %1504 = vmatpush1.xpose.msra.mxu0 0.0
        %1505 = vmatprep.subr.mxu0 0.0
        %1506 = vmatpush1.xpose.msra.mxu0 %v944
        %1507 = vmatprep.subr.mxu0 0.0
        %1508 = vmatpush2.xpose.msra.mxu0 0.0
        %1509 = vmatprep.subr.mxu0 0.0
        %1510 = vmatpush2.xpose.msra.mxu0 0.0
        %1511 = vmatprep.subr.mxu0 0.0
        %1512 = vmatpush2.xpose.msra.mxu0 0.0
        %1513 = vmatprep.subr.mxu0 0.0
        %1514 = vmatpush2.xpose.msra.mxu0 0.0
        %1515 = vmatprep.subr.mxu0 0.0
        %1516 = vmatpush2.xpose.msra.mxu0 0.0
        %1517 = vmatprep.subr.mxu0 0.0
        %1518 = vmatpush2.xpose.msra.mxu0 0.0
        %1519 = vmatprep.subr.mxu0 0.0
        %1520 = vmatpush2.xpose.msra.mxu0 0.0
        %1521 = vmatprep.subr.mxu0 0.0
        %1522 = vmatpush2.xpose.msra.mxu0 0.0
        %1523 = vmatprep.subr.mxu0 0.0
        %1524 = vmatpush2.xpose.msra.mxu0 0.0
        %1525 = vmatprep.subr.mxu0 0.0
        %1526 = vmatpush2.xpose.msra.mxu0 0.0
        %1527 = vmatprep.subr.mxu0 0.0
        %1528 = vmatpush2.xpose.msra.mxu0 0.0
        %1529 = vmatprep.subr.mxu0 0.0
        %1530 = vmatpush2.xpose.msra.mxu0 0.0
        %1531 = vmatprep.subr.mxu0 0.0
        %1532 = vmatpush2.xpose.msra.mxu0 0.0
        %1533 = vmatprep.subr.mxu0 0.0
        %1534 = vmatpush2.xpose.msra.mxu0 0.0
        %1535 = vmatprep.subr.mxu0 0.0
        %1536 = vmatpush2.xpose.msra.mxu0 0.0
        %1537 = vmatprep.subr.mxu0 0.0
        %1538 = vmatpush2.xpose.msra.mxu0 0.0
        %1539 = vmatprep.mubr.f32.mxu0 0.0
        %1540 = vmatmul.mubr.f32.gmra.mxu0 %v944
        %v1541 = vpop.f32.mrf.mxu0
        %v1542 = vadd.f32 0.0, %v1541
        %v1543 = vpop.f32.mrf.mxu0
        %1544 = vdwg.mxu0
        %1545 = vmatprep.subr.mxu0 0.0
        %1546 = vmatpush1.xpose.msra.mxu0 0.0
        %1547 = vmatprep.subr.mxu0 0.0
        %1548 = vmatpush1.xpose.msra.mxu0 0.0
        %1549 = vmatprep.subr.mxu0 0.0
        %1550 = vmatpush1.xpose.msra.mxu0 0.0
        %1551 = vmatprep.subr.mxu0 0.0
        %1552 = vmatpush1.xpose.msra.mxu0 0.0
        %1553 = vmatprep.subr.mxu0 0.0
        %1554 = vmatpush1.xpose.msra.mxu0 0.0
        %1555 = vmatprep.subr.mxu0 0.0
        %1556 = vmatpush1.xpose.msra.mxu0 0.0
        %1557 = vmatprep.subr.mxu0 0.0
        %1558 = vmatpush1.xpose.msra.mxu0 0.0
        %1559 = vmatprep.subr.mxu0 0.0
        %1560 = vmatpush1.xpose.msra.mxu0 0.0
        %1561 = vmatprep.subr.mxu0 0.0
        %1562 = vmatpush1.xpose.msra.mxu0 0.0
        %1563 = vmatprep.subr.mxu0 0.0
        %1564 = vmatpush1.xpose.msra.mxu0 0.0
        %1565 = vmatprep.subr.mxu0 0.0
        %1566 = vmatpush1.xpose.msra.mxu0 0.0
        %1567 = vmatprep.subr.mxu0 0.0
        %1568 = vmatpush1.xpose.msra.mxu0 0.0
        %1569 = vmatprep.subr.mxu0 0.0
        %1570 = vmatpush1.xpose.msra.mxu0 0.0
        %1571 = vmatprep.subr.mxu0 0.0
        %1572 = vmatpush1.xpose.msra.mxu0 0.0
        %1573 = vmatprep.subr.mxu0 0.0
        %1574 = vmatpush1.xpose.msra.mxu0 0.0
        %1575 = vmatprep.subr.mxu0 0.0
        %1576 = vmatpush1.xpose.msra.mxu0 %v945
        %1577 = vmatprep.subr.mxu0 0.0
        %1578 = vmatpush2.xpose.msra.mxu0 0.0
        %1579 = vmatprep.subr.mxu0 0.0
        %1580 = vmatpush2.xpose.msra.mxu0 0.0
        %1581 = vmatprep.subr.mxu0 0.0
        %1582 = vmatpush2.xpose.msra.mxu0 0.0
        %1583 = vmatprep.subr.mxu0 0.0
        %1584 = vmatpush2.xpose.msra.mxu0 0.0
        %1585 = vmatprep.subr.mxu0 0.0
        %1586 = vmatpush2.xpose.msra.mxu0 0.0
        %1587 = vmatprep.subr.mxu0 0.0
        %1588 = vmatpush2.xpose.msra.mxu0 0.0
        %1589 = vmatprep.subr.mxu0 0.0
        %1590 = vmatpush2.xpose.msra.mxu0 0.0
        %1591 = vmatprep.subr.mxu0 0.0
        %1592 = vmatpush2.xpose.msra.mxu0 0.0
        %1593 = vmatprep.subr.mxu0 0.0
        %1594 = vmatpush2.xpose.msra.mxu0 0.0
        %1595 = vmatprep.subr.mxu0 0.0
        %1596 = vmatpush2.xpose.msra.mxu0 0.0
        %1597 = vmatprep.subr.mxu0 0.0
        %1598 = vmatpush2.xpose.msra.mxu0 0.0
        %1599 = vmatprep.subr.mxu0 0.0
        %1600 = vmatpush2.xpose.msra.mxu0 0.0
        %1601 = vmatprep.subr.mxu0 0.0
        %1602 = vmatpush2.xpose.msra.mxu0 0.0
        %1603 = vmatprep.subr.mxu0 0.0
        %1604 = vmatpush2.xpose.msra.mxu0 0.0
        %1605 = vmatprep.subr.mxu0 0.0
        %1606 = vmatpush2.xpose.msra.mxu0 0.0
        %1607 = vmatprep.subr.mxu0 0.0
        %1608 = vmatpush2.xpose.msra.mxu0 0.0
        %1609 = vmatprep.mubr.f32.mxu0 0.0
        %1610 = vmatmul.mubr.f32.gmra.mxu0 %v945
        %v1611 = vpop.f32.mrf.mxu0
        %v1612 = vadd.f32 0.0, %v1611
        %v1613 = vpop.f32.mrf.mxu0
        %1614 = vdwg.mxu0
        %1615 = vmatprep.subr.mxu0 0.0
        %1616 = vmatpush1.xpose.msra.mxu0 0.0
        %1617 = vmatprep.subr.mxu0 0.0
        %1618 = vmatpush1.xpose.msra.mxu0 0.0
        %1619 = vmatprep.subr.mxu0 0.0
        %1620 = vmatpush1.xpose.msra.mxu0 0.0
        %1621 = vmatprep.subr.mxu0 0.0
        %1622 = vmatpush1.xpose.msra.mxu0 0.0
        %1623 = vmatprep.subr.mxu0 0.0
        %1624 = vmatpush1.xpose.msra.mxu0 0.0
        %1625 = vmatprep.subr.mxu0 0.0
        %1626 = vmatpush1.xpose.msra.mxu0 0.0
        %1627 = vmatprep.subr.mxu0 0.0
        %1628 = vmatpush1.xpose.msra.mxu0 0.0
        %1629 = vmatprep.subr.mxu0 0.0
        %1630 = vmatpush1.xpose.msra.mxu0 0.0
        %1631 = vmatprep.subr.mxu0 0.0
        %1632 = vmatpush1.xpose.msra.mxu0 0.0
        %1633 = vmatprep.subr.mxu0 0.0
        %1634 = vmatpush1.xpose.msra.mxu0 0.0
        %1635 = vmatprep.subr.mxu0 0.0
        %1636 = vmatpush1.xpose.msra.mxu0 0.0
        %1637 = vmatprep.subr.mxu0 0.0
        %1638 = vmatpush1.xpose.msra.mxu0 0.0
        %1639 = vmatprep.subr.mxu0 0.0
        %1640 = vmatpush1.xpose.msra.mxu0 0.0
        %1641 = vmatprep.subr.mxu0 0.0
        %1642 = vmatpush1.xpose.msra.mxu0 0.0
        %1643 = vmatprep.subr.mxu0 0.0
        %1644 = vmatpush1.xpose.msra.mxu0 0.0
        %1645 = vmatprep.subr.mxu0 0.0
        %1646 = vmatpush1.xpose.msra.mxu0 %v946
        %1647 = vmatprep.subr.mxu0 0.0
        %1648 = vmatpush2.xpose.msra.mxu0 0.0
        %1649 = vmatprep.subr.mxu0 0.0
        %1650 = vmatpush2.xpose.msra.mxu0 0.0
        %1651 = vmatprep.subr.mxu0 0.0
        %1652 = vmatpush2.xpose.msra.mxu0 0.0
        %1653 = vmatprep.subr.mxu0 0.0
        %1654 = vmatpush2.xpose.msra.mxu0 0.0
        %1655 = vmatprep.subr.mxu0 0.0
        %1656 = vmatpush2.xpose.msra.mxu0 0.0
        %1657 = vmatprep.subr.mxu0 0.0
        %1658 = vmatpush2.xpose.msra.mxu0 0.0
        %1659 = vmatprep.subr.mxu0 0.0
        %1660 = vmatpush2.xpose.msra.mxu0 0.0
        %1661 = vmatprep.subr.mxu0 0.0
        %1662 = vmatpush2.xpose.msra.mxu0 0.0
        %1663 = vmatprep.subr.mxu0 0.0
        %1664 = vmatpush2.xpose.msra.mxu0 0.0
        %1665 = vmatprep.subr.mxu0 0.0
        %1666 = vmatpush2.xpose.msra.mxu0 0.0
        %1667 = vmatprep.subr.mxu0 0.0
        %1668 = vmatpush2.xpose.msra.mxu0 0.0
        %1669 = vmatprep.subr.mxu0 0.0
        %1670 = vmatpush2.xpose.msra.mxu0 0.0
        %1671 = vmatprep.subr.mxu0 0.0
        %1672 = vmatpush2.xpose.msra.mxu0 0.0
        %1673 = vmatprep.subr.mxu0 0.0
        %1674 = vmatpush2.xpose.msra.mxu0 0.0
        %1675 = vmatprep.subr.mxu0 0.0
        %1676 = vmatpush2.xpose.msra.mxu0 0.0
        %1677 = vmatprep.subr.mxu0 0.0
        %1678 = vmatpush2.xpose.msra.mxu0 0.0
        %1679 = vmatprep.mubr.f32.mxu0 0.0
        %1680 = vmatmul.mubr.f32.gmra.mxu0 %v946
        %v1681 = vpop.f32.mrf.mxu0
        %v1682 = vadd.f32 0.0, %v1681
        %v1683 = vpop.f32.mrf.mxu0
        %1684 = vdwg.mxu0
        %1685 = vmatprep.subr.mxu0 0.0
        %1686 = vmatpush1.xpose.msra.mxu0 0.0
        %1687 = vmatprep.subr.mxu0 0.0
        %1688 = vmatpush1.xpose.msra.mxu0 0.0
        %1689 = vmatprep.subr.mxu0 0.0
        %1690 = vmatpush1.xpose.msra.mxu0 0.0
        %1691 = vmatprep.subr.mxu0 0.0
        %1692 = vmatpush1.xpose.msra.mxu0 0.0
        %1693 = vmatprep.subr.mxu0 0.0
        %1694 = vmatpush1.xpose.msra.mxu0 0.0
        %1695 = vmatprep.subr.mxu0 0.0
        %1696 = vmatpush1.xpose.msra.mxu0 0.0
        %1697 = vmatprep.subr.mxu0 0.0
        %1698 = vmatpush1.xpose.msra.mxu0 0.0
        %1699 = vmatprep.subr.mxu0 0.0
        %1700 = vmatpush1.xpose.msra.mxu0 0.0
        %1701 = vmatprep.subr.mxu0 0.0
        %1702 = vmatpush1.xpose.msra.mxu0 0.0
        %1703 = vmatprep.subr.mxu0 0.0
        %1704 = vmatpush1.xpose.msra.mxu0 0.0
        %1705 = vmatprep.subr.mxu0 0.0
        %1706 = vmatpush1.xpose.msra.mxu0 0.0
        %1707 = vmatprep.subr.mxu0 0.0
        %1708 = vmatpush1.xpose.msra.mxu0 0.0
        %1709 = vmatprep.subr.mxu0 0.0
        %1710 = vmatpush1.xpose.msra.mxu0 0.0
        %1711 = vmatprep.subr.mxu0 0.0
        %1712 = vmatpush1.xpose.msra.mxu0 0.0
        %1713 = vmatprep.subr.mxu0 0.0
        %1714 = vmatpush1.xpose.msra.mxu0 0.0
        %1715 = vmatprep.subr.mxu0 0.0
        %1716 = vmatpush1.xpose.msra.mxu0 %v947
        %1717 = vmatprep.subr.mxu0 0.0
        %1718 = vmatpush2.xpose.msra.mxu0 0.0
        %1719 = vmatprep.subr.mxu0 0.0
        %1720 = vmatpush2.xpose.msra.mxu0 0.0
        %1721 = vmatprep.subr.mxu0 0.0
        %1722 = vmatpush2.xpose.msra.mxu0 0.0
        %1723 = vmatprep.subr.mxu0 0.0
        %1724 = vmatpush2.xpose.msra.mxu0 0.0
        %1725 = vmatprep.subr.mxu0 0.0
        %1726 = vmatpush2.xpose.msra.mxu0 0.0
        %1727 = vmatprep.subr.mxu0 0.0
        %1728 = vmatpush2.xpose.msra.mxu0 0.0
        %1729 = vmatprep.subr.mxu0 0.0
        %1730 = vmatpush2.xpose.msra.mxu0 0.0
        %1731 = vmatprep.subr.mxu0 0.0
        %1732 = vmatpush2.xpose.msra.mxu0 0.0
        %1733 = vmatprep.subr.mxu0 0.0
        %1734 = vmatpush2.xpose.msra.mxu0 0.0
        %1735 = vmatprep.subr.mxu0 0.0
        %1736 = vmatpush2.xpose.msra.mxu0 0.0
        %1737 = vmatprep.subr.mxu0 0.0
        %1738 = vmatpush2.xpose.msra.mxu0 0.0
        %1739 = vmatprep.subr.mxu0 0.0
        %1740 = vmatpush2.xpose.msra.mxu0 0.0
        %1741 = vmatprep.subr.mxu0 0.0
        %1742 = vmatpush2.xpose.msra.mxu0 0.0
        %1743 = vmatprep.subr.mxu0 0.0
        %1744 = vmatpush2.xpose.msra.mxu0 0.0
        %1745 = vmatprep.subr.mxu0 0.0
        %1746 = vmatpush2.xpose.msra.mxu0 0.0
        %1747 = vmatprep.subr.mxu0 0.0
        %1748 = vmatpush2.xpose.msra.mxu0 0.0
        %1749 = vmatprep.mubr.f32.mxu0 0.0
        %1750 = vmatmul.mubr.f32.gmra.mxu0 %v947
        %v1751 = vpop.f32.mrf.mxu0
        %v1752 = vadd.f32 0.0, %v1751
        %v1753 = vpop.f32.mrf.mxu0
        %1754 = vdwg.mxu0
        %1755 = vmatprep.subr.mxu0 0.0
        %1756 = vmatpush1.xpose.msra.mxu0 0.0
        %1757 = vmatprep.subr.mxu0 0.0
        %1758 = vmatpush1.xpose.msra.mxu0 0.0
        %1759 = vmatprep.subr.mxu0 0.0
        %1760 = vmatpush1.xpose.msra.mxu0 0.0
        %1761 = vmatprep.subr.mxu0 0.0
        %1762 = vmatpush1.xpose.msra.mxu0 0.0
        %1763 = vmatprep.subr.mxu0 0.0
        %1764 = vmatpush1.xpose.msra.mxu0 0.0
        %1765 = vmatprep.subr.mxu0 0.0
        %1766 = vmatpush1.xpose.msra.mxu0 0.0
        %1767 = vmatprep.subr.mxu0 0.0
        %1768 = vmatpush1.xpose.msra.mxu0 0.0
        %1769 = vmatprep.subr.mxu0 0.0
        %1770 = vmatpush1.xpose.msra.mxu0 0.0
        %1771 = vmatprep.subr.mxu0 0.0
        %1772 = vmatpush1.xpose.msra.mxu0 0.0
        %1773 = vmatprep.subr.mxu0 0.0
        %1774 = vmatpush1.xpose.msra.mxu0 0.0
        %1775 = vmatprep.subr.mxu0 0.0
        %1776 = vmatpush1.xpose.msra.mxu0 0.0
        %1777 = vmatprep.subr.mxu0 0.0
        %1778 = vmatpush1.xpose.msra.mxu0 0.0
        %1779 = vmatprep.subr.mxu0 0.0
        %1780 = vmatpush1.xpose.msra.mxu0 0.0
        %1781 = vmatprep.subr.mxu0 0.0
        %1782 = vmatpush1.xpose.msra.mxu0 0.0
        %1783 = vmatprep.subr.mxu0 0.0
        %1784 = vmatpush1.xpose.msra.mxu0 0.0
        %1785 = vmatprep.subr.mxu0 0.0
        %1786 = vmatpush1.xpose.msra.mxu0 %v948
        %1787 = vmatprep.subr.mxu0 0.0
        %1788 = vmatpush2.xpose.msra.mxu0 0.0
        %1789 = vmatprep.subr.mxu0 0.0
        %1790 = vmatpush2.xpose.msra.mxu0 0.0
        %1791 = vmatprep.subr.mxu0 0.0
        %1792 = vmatpush2.xpose.msra.mxu0 0.0
        %1793 = vmatprep.subr.mxu0 0.0
        %1794 = vmatpush2.xpose.msra.mxu0 0.0
        %1795 = vmatprep.subr.mxu0 0.0
        %1796 = vmatpush2.xpose.msra.mxu0 0.0
        %1797 = vmatprep.subr.mxu0 0.0
        %1798 = vmatpush2.xpose.msra.mxu0 0.0
        %1799 = vmatprep.subr.mxu0 0.0
        %1800 = vmatpush2.xpose.msra.mxu0 0.0
        %1801 = vmatprep.subr.mxu0 0.0
        %1802 = vmatpush2.xpose.msra.mxu0 0.0
        %1803 = vmatprep.subr.mxu0 0.0
        %1804 = vmatpush2.xpose.msra.mxu0 0.0
        %1805 = vmatprep.subr.mxu0 0.0
        %1806 = vmatpush2.xpose.msra.mxu0 0.0
        %1807 = vmatprep.subr.mxu0 0.0
        %1808 = vmatpush2.xpose.msra.mxu0 0.0
        %1809 = vmatprep.subr.mxu0 0.0
        %1810 = vmatpush2.xpose.msra.mxu0 0.0
        %1811 = vmatprep.subr.mxu0 0.0
        %1812 = vmatpush2.xpose.msra.mxu0 0.0
        %1813 = vmatprep.subr.mxu0 0.0
        %1814 = vmatpush2.xpose.msra.mxu0 0.0
        %1815 = vmatprep.subr.mxu0 0.0
        %1816 = vmatpush2.xpose.msra.mxu0 0.0
        %1817 = vmatprep.subr.mxu0 0.0
        %1818 = vmatpush2.xpose.msra.mxu0 0.0
        %1819 = vmatprep.mubr.f32.mxu0 0.0
        %1820 = vmatmul.mubr.f32.gmra.mxu0 %v948
        %v1821 = vpop.f32.mrf.mxu0
        %v1822 = vadd.f32 0.0, %v1821
        %v1823 = vpop.f32.mrf.mxu0
        %1824 = vdwg.mxu0
        %1825 = vmatprep.subr.mxu0 0.0
        %1826 = vmatpush1.xpose.msra.mxu0 0.0
        %1827 = vmatprep.subr.mxu0 0.0
        %1828 = vmatpush1.xpose.msra.mxu0 0.0
        %1829 = vmatprep.subr.mxu0 0.0
        %1830 = vmatpush1.xpose.msra.mxu0 0.0
        %1831 = vmatprep.subr.mxu0 0.0
        %1832 = vmatpush1.xpose.msra.mxu0 0.0
        %1833 = vmatprep.subr.mxu0 0.0
        %1834 = vmatpush1.xpose.msra.mxu0 0.0
        %1835 = vmatprep.subr.mxu0 0.0
        %1836 = vmatpush1.xpose.msra.mxu0 0.0
        %1837 = vmatprep.subr.mxu0 0.0
        %1838 = vmatpush1.xpose.msra.mxu0 0.0
        %1839 = vmatprep.subr.mxu0 0.0
        %1840 = vmatpush1.xpose.msra.mxu0 0.0
        %1841 = vmatprep.subr.mxu0 0.0
        %1842 = vmatpush1.xpose.msra.mxu0 0.0
        %1843 = vmatprep.subr.mxu0 0.0
        %1844 = vmatpush1.xpose.msra.mxu0 0.0
        %1845 = vmatprep.subr.mxu0 0.0
        %1846 = vmatpush1.xpose.msra.mxu0 0.0
        %1847 = vmatprep.subr.mxu0 0.0
        %1848 = vmatpush1.xpose.msra.mxu0 0.0
        %1849 = vmatprep.subr.mxu0 0.0
        %1850 = vmatpush1.xpose.msra.mxu0 0.0
        %1851 = vmatprep.subr.mxu0 0.0
        %1852 = vmatpush1.xpose.msra.mxu0 0.0
        %1853 = vmatprep.subr.mxu0 0.0
        %1854 = vmatpush1.xpose.msra.mxu0 0.0
        %1855 = vmatprep.subr.mxu0 0.0
        %1856 = vmatpush1.xpose.msra.mxu0 %v949
        %1857 = vmatprep.subr.mxu0 0.0
        %1858 = vmatpush2.xpose.msra.mxu0 0.0
        %1859 = vmatprep.subr.mxu0 0.0
        %1860 = vmatpush2.xpose.msra.mxu0 0.0
        %1861 = vmatprep.subr.mxu0 0.0
        %1862 = vmatpush2.xpose.msra.mxu0 0.0
        %1863 = vmatprep.subr.mxu0 0.0
        %1864 = vmatpush2.xpose.msra.mxu0 0.0
        %1865 = vmatprep.subr.mxu0 0.0
        %1866 = vmatpush2.xpose.msra.mxu0 0.0
        %1867 = vmatprep.subr.mxu0 0.0
        %1868 = vmatpush2.xpose.msra.mxu0 0.0
        %1869 = vmatprep.subr.mxu0 0.0
        %1870 = vmatpush2.xpose.msra.mxu0 0.0
        %1871 = vmatprep.subr.mxu0 0.0
        %1872 = vmatpush2.xpose.msra.mxu0 0.0
        %1873 = vmatprep.subr.mxu0 0.0
        %1874 = vmatpush2.xpose.msra.mxu0 0.0
        %1875 = vmatprep.subr.mxu0 0.0
        %1876 = vmatpush2.xpose.msra.mxu0 0.0
        %1877 = vmatprep.subr.mxu0 0.0
        %1878 = vmatpush2.xpose.msra.mxu0 0.0
        %1879 = vmatprep.subr.mxu0 0.0
        %1880 = vmatpush2.xpose.msra.mxu0 0.0
        %1881 = vmatprep.subr.mxu0 0.0
        %1882 = vmatpush2.xpose.msra.mxu0 0.0
        %1883 = vmatprep.subr.mxu0 0.0
        %1884 = vmatpush2.xpose.msra.mxu0 0.0
        %1885 = vmatprep.subr.mxu0 0.0
        %1886 = vmatpush2.xpose.msra.mxu0 0.0
        %1887 = vmatprep.subr.mxu0 0.0
        %1888 = vmatpush2.xpose.msra.mxu0 0.0
        %1889 = vmatprep.mubr.f32.mxu0 0.0
        %1890 = vmatmul.mubr.f32.gmra.mxu0 %v949
        %v1891 = vpop.f32.mrf.mxu0
        %v1892 = vadd.f32 0.0, %v1891
        %v1893 = vpop.f32.mrf.mxu0
        %1894 = vdwg.mxu0
        %1895 = vmatprep.subr.mxu0 0.0
        %1896 = vmatpush1.xpose.msra.mxu0 0.0
        %1897 = vmatprep.subr.mxu0 0.0
        %1898 = vmatpush1.xpose.msra.mxu0 0.0
        %1899 = vmatprep.subr.mxu0 0.0
        %1900 = vmatpush1.xpose.msra.mxu0 0.0
        %1901 = vmatprep.subr.mxu0 0.0
        %1902 = vmatpush1.xpose.msra.mxu0 0.0
        %1903 = vmatprep.subr.mxu0 0.0
        %1904 = vmatpush1.xpose.msra.mxu0 0.0
        %1905 = vmatprep.subr.mxu0 0.0
        %1906 = vmatpush1.xpose.msra.mxu0 0.0
        %1907 = vmatprep.subr.mxu0 0.0
        %1908 = vmatpush1.xpose.msra.mxu0 0.0
        %1909 = vmatprep.subr.mxu0 0.0
        %1910 = vmatpush1.xpose.msra.mxu0 0.0
        %1911 = vmatprep.subr.mxu0 0.0
        %1912 = vmatpush1.xpose.msra.mxu0 0.0
        %1913 = vmatprep.subr.mxu0 0.0
        %1914 = vmatpush1.xpose.msra.mxu0 0.0
        %1915 = vmatprep.subr.mxu0 0.0
        %1916 = vmatpush1.xpose.msra.mxu0 0.0
        %1917 = vmatprep.subr.mxu0 0.0
        %1918 = vmatpush1.xpose.msra.mxu0 0.0
        %1919 = vmatprep.subr.mxu0 0.0
        %1920 = vmatpush1.xpose.msra.mxu0 0.0
        %1921 = vmatprep.subr.mxu0 0.0
        %1922 = vmatpush1.xpose.msra.mxu0 0.0
        %1923 = vmatprep.subr.mxu0 0.0
        %1924 = vmatpush1.xpose.msra.mxu0 0.0
        %1925 = vmatprep.subr.mxu0 0.0
        %1926 = vmatpush1.xpose.msra.mxu0 %v950
        %1927 = vmatprep.subr.mxu0 0.0
        %1928 = vmatpush2.xpose.msra.mxu0 0.0
        %1929 = vmatprep.subr.mxu0 0.0
        %1930 = vmatpush2.xpose.msra.mxu0 0.0
        %1931 = vmatprep.subr.mxu0 0.0
        %1932 = vmatpush2.xpose.msra.mxu0 0.0
        %1933 = vmatprep.subr.mxu0 0.0
        %1934 = vmatpush2.xpose.msra.mxu0 0.0
        %1935 = vmatprep.subr.mxu0 0.0
        %1936 = vmatpush2.xpose.msra.mxu0 0.0
        %1937 = vmatprep.subr.mxu0 0.0
        %1938 = vmatpush2.xpose.msra.mxu0 0.0
        %1939 = vmatprep.subr.mxu0 0.0
        %1940 = vmatpush2.xpose.msra.mxu0 0.0
        %1941 = vmatprep.subr.mxu0 0.0
        %1942 = vmatpush2.xpose.msra.mxu0 0.0
        %1943 = vmatprep.subr.mxu0 0.0
        %1944 = vmatpush2.xpose.msra.mxu0 0.0
        %1945 = vmatprep.subr.mxu0 0.0
        %1946 = vmatpush2.xpose.msra.mxu0 0.0
        %1947 = vmatprep.subr.mxu0 0.0
        %1948 = vmatpush2.xpose.msra.mxu0 0.0
        %1949 = vmatprep.subr.mxu0 0.0
        %1950 = vmatpush2.xpose.msra.mxu0 0.0
        %1951 = vmatprep.subr.mxu0 0.0
        %1952 = vmatpush2.xpose.msra.mxu0 0.0
        %1953 = vmatprep.subr.mxu0 0.0
        %1954 = vmatpush2.xpose.msra.mxu0 0.0
        %1955 = vmatprep.subr.mxu0 0.0
        %1956 = vmatpush2.xpose.msra.mxu0 0.0
        %1957 = vmatprep.subr.mxu0 0.0
        %1958 = vmatpush2.xpose.msra.mxu0 0.0
        %1959 = vmatprep.mubr.f32.mxu0 0.0
        %1960 = vmatmul.mubr.f32.gmra.mxu0 %v950
        %v1961 = vpop.f32.mrf.mxu0
        %v1962 = vadd.f32 0.0, %v1961
        %v1963 = vpop.f32.mrf.mxu0
        %1964 = vdwg.mxu0
        %1965 = vmatprep.subr.mxu0 0.0
        %1966 = vmatpush1.xpose.msra.mxu0 0.0
        %1967 = vmatprep.subr.mxu0 0.0
        %1968 = vmatpush1.xpose.msra.mxu0 0.0
        %1969 = vmatprep.subr.mxu0 0.0
        %1970 = vmatpush1.xpose.msra.mxu0 0.0
        %1971 = vmatprep.subr.mxu0 0.0
        %1972 = vmatpush1.xpose.msra.mxu0 0.0
        %1973 = vmatprep.subr.mxu0 0.0
        %1974 = vmatpush1.xpose.msra.mxu0 0.0
        %1975 = vmatprep.subr.mxu0 0.0
        %1976 = vmatpush1.xpose.msra.mxu0 0.0
        %1977 = vmatprep.subr.mxu0 0.0
        %1978 = vmatpush1.xpose.msra.mxu0 0.0
        %1979 = vmatprep.subr.mxu0 0.0
        %1980 = vmatpush1.xpose.msra.mxu0 0.0
        %1981 = vmatprep.subr.mxu0 0.0
        %1982 = vmatpush1.xpose.msra.mxu0 0.0
        %1983 = vmatprep.subr.mxu0 0.0
        %1984 = vmatpush1.xpose.msra.mxu0 0.0
        %1985 = vmatprep.subr.mxu0 0.0
        %1986 = vmatpush1.xpose.msra.mxu0 0.0
        %1987 = vmatprep.subr.mxu0 0.0
        %1988 = vmatpush1.xpose.msra.mxu0 0.0
        %1989 = vmatprep.subr.mxu0 0.0
        %1990 = vmatpush1.xpose.msra.mxu0 0.0
        %1991 = vmatprep.subr.mxu0 0.0
        %1992 = vmatpush1.xpose.msra.mxu0 0.0
        %1993 = vmatprep.subr.mxu0 0.0
        %1994 = vmatpush1.xpose.msra.mxu0 0.0
        %1995 = vmatprep.subr.mxu0 0.0
        %1996 = vmatpush1.xpose.msra.mxu0 %v951
        %1997 = vmatprep.subr.mxu0 0.0
        %1998 = vmatpush2.xpose.msra.mxu0 0.0
        %1999 = vmatprep.subr.mxu0 0.0
        %2000 = vmatpush2.xpose.msra.mxu0 0.0
        %2001 = vmatprep.subr.mxu0 0.0
        %2002 = vmatpush2.xpose.msra.mxu0 0.0
        %2003 = vmatprep.subr.mxu0 0.0
        %2004 = vmatpush2.xpose.msra.mxu0 0.0
        %2005 = vmatprep.subr.mxu0 0.0
        %2006 = vmatpush2.xpose.msra.mxu0 0.0
        %2007 = vmatprep.subr.mxu0 0.0
        %2008 = vmatpush2.xpose.msra.mxu0 0.0
        %2009 = vmatprep.subr.mxu0 0.0
        %2010 = vmatpush2.xpose.msra.mxu0 0.0
        %2011 = vmatprep.subr.mxu0 0.0
        %2012 = vmatpush2.xpose.msra.mxu0 0.0
        %2013 = vmatprep.subr.mxu0 0.0
        %2014 = vmatpush2.xpose.msra.mxu0 0.0
        %2015 = vmatprep.subr.mxu0 0.0
        %2016 = vmatpush2.xpose.msra.mxu0 0.0
        %2017 = vmatprep.subr.mxu0 0.0
        %2018 = vmatpush2.xpose.msra.mxu0 0.0
        %2019 = vmatprep.subr.mxu0 0.0
        %2020 = vmatpush2.xpose.msra.mxu0 0.0
        %2021 = vmatprep.subr.mxu0 0.0
        %2022 = vmatpush2.xpose.msra.mxu0 0.0
        %2023 = vmatprep.subr.mxu0 0.0
        %2024 = vmatpush2.xpose.msra.mxu0 0.0
        %2025 = vmatprep.subr.mxu0 0.0
        %2026 = vmatpush2.xpose.msra.mxu0 0.0
        %2027 = vmatprep.subr.mxu0 0.0
        %2028 = vmatpush2.xpose.msra.mxu0 0.0
        %2029 = vmatprep.mubr.f32.mxu0 0.0
        %2030 = vmatmul.mubr.f32.gmra.mxu0 %v951
        %v2031 = vpop.f32.mrf.mxu0
        %v2032 = vadd.f32 0.0, %v2031
        %v2033 = vpop.f32.mrf.mxu0
        %2034 = vdwg.mxu0
        %2035 = vmatprep.subr.mxu0 0.0
        %2036 = vmatpush1.xpose.msra.mxu0 0.0
        %2037 = vmatprep.subr.mxu0 0.0
        %2038 = vmatpush1.xpose.msra.mxu0 0.0
        %2039 = vmatprep.subr.mxu0 0.0
        %2040 = vmatpush1.xpose.msra.mxu0 0.0
        %2041 = vmatprep.subr.mxu0 0.0
        %2042 = vmatpush1.xpose.msra.mxu0 0.0
        %2043 = vmatprep.subr.mxu0 0.0
        %2044 = vmatpush1.xpose.msra.mxu0 0.0
        %2045 = vmatprep.subr.mxu0 0.0
        %2046 = vmatpush1.xpose.msra.mxu0 0.0
        %2047 = vmatprep.subr.mxu0 0.0
        %2048 = vmatpush1.xpose.msra.mxu0 0.0
        %2049 = vmatprep.subr.mxu0 0.0
        %2050 = vmatpush1.xpose.msra.mxu0 0.0
        %2051 = vmatprep.subr.mxu0 0.0
        %2052 = vmatpush1.xpose.msra.mxu0 0.0
        %2053 = vmatprep.subr.mxu0 0.0
        %2054 = vmatpush1.xpose.msra.mxu0 0.0
        %2055 = vmatprep.subr.mxu0 0.0
        %2056 = vmatpush1.xpose.msra.mxu0 0.0
        %2057 = vmatprep.subr.mxu0 0.0
        %2058 = vmatpush1.xpose.msra.mxu0 0.0
        %2059 = vmatprep.subr.mxu0 0.0
        %2060 = vmatpush1.xpose.msra.mxu0 0.0
        %2061 = vmatprep.subr.mxu0 0.0
        %2062 = vmatpush1.xpose.msra.mxu0 0.0
        %2063 = vmatprep.subr.mxu0 0.0
        %2064 = vmatpush1.xpose.msra.mxu0 0.0
        %2065 = vmatprep.subr.mxu0 0.0
        %2066 = vmatpush1.xpose.msra.mxu0 %v952
        %2067 = vmatprep.subr.mxu0 0.0
        %2068 = vmatpush2.xpose.msra.mxu0 0.0
        %2069 = vmatprep.subr.mxu0 0.0
        %2070 = vmatpush2.xpose.msra.mxu0 0.0
        %2071 = vmatprep.subr.mxu0 0.0
        %2072 = vmatpush2.xpose.msra.mxu0 0.0
        %2073 = vmatprep.subr.mxu0 0.0
        %2074 = vmatpush2.xpose.msra.mxu0 0.0
        %2075 = vmatprep.subr.mxu0 0.0
        %2076 = vmatpush2.xpose.msra.mxu0 0.0
        %2077 = vmatprep.subr.mxu0 0.0
        %2078 = vmatpush2.xpose.msra.mxu0 0.0
        %2079 = vmatprep.subr.mxu0 0.0
        %2080 = vmatpush2.xpose.msra.mxu0 0.0
        %2081 = vmatprep.subr.mxu0 0.0
        %2082 = vmatpush2.xpose.msra.mxu0 0.0
        %2083 = vmatprep.subr.mxu0 0.0
        %2084 = vmatpush2.xpose.msra.mxu0 0.0
        %2085 = vmatprep.subr.mxu0 0.0
        %2086 = vmatpush2.xpose.msra.mxu0 0.0
        %2087 = vmatprep.subr.mxu0 0.0
        %2088 = vmatpush2.xpose.msra.mxu0 0.0
        %2089 = vmatprep.subr.mxu0 0.0
        %2090 = vmatpush2.xpose.msra.mxu0 0.0
        %2091 = vmatprep.subr.mxu0 0.0
        %2092 = vmatpush2.xpose.msra.mxu0 0.0
        %2093 = vmatprep.subr.mxu0 0.0
        %2094 = vmatpush2.xpose.msra.mxu0 0.0
        %2095 = vmatprep.subr.mxu0 0.0
        %2096 = vmatpush2.xpose.msra.mxu0 0.0
        %2097 = vmatprep.subr.mxu0 0.0
        %2098 = vmatpush2.xpose.msra.mxu0 0.0
        %2099 = vmatprep.mubr.f32.mxu0 0.0
        %2100 = vmatmul.mubr.f32.gmra.mxu0 %v952
        %v2101 = vpop.f32.mrf.mxu0
        %v2102 = vadd.f32 0.0, %v2101
        %v2103 = vpop.f32.mrf.mxu0
        %2104 = vdwg.mxu0
        %2105 = vmatprep.subr.mxu0 0.0
        %2106 = vmatpush1.xpose.msra.mxu0 0.0
        %2107 = vmatprep.subr.mxu0 0.0
        %2108 = vmatpush1.xpose.msra.mxu0 0.0
        %2109 = vmatprep.subr.mxu0 0.0
        %2110 = vmatpush1.xpose.msra.mxu0 0.0
        %2111 = vmatprep.subr.mxu0 0.0
        %2112 = vmatpush1.xpose.msra.mxu0 0.0
        %2113 = vmatprep.subr.mxu0 0.0
        %2114 = vmatpush1.xpose.msra.mxu0 0.0
        %2115 = vmatprep.subr.mxu0 0.0
        %2116 = vmatpush1.xpose.msra.mxu0 0.0
        %2117 = vmatprep.subr.mxu0 0.0
        %2118 = vmatpush1.xpose.msra.mxu0 0.0
        %2119 = vmatprep.subr.mxu0 0.0
        %2120 = vmatpush1.xpose.msra.mxu0 0.0
        %2121 = vmatprep.subr.mxu0 0.0
        %2122 = vmatpush1.xpose.msra.mxu0 0.0
        %2123 = vmatprep.subr.mxu0 0.0
        %2124 = vmatpush1.xpose.msra.mxu0 0.0
        %2125 = vmatprep.subr.mxu0 0.0
        %2126 = vmatpush1.xpose.msra.mxu0 0.0
        %2127 = vmatprep.subr.mxu0 0.0
        %2128 = vmatpush1.xpose.msra.mxu0 0.0
        %2129 = vmatprep.subr.mxu0 0.0
        %2130 = vmatpush1.xpose.msra.mxu0 0.0
        %2131 = vmatprep.subr.mxu0 0.0
        %2132 = vmatpush1.xpose.msra.mxu0 0.0
        %2133 = vmatprep.subr.mxu0 0.0
        %2134 = vmatpush1.xpose.msra.mxu0 0.0
        %2135 = vmatprep.subr.mxu0 0.0
        %2136 = vmatpush1.xpose.msra.mxu0 %v953
        %2137 = vmatprep.subr.mxu0 0.0
        %2138 = vmatpush2.xpose.msra.mxu0 0.0
        %2139 = vmatprep.subr.mxu0 0.0
        %2140 = vmatpush2.xpose.msra.mxu0 0.0
        %2141 = vmatprep.subr.mxu0 0.0
        %2142 = vmatpush2.xpose.msra.mxu0 0.0
        %2143 = vmatprep.subr.mxu0 0.0
        %2144 = vmatpush2.xpose.msra.mxu0 0.0
        %2145 = vmatprep.subr.mxu0 0.0
        %2146 = vmatpush2.xpose.msra.mxu0 0.0
        %2147 = vmatprep.subr.mxu0 0.0
        %2148 = vmatpush2.xpose.msra.mxu0 0.0
        %2149 = vmatprep.subr.mxu0 0.0
        %2150 = vmatpush2.xpose.msra.mxu0 0.0
        %2151 = vmatprep.subr.mxu0 0.0
        %2152 = vmatpush2.xpose.msra.mxu0 0.0
        %2153 = vmatprep.subr.mxu0 0.0
        %2154 = vmatpush2.xpose.msra.mxu0 0.0
        %2155 = vmatprep.subr.mxu0 0.0
        %2156 = vmatpush2.xpose.msra.mxu0 0.0
        %2157 = vmatprep.subr.mxu0 0.0
        %2158 = vmatpush2.xpose.msra.mxu0 0.0
        %2159 = vmatprep.subr.mxu0 0.0
        %2160 = vmatpush2.xpose.msra.mxu0 0.0
        %2161 = vmatprep.subr.mxu0 0.0
        %2162 = vmatpush2.xpose.msra.mxu0 0.0
        %2163 = vmatprep.subr.mxu0 0.0
        %2164 = vmatpush2.xpose.msra.mxu0 0.0
        %2165 = vmatprep.subr.mxu0 0.0
        %2166 = vmatpush2.xpose.msra.mxu0 0.0
        %2167 = vmatprep.subr.mxu0 0.0
        %2168 = vmatpush2.xpose.msra.mxu0 0.0
        %2169 = vmatprep.mubr.f32.mxu0 0.0
        %2170 = vmatmul.mubr.f32.gmra.mxu0 %v953
        %v2171 = vpop.f32.mrf.mxu0
        %v2172 = vadd.f32 0.0, %v2171
        %v2173 = vpop.f32.mrf.mxu0
        %2174 = vdwg.mxu0
        %2175 = vmatprep.subr.mxu0 0.0
        %2176 = vmatpush1.xpose.msra.mxu0 0.0
        %2177 = vmatprep.subr.mxu0 0.0
        %2178 = vmatpush1.xpose.msra.mxu0 0.0
        %2179 = vmatprep.subr.mxu0 0.0
        %2180 = vmatpush1.xpose.msra.mxu0 0.0
        %2181 = vmatprep.subr.mxu0 0.0
        %2182 = vmatpush1.xpose.msra.mxu0 0.0
        %2183 = vmatprep.subr.mxu0 0.0
        %2184 = vmatpush1.xpose.msra.mxu0 0.0
        %2185 = vmatprep.subr.mxu0 0.0
        %2186 = vmatpush1.xpose.msra.mxu0 0.0
        %2187 = vmatprep.subr.mxu0 0.0
        %2188 = vmatpush1.xpose.msra.mxu0 0.0
        %2189 = vmatprep.subr.mxu0 0.0
        %2190 = vmatpush1.xpose.msra.mxu0 0.0
        %2191 = vmatprep.subr.mxu0 0.0
        %2192 = vmatpush1.xpose.msra.mxu0 0.0
        %2193 = vmatprep.subr.mxu0 0.0
        %2194 = vmatpush1.xpose.msra.mxu0 0.0
        %2195 = vmatprep.subr.mxu0 0.0
        %2196 = vmatpush1.xpose.msra.mxu0 0.0
        %2197 = vmatprep.subr.mxu0 0.0
        %2198 = vmatpush1.xpose.msra.mxu0 0.0
        %2199 = vmatprep.subr.mxu0 0.0
        %2200 = vmatpush1.xpose.msra.mxu0 0.0
        %2201 = vmatprep.subr.mxu0 0.0
        %2202 = vmatpush1.xpose.msra.mxu0 0.0
        %2203 = vmatprep.subr.mxu0 0.0
        %2204 = vmatpush1.xpose.msra.mxu0 0.0
        %2205 = vmatprep.subr.mxu0 0.0
        %2206 = vmatpush1.xpose.msra.mxu0 %v954
        %2207 = vmatprep.subr.mxu0 0.0
        %2208 = vmatpush2.xpose.msra.mxu0 0.0
        %2209 = vmatprep.subr.mxu0 0.0
        %2210 = vmatpush2.xpose.msra.mxu0 0.0
        %2211 = vmatprep.subr.mxu0 0.0
        %2212 = vmatpush2.xpose.msra.mxu0 0.0
        %2213 = vmatprep.subr.mxu0 0.0
        %2214 = vmatpush2.xpose.msra.mxu0 0.0
        %2215 = vmatprep.subr.mxu0 0.0
        %2216 = vmatpush2.xpose.msra.mxu0 0.0
        %2217 = vmatprep.subr.mxu0 0.0
        %2218 = vmatpush2.xpose.msra.mxu0 0.0
        %2219 = vmatprep.subr.mxu0 0.0
        %2220 = vmatpush2.xpose.msra.mxu0 0.0
        %2221 = vmatprep.subr.mxu0 0.0
        %2222 = vmatpush2.xpose.msra.mxu0 0.0
        %2223 = vmatprep.subr.mxu0 0.0
        %2224 = vmatpush2.xpose.msra.mxu0 0.0
        %2225 = vmatprep.subr.mxu0 0.0
        %2226 = vmatpush2.xpose.msra.mxu0 0.0
        %2227 = vmatprep.subr.mxu0 0.0
        %2228 = vmatpush2.xpose.msra.mxu0 0.0
        %2229 = vmatprep.subr.mxu0 0.0
        %2230 = vmatpush2.xpose.msra.mxu0 0.0
        %2231 = vmatprep.subr.mxu0 0.0
        %2232 = vmatpush2.xpose.msra.mxu0 0.0
        %2233 = vmatprep.subr.mxu0 0.0
        %2234 = vmatpush2.xpose.msra.mxu0 0.0
        %2235 = vmatprep.subr.mxu0 0.0
        %2236 = vmatpush2.xpose.msra.mxu0 0.0
        %2237 = vmatprep.subr.mxu0 0.0
        %2238 = vmatpush2.xpose.msra.mxu0 0.0
        %2239 = vmatprep.mubr.f32.mxu0 0.0
        %2240 = vmatmul.mubr.f32.gmra.mxu0 %v954
        %v2241 = vpop.f32.mrf.mxu0
        %v2242 = vadd.f32 0.0, %v2241
        %v2243 = vpop.f32.mrf.mxu0
        %2244 = vdwg.mxu0
        %2245 = vmatprep.subr.mxu0 0.0
        %2246 = vmatpush1.xpose.msra.mxu0 0.0
        %2247 = vmatprep.subr.mxu0 0.0
        %2248 = vmatpush1.xpose.msra.mxu0 0.0
        %2249 = vmatprep.subr.mxu0 0.0
        %2250 = vmatpush1.xpose.msra.mxu0 0.0
        %2251 = vmatprep.subr.mxu0 0.0
        %2252 = vmatpush1.xpose.msra.mxu0 0.0
        %2253 = vmatprep.subr.mxu0 0.0
        %2254 = vmatpush1.xpose.msra.mxu0 0.0
        %2255 = vmatprep.subr.mxu0 0.0
        %2256 = vmatpush1.xpose.msra.mxu0 0.0
        %2257 = vmatprep.subr.mxu0 0.0
        %2258 = vmatpush1.xpose.msra.mxu0 0.0
        %2259 = vmatprep.subr.mxu0 0.0
        %2260 = vmatpush1.xpose.msra.mxu0 0.0
        %2261 = vmatprep.subr.mxu0 0.0
        %2262 = vmatpush1.xpose.msra.mxu0 0.0
        %2263 = vmatprep.subr.mxu0 0.0
        %2264 = vmatpush1.xpose.msra.mxu0 0.0
        %2265 = vmatprep.subr.mxu0 0.0
        %2266 = vmatpush1.xpose.msra.mxu0 0.0
        %2267 = vmatprep.subr.mxu0 0.0
        %2268 = vmatpush1.xpose.msra.mxu0 0.0
        %2269 = vmatprep.subr.mxu0 0.0
        %2270 = vmatpush1.xpose.msra.mxu0 0.0
        %2271 = vmatprep.subr.mxu0 0.0
        %2272 = vmatpush1.xpose.msra.mxu0 0.0
        %2273 = vmatprep.subr.mxu0 0.0
        %2274 = vmatpush1.xpose.msra.mxu0 0.0
        %2275 = vmatprep.subr.mxu0 0.0
        %2276 = vmatpush1.xpose.msra.mxu0 %v955
        %2277 = vmatprep.subr.mxu0 0.0
        %2278 = vmatpush2.xpose.msra.mxu0 0.0
        %2279 = vmatprep.subr.mxu0 0.0
        %2280 = vmatpush2.xpose.msra.mxu0 0.0
        %2281 = vmatprep.subr.mxu0 0.0
        %2282 = vmatpush2.xpose.msra.mxu0 0.0
        %2283 = vmatprep.subr.mxu0 0.0
        %2284 = vmatpush2.xpose.msra.mxu0 0.0
        %2285 = vmatprep.subr.mxu0 0.0
        %2286 = vmatpush2.xpose.msra.mxu0 0.0
        %2287 = vmatprep.subr.mxu0 0.0
        %2288 = vmatpush2.xpose.msra.mxu0 0.0
        %2289 = vmatprep.subr.mxu0 0.0
        %2290 = vmatpush2.xpose.msra.mxu0 0.0
        %2291 = vmatprep.subr.mxu0 0.0
        %2292 = vmatpush2.xpose.msra.mxu0 0.0
        %2293 = vmatprep.subr.mxu0 0.0
        %2294 = vmatpush2.xpose.msra.mxu0 0.0
        %2295 = vmatprep.subr.mxu0 0.0
        %2296 = vmatpush2.xpose.msra.mxu0 0.0
        %2297 = vmatprep.subr.mxu0 0.0
        %2298 = vmatpush2.xpose.msra.mxu0 0.0
        %2299 = vmatprep.subr.mxu0 0.0
        %2300 = vmatpush2.xpose.msra.mxu0 0.0
        %2301 = vmatprep.subr.mxu0 0.0
        %2302 = vmatpush2.xpose.msra.mxu0 0.0
        %2303 = vmatprep.subr.mxu0 0.0
        %2304 = vmatpush2.xpose.msra.mxu0 0.0
        %2305 = vmatprep.subr.mxu0 0.0
        %2306 = vmatpush2.xpose.msra.mxu0 0.0
        %2307 = vmatprep.subr.mxu0 0.0
        %2308 = vmatpush2.xpose.msra.mxu0 0.0
        %2309 = vmatprep.mubr.f32.mxu0 0.0
        %2310 = vmatmul.mubr.f32.gmra.mxu0 %v955
        %v2311 = vpop.f32.mrf.mxu0
        %v2312 = vadd.f32 0.0, %v2311
        %v2313 = vpop.f32.mrf.mxu0
        %2314 = vdwg.mxu0
        %2315 = vmatprep.subr.mxu0 0.0
        %2316 = vmatpush1.xpose.msra.mxu0 0.0
        %2317 = vmatprep.subr.mxu0 0.0
        %2318 = vmatpush1.xpose.msra.mxu0 0.0
        %2319 = vmatprep.subr.mxu0 0.0
        %2320 = vmatpush1.xpose.msra.mxu0 0.0
        %2321 = vmatprep.subr.mxu0 0.0
        %2322 = vmatpush1.xpose.msra.mxu0 0.0
        %2323 = vmatprep.subr.mxu0 0.0
        %2324 = vmatpush1.xpose.msra.mxu0 0.0
        %2325 = vmatprep.subr.mxu0 0.0
        %2326 = vmatpush1.xpose.msra.mxu0 0.0
        %2327 = vmatprep.subr.mxu0 0.0
        %2328 = vmatpush1.xpose.msra.mxu0 0.0
        %2329 = vmatprep.subr.mxu0 0.0
        %2330 = vmatpush1.xpose.msra.mxu0 0.0
        %2331 = vmatprep.subr.mxu0 0.0
        %2332 = vmatpush1.xpose.msra.mxu0 0.0
        %2333 = vmatprep.subr.mxu0 0.0
        %2334 = vmatpush1.xpose.msra.mxu0 0.0
        %2335 = vmatprep.subr.mxu0 0.0
        %2336 = vmatpush1.xpose.msra.mxu0 0.0
        %2337 = vmatprep.subr.mxu0 0.0
        %2338 = vmatpush1.xpose.msra.mxu0 0.0
        %2339 = vmatprep.subr.mxu0 0.0
        %2340 = vmatpush1.xpose.msra.mxu0 0.0
        %2341 = vmatprep.subr.mxu0 0.0
        %2342 = vmatpush1.xpose.msra.mxu0 0.0
        %2343 = vmatprep.subr.mxu0 0.0
        %2344 = vmatpush1.xpose.msra.mxu0 0.0
        %2345 = vmatprep.subr.mxu0 0.0
        %2346 = vmatpush1.xpose.msra.mxu0 %v956
        %2347 = vmatprep.subr.mxu0 0.0
        %2348 = vmatpush2.xpose.msra.mxu0 0.0
        %2349 = vmatprep.subr.mxu0 0.0
        %2350 = vmatpush2.xpose.msra.mxu0 0.0
        %2351 = vmatprep.subr.mxu0 0.0
        %2352 = vmatpush2.xpose.msra.mxu0 0.0
        %2353 = vmatprep.subr.mxu0 0.0
        %2354 = vmatpush2.xpose.msra.mxu0 0.0
        %2355 = vmatprep.subr.mxu0 0.0
        %2356 = vmatpush2.xpose.msra.mxu0 0.0
        %2357 = vmatprep.subr.mxu0 0.0
        %2358 = vmatpush2.xpose.msra.mxu0 0.0
        %2359 = vmatprep.subr.mxu0 0.0
        %2360 = vmatpush2.xpose.msra.mxu0 0.0
        %2361 = vmatprep.subr.mxu0 0.0
        %2362 = vmatpush2.xpose.msra.mxu0 0.0
        %2363 = vmatprep.subr.mxu0 0.0
        %2364 = vmatpush2.xpose.msra.mxu0 0.0
        %2365 = vmatprep.subr.mxu0 0.0
        %2366 = vmatpush2.xpose.msra.mxu0 0.0
        %2367 = vmatprep.subr.mxu0 0.0
        %2368 = vmatpush2.xpose.msra.mxu0 0.0
        %2369 = vmatprep.subr.mxu0 0.0
        %2370 = vmatpush2.xpose.msra.mxu0 0.0
        %2371 = vmatprep.subr.mxu0 0.0
        %2372 = vmatpush2.xpose.msra.mxu0 0.0
        %2373 = vmatprep.subr.mxu0 0.0
        %2374 = vmatpush2.xpose.msra.mxu0 0.0
        %2375 = vmatprep.subr.mxu0 0.0
        %2376 = vmatpush2.xpose.msra.mxu0 0.0
        %2377 = vmatprep.subr.mxu0 0.0
        %2378 = vmatpush2.xpose.msra.mxu0 0.0
        %2379 = vmatprep.mubr.f32.mxu0 0.0
        %2380 = vmatmul.mubr.f32.gmra.mxu0 %v956
        %v2381 = vpop.f32.mrf.mxu0
        %v2382 = vadd.f32 0.0, %v2381
        %v2383 = vpop.f32.mrf.mxu0
        %2384 = vdwg.mxu0
        %vm2385 = vcmask 64512
        %v2387 = vsel %vm2385, %v1332, 0
        %2389 = vmatprep.subr.mxu0 0.0
        %2390 = vmatpush1.msra.mxu0 0.0
        %2391 = vmatprep.subr.mxu0 0.0
        %2392 = vmatpush1.msra.mxu0 0.0
        %2393 = vmatprep.subr.mxu0 0.0
        %2394 = vmatpush1.msra.mxu0 0.0
        %2395 = vmatprep.subr.mxu0 0.0
        %2396 = vmatpush1.msra.mxu0 0.0
        %2397 = vmatprep.subr.mxu0 0.0
        %2398 = vmatpush1.msra.mxu0 0.0
        %2399 = vmatprep.subr.mxu0 0.0
        %2400 = vmatpush1.msra.mxu0 0.0
        %2401 = vmatprep.subr.mxu0 0.0
        %2402 = vmatpush1.msra.mxu0 0.0
        %2403 = vmatprep.subr.mxu0 0.0
        %2404 = vmatpush1.msra.mxu0 0.0
        %2405 = vmatprep.subr.mxu0 0.0
        %2406 = vmatpush1.msra.mxu0 0.0
        %2407 = vmatprep.subr.mxu0 0.0
        %2408 = vmatpush1.msra.mxu0 0.0
        %2409 = vmatprep.subr.mxu0 0.0
        %2410 = vmatpush1.msra.mxu0 0.0
        %2411 = vmatprep.subr.mxu0 0.0
        %2412 = vmatpush1.msra.mxu0 0.0
        %2413 = vmatprep.subr.mxu0 0.0
        %2414 = vmatpush1.msra.mxu0 0.0
        %2415 = vmatprep.subr.mxu0 0.0
        %2416 = vmatpush1.msra.mxu0 0.0
        %2417 = vmatprep.subr.mxu0 0.0
        %2418 = vmatpush1.msra.mxu0 0.0
        %2419 = vmatprep.subr.mxu0 0.0
        %2420 = vmatpush1.msra.mxu0 %v1249
        %2421 = vmatprep.subr.mxu0 0.0
        %2422 = vmatpush2.msra.mxu0 0.0
        %2423 = vmatprep.subr.mxu0 0.0
        %2424 = vmatpush2.msra.mxu0 0.0
        %2425 = vmatprep.subr.mxu0 0.0
        %2426 = vmatpush2.msra.mxu0 0.0
        %2427 = vmatprep.subr.mxu0 0.0
        %2428 = vmatpush2.msra.mxu0 0.0
        %2429 = vmatprep.subr.mxu0 0.0
        %2430 = vmatpush2.msra.mxu0 0.0
        %2431 = vmatprep.subr.mxu0 0.0
        %2432 = vmatpush2.msra.mxu0 0.0
        %2433 = vmatprep.subr.mxu0 0.0
        %2434 = vmatpush2.msra.mxu0 0.0
        %2435 = vmatprep.subr.mxu0 0.0
        %2436 = vmatpush2.msra.mxu0 0.0
        %2437 = vmatprep.subr.mxu0 0.0
        %2438 = vmatpush2.msra.mxu0 0.0
        %2439 = vmatprep.subr.mxu0 0.0
        %2440 = vmatpush2.msra.mxu0 0.0
        %2441 = vmatprep.subr.mxu0 0.0
        %2442 = vmatpush2.msra.mxu0 0.0
        %2443 = vmatprep.subr.mxu0 0.0
        %2444 = vmatpush2.msra.mxu0 0.0
        %2445 = vmatprep.subr.mxu0 0.0
        %2446 = vmatpush2.msra.mxu0 0.0
        %2447 = vmatprep.subr.mxu0 0.0
        %2448 = vmatpush2.msra.mxu0 0.0
        %2449 = vmatprep.subr.mxu0 0.0
        %2450 = vmatpush2.msra.mxu0 0.0
        %2451 = vmatprep.subr.mxu0 0.0
        %2452 = vmatpush2.msra.mxu0 0.0
        %2453 = vmatprep.mubr.f32.mxu0 0.0
        %2454 = vmatmul.mubr.f32.gmra.mxu0 %v2387
        %v2455 = vpop.f32.mrf.mxu0
        %v2456 = vadd.f32 0.0, %v2455
        %v2457 = vpop.f32.mrf.mxu0
        %2458 = vdwg.mxu0
        %v2460 = vsel %vm2385, %v1402, 0
        %2462 = vmatprep.subr.mxu0 0.0
        %2463 = vmatpush1.msra.mxu0 0.0
        %2464 = vmatprep.subr.mxu0 0.0
        %2465 = vmatpush1.msra.mxu0 0.0
        %2466 = vmatprep.subr.mxu0 0.0
        %2467 = vmatpush1.msra.mxu0 0.0
        %2468 = vmatprep.subr.mxu0 0.0
        %2469 = vmatpush1.msra.mxu0 0.0
        %2470 = vmatprep.subr.mxu0 0.0
        %2471 = vmatpush1.msra.mxu0 0.0
        %2472 = vmatprep.subr.mxu0 0.0
        %2473 = vmatpush1.msra.mxu0 0.0
        %2474 = vmatprep.subr.mxu0 0.0
        %2475 = vmatpush1.msra.mxu0 0.0
        %2476 = vmatprep.subr.mxu0 0.0
        %2477 = vmatpush1.msra.mxu0 0.0
        %2478 = vmatprep.subr.mxu0 0.0
        %2479 = vmatpush1.msra.mxu0 0.0
        %2480 = vmatprep.subr.mxu0 0.0
        %2481 = vmatpush1.msra.mxu0 0.0
        %2482 = vmatprep.subr.mxu0 0.0
        %2483 = vmatpush1.msra.mxu0 0.0
        %2484 = vmatprep.subr.mxu0 0.0
        %2485 = vmatpush1.msra.mxu0 0.0
        %2486 = vmatprep.subr.mxu0 0.0
        %2487 = vmatpush1.msra.mxu0 0.0
        %2488 = vmatprep.subr.mxu0 0.0
        %2489 = vmatpush1.msra.mxu0 0.0
        %2490 = vmatprep.subr.mxu0 0.0
        %2491 = vmatpush1.msra.mxu0 0.0
        %2492 = vmatprep.subr.mxu0 0.0
        %2493 = vmatpush1.msra.mxu0 %v1250
        %2494 = vmatprep.subr.mxu0 0.0
        %2495 = vmatpush2.msra.mxu0 0.0
        %2496 = vmatprep.subr.mxu0 0.0
        %2497 = vmatpush2.msra.mxu0 0.0
        %2498 = vmatprep.subr.mxu0 0.0
        %2499 = vmatpush2.msra.mxu0 0.0
        %2500 = vmatprep.subr.mxu0 0.0
        %2501 = vmatpush2.msra.mxu0 0.0
        %2502 = vmatprep.subr.mxu0 0.0
        %2503 = vmatpush2.msra.mxu0 0.0
        %2504 = vmatprep.subr.mxu0 0.0
        %2505 = vmatpush2.msra.mxu0 0.0
        %2506 = vmatprep.subr.mxu0 0.0
        %2507 = vmatpush2.msra.mxu0 0.0
        %2508 = vmatprep.subr.mxu0 0.0
        %2509 = vmatpush2.msra.mxu0 0.0
        %2510 = vmatprep.subr.mxu0 0.0
        %2511 = vmatpush2.msra.mxu0 0.0
        %2512 = vmatprep.subr.mxu0 0.0
        %2513 = vmatpush2.msra.mxu0 0.0
        %2514 = vmatprep.subr.mxu0 0.0
        %2515 = vmatpush2.msra.mxu0 0.0
        %2516 = vmatprep.subr.mxu0 0.0
        %2517 = vmatpush2.msra.mxu0 0.0
        %2518 = vmatprep.subr.mxu0 0.0
        %2519 = vmatpush2.msra.mxu0 0.0
        %2520 = vmatprep.subr.mxu0 0.0
        %2521 = vmatpush2.msra.mxu0 0.0
        %2522 = vmatprep.subr.mxu0 0.0
        %2523 = vmatpush2.msra.mxu0 0.0
        %2524 = vmatprep.subr.mxu0 0.0
        %2525 = vmatpush2.msra.mxu0 0.0
        %2526 = vmatprep.mubr.f32.mxu0 0.0
        %2527 = vmatmul.mubr.f32.gmra.mxu0 %v2460
        %v2528 = vpop.f32.mrf.mxu0
        %v2529 = vadd.f32 0.0, %v2528
        %v2530 = vpop.f32.mrf.mxu0
        %2531 = vdwg.mxu0
        %v2533 = vsel %vm2385, %v1472, 0
        %2535 = vmatprep.subr.mxu0 0.0
        %2536 = vmatpush1.msra.mxu0 0.0
        %2537 = vmatprep.subr.mxu0 0.0
        %2538 = vmatpush1.msra.mxu0 0.0
        %2539 = vmatprep.subr.mxu0 0.0
        %2540 = vmatpush1.msra.mxu0 0.0
        %2541 = vmatprep.subr.mxu0 0.0
        %2542 = vmatpush1.msra.mxu0 0.0
        %2543 = vmatprep.subr.mxu0 0.0
        %2544 = vmatpush1.msra.mxu0 0.0
        %2545 = vmatprep.subr.mxu0 0.0
        %2546 = vmatpush1.msra.mxu0 0.0
        %2547 = vmatprep.subr.mxu0 0.0
        %2548 = vmatpush1.msra.mxu0 0.0
        %2549 = vmatprep.subr.mxu0 0.0
        %2550 = vmatpush1.msra.mxu0 0.0
        %2551 = vmatprep.subr.mxu0 0.0
        %2552 = vmatpush1.msra.mxu0 0.0
        %2553 = vmatprep.subr.mxu0 0.0
        %2554 = vmatpush1.msra.mxu0 0.0
        %2555 = vmatprep.subr.mxu0 0.0
        %2556 = vmatpush1.msra.mxu0 0.0
        %2557 = vmatprep.subr.mxu0 0.0
        %2558 = vmatpush1.msra.mxu0 0.0
        %2559 = vmatprep.subr.mxu0 0.0
        %2560 = vmatpush1.msra.mxu0 0.0
        %2561 = vmatprep.subr.mxu0 0.0
        %2562 = vmatpush1.msra.mxu0 0.0
        %2563 = vmatprep.subr.mxu0 0.0
        %2564 = vmatpush1.msra.mxu0 0.0
        %2565 = vmatprep.subr.mxu0 0.0
        %2566 = vmatpush1.msra.mxu0 %v1251
        %2567 = vmatprep.subr.mxu0 0.0
        %2568 = vmatpush2.msra.mxu0 0.0
        %2569 = vmatprep.subr.mxu0 0.0
        %2570 = vmatpush2.msra.mxu0 0.0
        %2571 = vmatprep.subr.mxu0 0.0
        %2572 = vmatpush2.msra.mxu0 0.0
        %2573 = vmatprep.subr.mxu0 0.0
        %2574 = vmatpush2.msra.mxu0 0.0
        %2575 = vmatprep.subr.mxu0 0.0
        %2576 = vmatpush2.msra.mxu0 0.0
        %2577 = vmatprep.subr.mxu0 0.0
        %2578 = vmatpush2.msra.mxu0 0.0
        %2579 = vmatprep.subr.mxu0 0.0
        %2580 = vmatpush2.msra.mxu0 0.0
        %2581 = vmatprep.subr.mxu0 0.0
        %2582 = vmatpush2.msra.mxu0 0.0
        %2583 = vmatprep.subr.mxu0 0.0
        %2584 = vmatpush2.msra.mxu0 0.0
        %2585 = vmatprep.subr.mxu0 0.0
        %2586 = vmatpush2.msra.mxu0 0.0
        %2587 = vmatprep.subr.mxu0 0.0
        %2588 = vmatpush2.msra.mxu0 0.0
        %2589 = vmatprep.subr.mxu0 0.0
        %2590 = vmatpush2.msra.mxu0 0.0
        %2591 = vmatprep.subr.mxu0 0.0
        %2592 = vmatpush2.msra.mxu0 0.0
        %2593 = vmatprep.subr.mxu0 0.0
        %2594 = vmatpush2.msra.mxu0 0.0
        %2595 = vmatprep.subr.mxu0 0.0
        %2596 = vmatpush2.msra.mxu0 0.0
        %2597 = vmatprep.subr.mxu0 0.0
        %2598 = vmatpush2.msra.mxu0 0.0
        %2599 = vmatprep.mubr.f32.mxu0 0.0
        %2600 = vmatmul.mubr.f32.gmra.mxu0 %v2533
        %v2601 = vpop.f32.mrf.mxu0
        %v2602 = vadd.f32 0.0, %v2601
        %v2603 = vpop.f32.mrf.mxu0
        %2604 = vdwg.mxu0
        %v2606 = vsel %vm2385, %v1542, 0
        %2608 = vmatprep.subr.mxu0 0.0
        %2609 = vmatpush1.msra.mxu0 0.0
        %2610 = vmatprep.subr.mxu0 0.0
        %2611 = vmatpush1.msra.mxu0 0.0
        %2612 = vmatprep.subr.mxu0 0.0
        %2613 = vmatpush1.msra.mxu0 0.0
        %2614 = vmatprep.subr.mxu0 0.0
        %2615 = vmatpush1.msra.mxu0 0.0
        %2616 = vmatprep.subr.mxu0 0.0
        %2617 = vmatpush1.msra.mxu0 0.0
        %2618 = vmatprep.subr.mxu0 0.0
        %2619 = vmatpush1.msra.mxu0 0.0
        %2620 = vmatprep.subr.mxu0 0.0
        %2621 = vmatpush1.msra.mxu0 0.0
        %2622 = vmatprep.subr.mxu0 0.0
        %2623 = vmatpush1.msra.mxu0 0.0
        %2624 = vmatprep.subr.mxu0 0.0
        %2625 = vmatpush1.msra.mxu0 0.0
        %2626 = vmatprep.subr.mxu0 0.0
        %2627 = vmatpush1.msra.mxu0 0.0
        %2628 = vmatprep.subr.mxu0 0.0
        %2629 = vmatpush1.msra.mxu0 0.0
        %2630 = vmatprep.subr.mxu0 0.0
        %2631 = vmatpush1.msra.mxu0 0.0
        %2632 = vmatprep.subr.mxu0 0.0
        %2633 = vmatpush1.msra.mxu0 0.0
        %2634 = vmatprep.subr.mxu0 0.0
        %2635 = vmatpush1.msra.mxu0 0.0
        %2636 = vmatprep.subr.mxu0 0.0
        %2637 = vmatpush1.msra.mxu0 0.0
        %2638 = vmatprep.subr.mxu0 0.0
        %2639 = vmatpush1.msra.mxu0 %v1252
        %2640 = vmatprep.subr.mxu0 0.0
        %2641 = vmatpush2.msra.mxu0 0.0
        %2642 = vmatprep.subr.mxu0 0.0
        %2643 = vmatpush2.msra.mxu0 0.0
        %2644 = vmatprep.subr.mxu0 0.0
        %2645 = vmatpush2.msra.mxu0 0.0
        %2646 = vmatprep.subr.mxu0 0.0
        %2647 = vmatpush2.msra.mxu0 0.0
        %2648 = vmatprep.subr.mxu0 0.0
        %2649 = vmatpush2.msra.mxu0 0.0
        %2650 = vmatprep.subr.mxu0 0.0
        %2651 = vmatpush2.msra.mxu0 0.0
        %2652 = vmatprep.subr.mxu0 0.0
        %2653 = vmatpush2.msra.mxu0 0.0
        %2654 = vmatprep.subr.mxu0 0.0
        %2655 = vmatpush2.msra.mxu0 0.0
        %2656 = vmatprep.subr.mxu0 0.0
        %2657 = vmatpush2.msra.mxu0 0.0
        %2658 = vmatprep.subr.mxu0 0.0
        %2659 = vmatpush2.msra.mxu0 0.0
        %2660 = vmatprep.subr.mxu0 0.0
        %2661 = vmatpush2.msra.mxu0 0.0
        %2662 = vmatprep.subr.mxu0 0.0
        %2663 = vmatpush2.msra.mxu0 0.0
        %2664 = vmatprep.subr.mxu0 0.0
        %2665 = vmatpush2.msra.mxu0 0.0
        %2666 = vmatprep.subr.mxu0 0.0
        %2667 = vmatpush2.msra.mxu0 0.0
        %2668 = vmatprep.subr.mxu0 0.0
        %2669 = vmatpush2.msra.mxu0 0.0
        %2670 = vmatprep.subr.mxu0 0.0
        %2671 = vmatpush2.msra.mxu0 0.0
        %2672 = vmatprep.mubr.f32.mxu0 0.0
        %2673 = vmatmul.mubr.f32.gmra.mxu0 %v2606
        %v2674 = vpop.f32.mrf.mxu0
        %v2675 = vadd.f32 0.0, %v2674
        %v2676 = vpop.f32.mrf.mxu0
        %2677 = vdwg.mxu0
        %v2679 = vsel %vm2385, %v1612, 0
        %2681 = vmatprep.subr.mxu0 0.0
        %2682 = vmatpush1.msra.mxu0 0.0
        %2683 = vmatprep.subr.mxu0 0.0
        %2684 = vmatpush1.msra.mxu0 0.0
        %2685 = vmatprep.subr.mxu0 0.0
        %2686 = vmatpush1.msra.mxu0 0.0
        %2687 = vmatprep.subr.mxu0 0.0
        %2688 = vmatpush1.msra.mxu0 0.0
        %2689 = vmatprep.subr.mxu0 0.0
        %2690 = vmatpush1.msra.mxu0 0.0
        %2691 = vmatprep.subr.mxu0 0.0
        %2692 = vmatpush1.msra.mxu0 0.0
        %2693 = vmatprep.subr.mxu0 0.0
        %2694 = vmatpush1.msra.mxu0 0.0
        %2695 = vmatprep.subr.mxu0 0.0
        %2696 = vmatpush1.msra.mxu0 0.0
        %2697 = vmatprep.subr.mxu0 0.0
        %2698 = vmatpush1.msra.mxu0 0.0
        %2699 = vmatprep.subr.mxu0 0.0
        %2700 = vmatpush1.msra.mxu0 0.0
        %2701 = vmatprep.subr.mxu0 0.0
        %2702 = vmatpush1.msra.mxu0 0.0
        %2703 = vmatprep.subr.mxu0 0.0
        %2704 = vmatpush1.msra.mxu0 0.0
        %2705 = vmatprep.subr.mxu0 0.0
        %2706 = vmatpush1.msra.mxu0 0.0
        %2707 = vmatprep.subr.mxu0 0.0
        %2708 = vmatpush1.msra.mxu0 0.0
        %2709 = vmatprep.subr.mxu0 0.0
        %2710 = vmatpush1.msra.mxu0 0.0
        %2711 = vmatprep.subr.mxu0 0.0
        %2712 = vmatpush1.msra.mxu0 %v1253
        %2713 = vmatprep.subr.mxu0 0.0
        %2714 = vmatpush2.msra.mxu0 0.0
        %2715 = vmatprep.subr.mxu0 0.0
        %2716 = vmatpush2.msra.mxu0 0.0
        %2717 = vmatprep.subr.mxu0 0.0
        %2718 = vmatpush2.msra.mxu0 0.0
        %2719 = vmatprep.subr.mxu0 0.0
        %2720 = vmatpush2.msra.mxu0 0.0
        %2721 = vmatprep.subr.mxu0 0.0
        %2722 = vmatpush2.msra.mxu0 0.0
        %2723 = vmatprep.subr.mxu0 0.0
        %2724 = vmatpush2.msra.mxu0 0.0
        %2725 = vmatprep.subr.mxu0 0.0
        %2726 = vmatpush2.msra.mxu0 0.0
        %2727 = vmatprep.subr.mxu0 0.0
        %2728 = vmatpush2.msra.mxu0 0.0
        %2729 = vmatprep.subr.mxu0 0.0
        %2730 = vmatpush2.msra.mxu0 0.0
        %2731 = vmatprep.subr.mxu0 0.0
        %2732 = vmatpush2.msra.mxu0 0.0
        %2733 = vmatprep.subr.mxu0 0.0
        %2734 = vmatpush2.msra.mxu0 0.0
        %2735 = vmatprep.subr.mxu0 0.0
        %2736 = vmatpush2.msra.mxu0 0.0
        %2737 = vmatprep.subr.mxu0 0.0
        %2738 = vmatpush2.msra.mxu0 0.0
        %2739 = vmatprep.subr.mxu0 0.0
        %2740 = vmatpush2.msra.mxu0 0.0
        %2741 = vmatprep.subr.mxu0 0.0
        %2742 = vmatpush2.msra.mxu0 0.0
        %2743 = vmatprep.subr.mxu0 0.0
        %2744 = vmatpush2.msra.mxu0 0.0
        %2745 = vmatprep.mubr.f32.mxu0 0.0
        %2746 = vmatmul.mubr.f32.gmra.mxu0 %v2679
        %v2747 = vpop.f32.mrf.mxu0
        %v2748 = vadd.f32 0.0, %v2747
        %v2749 = vpop.f32.mrf.mxu0
        %2750 = vdwg.mxu0
        %v2752 = vsel %vm2385, %v1682, 0
        %2754 = vmatprep.subr.mxu0 0.0
        %2755 = vmatpush1.msra.mxu0 0.0
        %2756 = vmatprep.subr.mxu0 0.0
        %2757 = vmatpush1.msra.mxu0 0.0
        %2758 = vmatprep.subr.mxu0 0.0
        %2759 = vmatpush1.msra.mxu0 0.0
        %2760 = vmatprep.subr.mxu0 0.0
        %2761 = vmatpush1.msra.mxu0 0.0
        %2762 = vmatprep.subr.mxu0 0.0
        %2763 = vmatpush1.msra.mxu0 0.0
        %2764 = vmatprep.subr.mxu0 0.0
        %2765 = vmatpush1.msra.mxu0 0.0
        %2766 = vmatprep.subr.mxu0 0.0
        %2767 = vmatpush1.msra.mxu0 0.0
        %2768 = vmatprep.subr.mxu0 0.0
        %2769 = vmatpush1.msra.mxu0 0.0
        %2770 = vmatprep.subr.mxu0 0.0
        %2771 = vmatpush1.msra.mxu0 0.0
        %2772 = vmatprep.subr.mxu0 0.0
        %2773 = vmatpush1.msra.mxu0 0.0
        %2774 = vmatprep.subr.mxu0 0.0
        %2775 = vmatpush1.msra.mxu0 0.0
        %2776 = vmatprep.subr.mxu0 0.0
        %2777 = vmatpush1.msra.mxu0 0.0
        %2778 = vmatprep.subr.mxu0 0.0
        %2779 = vmatpush1.msra.mxu0 0.0
        %2780 = vmatprep.subr.mxu0 0.0
        %2781 = vmatpush1.msra.mxu0 0.0
        %2782 = vmatprep.subr.mxu0 0.0
        %2783 = vmatpush1.msra.mxu0 0.0
        %2784 = vmatprep.subr.mxu0 0.0
        %2785 = vmatpush1.msra.mxu0 %v1254
        %2786 = vmatprep.subr.mxu0 0.0
        %2787 = vmatpush2.msra.mxu0 0.0
        %2788 = vmatprep.subr.mxu0 0.0
        %2789 = vmatpush2.msra.mxu0 0.0
        %2790 = vmatprep.subr.mxu0 0.0
        %2791 = vmatpush2.msra.mxu0 0.0
        %2792 = vmatprep.subr.mxu0 0.0
        %2793 = vmatpush2.msra.mxu0 0.0
        %2794 = vmatprep.subr.mxu0 0.0
        %2795 = vmatpush2.msra.mxu0 0.0
        %2796 = vmatprep.subr.mxu0 0.0
        %2797 = vmatpush2.msra.mxu0 0.0
        %2798 = vmatprep.subr.mxu0 0.0
        %2799 = vmatpush2.msra.mxu0 0.0
        %2800 = vmatprep.subr.mxu0 0.0
        %2801 = vmatpush2.msra.mxu0 0.0
        %2802 = vmatprep.subr.mxu0 0.0
        %2803 = vmatpush2.msra.mxu0 0.0
        %2804 = vmatprep.subr.mxu0 0.0
        %2805 = vmatpush2.msra.mxu0 0.0
        %2806 = vmatprep.subr.mxu0 0.0
        %2807 = vmatpush2.msra.mxu0 0.0
        %2808 = vmatprep.subr.mxu0 0.0
        %2809 = vmatpush2.msra.mxu0 0.0
        %2810 = vmatprep.subr.mxu0 0.0
        %2811 = vmatpush2.msra.mxu0 0.0
        %2812 = vmatprep.subr.mxu0 0.0
        %2813 = vmatpush2.msra.mxu0 0.0
        %2814 = vmatprep.subr.mxu0 0.0
        %2815 = vmatpush2.msra.mxu0 0.0
        %2816 = vmatprep.subr.mxu0 0.0
        %2817 = vmatpush2.msra.mxu0 0.0
        %2818 = vmatprep.mubr.f32.mxu0 0.0
        %2819 = vmatmul.mubr.f32.gmra.mxu0 %v2752
        %v2820 = vpop.f32.mrf.mxu0
        %v2821 = vadd.f32 0.0, %v2820
        %v2822 = vpop.f32.mrf.mxu0
        %2823 = vdwg.mxu0
        %v2825 = vsel %vm2385, %v1752, 0
        %2827 = vmatprep.subr.mxu0 0.0
        %2828 = vmatpush1.msra.mxu0 0.0
        %2829 = vmatprep.subr.mxu0 0.0
        %2830 = vmatpush1.msra.mxu0 0.0
        %2831 = vmatprep.subr.mxu0 0.0
        %2832 = vmatpush1.msra.mxu0 0.0
        %2833 = vmatprep.subr.mxu0 0.0
        %2834 = vmatpush1.msra.mxu0 0.0
        %2835 = vmatprep.subr.mxu0 0.0
        %2836 = vmatpush1.msra.mxu0 0.0
        %2837 = vmatprep.subr.mxu0 0.0
        %2838 = vmatpush1.msra.mxu0 0.0
        %2839 = vmatprep.subr.mxu0 0.0
        %2840 = vmatpush1.msra.mxu0 0.0
        %2841 = vmatprep.subr.mxu0 0.0
        %2842 = vmatpush1.msra.mxu0 0.0
        %2843 = vmatprep.subr.mxu0 0.0
        %2844 = vmatpush1.msra.mxu0 0.0
        %2845 = vmatprep.subr.mxu0 0.0
        %2846 = vmatpush1.msra.mxu0 0.0
        %2847 = vmatprep.subr.mxu0 0.0
        %2848 = vmatpush1.msra.mxu0 0.0
        %2849 = vmatprep.subr.mxu0 0.0
        %2850 = vmatpush1.msra.mxu0 0.0
        %2851 = vmatprep.subr.mxu0 0.0
        %2852 = vmatpush1.msra.mxu0 0.0
        %2853 = vmatprep.subr.mxu0 0.0
        %2854 = vmatpush1.msra.mxu0 0.0
        %2855 = vmatprep.subr.mxu0 0.0
        %2856 = vmatpush1.msra.mxu0 0.0
        %2857 = vmatprep.subr.mxu0 0.0
        %2858 = vmatpush1.msra.mxu0 %v1255
        %2859 = vmatprep.subr.mxu0 0.0
        %2860 = vmatpush2.msra.mxu0 0.0
        %2861 = vmatprep.subr.mxu0 0.0
        %2862 = vmatpush2.msra.mxu0 0.0
        %2863 = vmatprep.subr.mxu0 0.0
        %2864 = vmatpush2.msra.mxu0 0.0
        %2865 = vmatprep.subr.mxu0 0.0
        %2866 = vmatpush2.msra.mxu0 0.0
        %2867 = vmatprep.subr.mxu0 0.0
        %2868 = vmatpush2.msra.mxu0 0.0
        %2869 = vmatprep.subr.mxu0 0.0
        %2870 = vmatpush2.msra.mxu0 0.0
        %2871 = vmatprep.subr.mxu0 0.0
        %2872 = vmatpush2.msra.mxu0 0.0
        %2873 = vmatprep.subr.mxu0 0.0
        %2874 = vmatpush2.msra.mxu0 0.0
        %2875 = vmatprep.subr.mxu0 0.0
        %2876 = vmatpush2.msra.mxu0 0.0
        %2877 = vmatprep.subr.mxu0 0.0
        %2878 = vmatpush2.msra.mxu0 0.0
        %2879 = vmatprep.subr.mxu0 0.0
        %2880 = vmatpush2.msra.mxu0 0.0
        %2881 = vmatprep.subr.mxu0 0.0
        %2882 = vmatpush2.msra.mxu0 0.0
        %2883 = vmatprep.subr.mxu0 0.0
        %2884 = vmatpush2.msra.mxu0 0.0
        %2885 = vmatprep.subr.mxu0 0.0
        %2886 = vmatpush2.msra.mxu0 0.0
        %2887 = vmatprep.subr.mxu0 0.0
        %2888 = vmatpush2.msra.mxu0 0.0
        %2889 = vmatprep.subr.mxu0 0.0
        %2890 = vmatpush2.msra.mxu0 0.0
        %2891 = vmatprep.mubr.f32.mxu0 0.0
        %2892 = vmatmul.mubr.f32.gmra.mxu0 %v2825
        %v2893 = vpop.f32.mrf.mxu0
        %v2894 = vadd.f32 0.0, %v2893
        %v2895 = vpop.f32.mrf.mxu0
        %2896 = vdwg.mxu0
        %v2898 = vsel %vm2385, %v1822, 0
        %2900 = vmatprep.subr.mxu0 0.0
        %2901 = vmatpush1.msra.mxu0 0.0
        %2902 = vmatprep.subr.mxu0 0.0
        %2903 = vmatpush1.msra.mxu0 0.0
        %2904 = vmatprep.subr.mxu0 0.0
        %2905 = vmatpush1.msra.mxu0 0.0
        %2906 = vmatprep.subr.mxu0 0.0
        %2907 = vmatpush1.msra.mxu0 0.0
        %2908 = vmatprep.subr.mxu0 0.0
        %2909 = vmatpush1.msra.mxu0 0.0
        %2910 = vmatprep.subr.mxu0 0.0
        %2911 = vmatpush1.msra.mxu0 0.0
        %2912 = vmatprep.subr.mxu0 0.0
        %2913 = vmatpush1.msra.mxu0 0.0
        %2914 = vmatprep.subr.mxu0 0.0
        %2915 = vmatpush1.msra.mxu0 0.0
        %2916 = vmatprep.subr.mxu0 0.0
        %2917 = vmatpush1.msra.mxu0 0.0
        %2918 = vmatprep.subr.mxu0 0.0
        %2919 = vmatpush1.msra.mxu0 0.0
        %2920 = vmatprep.subr.mxu0 0.0
        %2921 = vmatpush1.msra.mxu0 0.0
        %2922 = vmatprep.subr.mxu0 0.0
        %2923 = vmatpush1.msra.mxu0 0.0
        %2924 = vmatprep.subr.mxu0 0.0
        %2925 = vmatpush1.msra.mxu0 0.0
        %2926 = vmatprep.subr.mxu0 0.0
        %2927 = vmatpush1.msra.mxu0 0.0
        %2928 = vmatprep.subr.mxu0 0.0
        %2929 = vmatpush1.msra.mxu0 0.0
        %2930 = vmatprep.subr.mxu0 0.0
        %2931 = vmatpush1.msra.mxu0 %v1256
        %2932 = vmatprep.subr.mxu0 0.0
        %2933 = vmatpush2.msra.mxu0 0.0
        %2934 = vmatprep.subr.mxu0 0.0
        %2935 = vmatpush2.msra.mxu0 0.0
        %2936 = vmatprep.subr.mxu0 0.0
        %2937 = vmatpush2.msra.mxu0 0.0
        %2938 = vmatprep.subr.mxu0 0.0
        %2939 = vmatpush2.msra.mxu0 0.0
        %2940 = vmatprep.subr.mxu0 0.0
        %2941 = vmatpush2.msra.mxu0 0.0
        %2942 = vmatprep.subr.mxu0 0.0
        %2943 = vmatpush2.msra.mxu0 0.0
        %2944 = vmatprep.subr.mxu0 0.0
        %2945 = vmatpush2.msra.mxu0 0.0
        %2946 = vmatprep.subr.mxu0 0.0
        %2947 = vmatpush2.msra.mxu0 0.0
        %2948 = vmatprep.subr.mxu0 0.0
        %2949 = vmatpush2.msra.mxu0 0.0
        %2950 = vmatprep.subr.mxu0 0.0
        %2951 = vmatpush2.msra.mxu0 0.0
        %2952 = vmatprep.subr.mxu0 0.0
        %2953 = vmatpush2.msra.mxu0 0.0
        %2954 = vmatprep.subr.mxu0 0.0
        %2955 = vmatpush2.msra.mxu0 0.0
        %2956 = vmatprep.subr.mxu0 0.0
        %2957 = vmatpush2.msra.mxu0 0.0
        %2958 = vmatprep.subr.mxu0 0.0
        %2959 = vmatpush2.msra.mxu0 0.0
        %2960 = vmatprep.subr.mxu0 0.0
        %2961 = vmatpush2.msra.mxu0 0.0
        %2962 = vmatprep.subr.mxu0 0.0
        %2963 = vmatpush2.msra.mxu0 0.0
        %2964 = vmatprep.mubr.f32.mxu0 0.0
        %2965 = vmatmul.mubr.f32.gmra.mxu0 %v2898
        %v2966 = vpop.f32.mrf.mxu0
        %v2967 = vadd.f32 0.0, %v2966
        %v2968 = vpop.f32.mrf.mxu0
        %2969 = vdwg.mxu0
        %v2971 = vsel %vm2385, %v1892, 0
        %2973 = vmatprep.subr.mxu0 0.0
        %2974 = vmatpush1.msra.mxu0 0.0
        %2975 = vmatprep.subr.mxu0 0.0
        %2976 = vmatpush1.msra.mxu0 0.0
        %2977 = vmatprep.subr.mxu0 0.0
        %2978 = vmatpush1.msra.mxu0 0.0
        %2979 = vmatprep.subr.mxu0 0.0
        %2980 = vmatpush1.msra.mxu0 0.0
        %2981 = vmatprep.subr.mxu0 0.0
        %2982 = vmatpush1.msra.mxu0 0.0
        %2983 = vmatprep.subr.mxu0 0.0
        %2984 = vmatpush1.msra.mxu0 0.0
        %2985 = vmatprep.subr.mxu0 0.0
        %2986 = vmatpush1.msra.mxu0 0.0
        %2987 = vmatprep.subr.mxu0 0.0
        %2988 = vmatpush1.msra.mxu0 0.0
        %2989 = vmatprep.subr.mxu0 0.0
        %2990 = vmatpush1.msra.mxu0 0.0
        %2991 = vmatprep.subr.mxu0 0.0
        %2992 = vmatpush1.msra.mxu0 0.0
        %2993 = vmatprep.subr.mxu0 0.0
        %2994 = vmatpush1.msra.mxu0 0.0
        %2995 = vmatprep.subr.mxu0 0.0
        %2996 = vmatpush1.msra.mxu0 0.0
        %2997 = vmatprep.subr.mxu0 0.0
        %2998 = vmatpush1.msra.mxu0 0.0
        %2999 = vmatprep.subr.mxu0 0.0
        %3000 = vmatpush1.msra.mxu0 0.0
        %3001 = vmatprep.subr.mxu0 0.0
        %3002 = vmatpush1.msra.mxu0 0.0
        %3003 = vmatprep.subr.mxu0 0.0
        %3004 = vmatpush1.msra.mxu0 %v1257
        %3005 = vmatprep.subr.mxu0 0.0
        %3006 = vmatpush2.msra.mxu0 0.0
        %3007 = vmatprep.subr.mxu0 0.0
        %3008 = vmatpush2.msra.mxu0 0.0
        %3009 = vmatprep.subr.mxu0 0.0
        %3010 = vmatpush2.msra.mxu0 0.0
        %3011 = vmatprep.subr.mxu0 0.0
        %3012 = vmatpush2.msra.mxu0 0.0
        %3013 = vmatprep.subr.mxu0 0.0
        %3014 = vmatpush2.msra.mxu0 0.0
        %3015 = vmatprep.subr.mxu0 0.0
        %3016 = vmatpush2.msra.mxu0 0.0
        %3017 = vmatprep.subr.mxu0 0.0
        %3018 = vmatpush2.msra.mxu0 0.0
        %3019 = vmatprep.subr.mxu0 0.0
        %3020 = vmatpush2.msra.mxu0 0.0
        %3021 = vmatprep.subr.mxu0 0.0
        %3022 = vmatpush2.msra.mxu0 0.0
        %3023 = vmatprep.subr.mxu0 0.0
        %3024 = vmatpush2.msra.mxu0 0.0
        %3025 = vmatprep.subr.mxu0 0.0
        %3026 = vmatpush2.msra.mxu0 0.0
        %3027 = vmatprep.subr.mxu0 0.0
        %3028 = vmatpush2.msra.mxu0 0.0
        %3029 = vmatprep.subr.mxu0 0.0
        %3030 = vmatpush2.msra.mxu0 0.0
        %3031 = vmatprep.subr.mxu0 0.0
        %3032 = vmatpush2.msra.mxu0 0.0
        %3033 = vmatprep.subr.mxu0 0.0
        %3034 = vmatpush2.msra.mxu0 0.0
        %3035 = vmatprep.subr.mxu0 0.0
        %3036 = vmatpush2.msra.mxu0 0.0
        %3037 = vmatprep.mubr.f32.mxu0 0.0
        %3038 = vmatmul.mubr.f32.gmra.mxu0 %v2971
        %v3039 = vpop.f32.mrf.mxu0
        %v3040 = vadd.f32 0.0, %v3039
        %v3041 = vpop.f32.mrf.mxu0
        %3042 = vdwg.mxu0
        %v3044 = vsel %vm2385, %v1962, 0
        %3046 = vmatprep.subr.mxu0 0.0
        %3047 = vmatpush1.msra.mxu0 0.0
        %3048 = vmatprep.subr.mxu0 0.0
        %3049 = vmatpush1.msra.mxu0 0.0
        %3050 = vmatprep.subr.mxu0 0.0
        %3051 = vmatpush1.msra.mxu0 0.0
        %3052 = vmatprep.subr.mxu0 0.0
        %3053 = vmatpush1.msra.mxu0 0.0
        %3054 = vmatprep.subr.mxu0 0.0
        %3055 = vmatpush1.msra.mxu0 0.0
        %3056 = vmatprep.subr.mxu0 0.0
        %3057 = vmatpush1.msra.mxu0 0.0
        %3058 = vmatprep.subr.mxu0 0.0
        %3059 = vmatpush1.msra.mxu0 0.0
        %3060 = vmatprep.subr.mxu0 0.0
        %3061 = vmatpush1.msra.mxu0 0.0
        %3062 = vmatprep.subr.mxu0 0.0
        %3063 = vmatpush1.msra.mxu0 0.0
        %3064 = vmatprep.subr.mxu0 0.0
        %3065 = vmatpush1.msra.mxu0 0.0
        %3066 = vmatprep.subr.mxu0 0.0
        %3067 = vmatpush1.msra.mxu0 0.0
        %3068 = vmatprep.subr.mxu0 0.0
        %3069 = vmatpush1.msra.mxu0 0.0
        %3070 = vmatprep.subr.mxu0 0.0
        %3071 = vmatpush1.msra.mxu0 0.0
        %3072 = vmatprep.subr.mxu0 0.0
        %3073 = vmatpush1.msra.mxu0 0.0
        %3074 = vmatprep.subr.mxu0 0.0
        %3075 = vmatpush1.msra.mxu0 0.0
        %3076 = vmatprep.subr.mxu0 0.0
        %3077 = vmatpush1.msra.mxu0 %v1258
        %3078 = vmatprep.subr.mxu0 0.0
        %3079 = vmatpush2.msra.mxu0 0.0
        %3080 = vmatprep.subr.mxu0 0.0
        %3081 = vmatpush2.msra.mxu0 0.0
        %3082 = vmatprep.subr.mxu0 0.0
        %3083 = vmatpush2.msra.mxu0 0.0
        %3084 = vmatprep.subr.mxu0 0.0
        %3085 = vmatpush2.msra.mxu0 0.0
        %3086 = vmatprep.subr.mxu0 0.0
        %3087 = vmatpush2.msra.mxu0 0.0
        %3088 = vmatprep.subr.mxu0 0.0
        %3089 = vmatpush2.msra.mxu0 0.0
        %3090 = vmatprep.subr.mxu0 0.0
        %3091 = vmatpush2.msra.mxu0 0.0
        %3092 = vmatprep.subr.mxu0 0.0
        %3093 = vmatpush2.msra.mxu0 0.0
        %3094 = vmatprep.subr.mxu0 0.0
        %3095 = vmatpush2.msra.mxu0 0.0
        %3096 = vmatprep.subr.mxu0 0.0
        %3097 = vmatpush2.msra.mxu0 0.0
        %3098 = vmatprep.subr.mxu0 0.0
        %3099 = vmatpush2.msra.mxu0 0.0
        %3100 = vmatprep.subr.mxu0 0.0
        %3101 = vmatpush2.msra.mxu0 0.0
        %3102 = vmatprep.subr.mxu0 0.0
        %3103 = vmatpush2.msra.mxu0 0.0
        %3104 = vmatprep.subr.mxu0 0.0
        %3105 = vmatpush2.msra.mxu0 0.0
        %3106 = vmatprep.subr.mxu0 0.0
        %3107 = vmatpush2.msra.mxu0 0.0
        %3108 = vmatprep.subr.mxu0 0.0
        %3109 = vmatpush2.msra.mxu0 0.0
        %3110 = vmatprep.mubr.f32.mxu0 0.0
        %3111 = vmatmul.mubr.f32.gmra.mxu0 %v3044
        %v3112 = vpop.f32.mrf.mxu0
        %v3113 = vadd.f32 0.0, %v3112
        %v3114 = vpop.f32.mrf.mxu0
        %3115 = vdwg.mxu0
        %v3117 = vsel %vm2385, %v2032, 0
        %3119 = vmatprep.subr.mxu0 0.0
        %3120 = vmatpush1.msra.mxu0 0.0
        %3121 = vmatprep.subr.mxu0 0.0
        %3122 = vmatpush1.msra.mxu0 0.0
        %3123 = vmatprep.subr.mxu0 0.0
        %3124 = vmatpush1.msra.mxu0 0.0
        %3125 = vmatprep.subr.mxu0 0.0
        %3126 = vmatpush1.msra.mxu0 0.0
        %3127 = vmatprep.subr.mxu0 0.0
        %3128 = vmatpush1.msra.mxu0 0.0
        %3129 = vmatprep.subr.mxu0 0.0
        %3130 = vmatpush1.msra.mxu0 0.0
        %3131 = vmatprep.subr.mxu0 0.0
        %3132 = vmatpush1.msra.mxu0 0.0
        %3133 = vmatprep.subr.mxu0 0.0
        %3134 = vmatpush1.msra.mxu0 0.0
        %3135 = vmatprep.subr.mxu0 0.0
        %3136 = vmatpush1.msra.mxu0 0.0
        %3137 = vmatprep.subr.mxu0 0.0
        %3138 = vmatpush1.msra.mxu0 0.0
        %3139 = vmatprep.subr.mxu0 0.0
        %3140 = vmatpush1.msra.mxu0 0.0
        %3141 = vmatprep.subr.mxu0 0.0
        %3142 = vmatpush1.msra.mxu0 0.0
        %3143 = vmatprep.subr.mxu0 0.0
        %3144 = vmatpush1.msra.mxu0 0.0
        %3145 = vmatprep.subr.mxu0 0.0
        %3146 = vmatpush1.msra.mxu0 0.0
        %3147 = vmatprep.subr.mxu0 0.0
        %3148 = vmatpush1.msra.mxu0 0.0
        %3149 = vmatprep.subr.mxu0 0.0
        %3150 = vmatpush1.msra.mxu0 %v1259
        %3151 = vmatprep.subr.mxu0 0.0
        %3152 = vmatpush2.msra.mxu0 0.0
        %3153 = vmatprep.subr.mxu0 0.0
        %3154 = vmatpush2.msra.mxu0 0.0
        %3155 = vmatprep.subr.mxu0 0.0
        %3156 = vmatpush2.msra.mxu0 0.0
        %3157 = vmatprep.subr.mxu0 0.0
        %3158 = vmatpush2.msra.mxu0 0.0
        %3159 = vmatprep.subr.mxu0 0.0
        %3160 = vmatpush2.msra.mxu0 0.0
        %3161 = vmatprep.subr.mxu0 0.0
        %3162 = vmatpush2.msra.mxu0 0.0
        %3163 = vmatprep.subr.mxu0 0.0
        %3164 = vmatpush2.msra.mxu0 0.0
        %3165 = vmatprep.subr.mxu0 0.0
        %3166 = vmatpush2.msra.mxu0 0.0
        %3167 = vmatprep.subr.mxu0 0.0
        %3168 = vmatpush2.msra.mxu0 0.0
        %3169 = vmatprep.subr.mxu0 0.0
        %3170 = vmatpush2.msra.mxu0 0.0
        %3171 = vmatprep.subr.mxu0 0.0
        %3172 = vmatpush2.msra.mxu0 0.0
        %3173 = vmatprep.subr.mxu0 0.0
        %3174 = vmatpush2.msra.mxu0 0.0
        %3175 = vmatprep.subr.mxu0 0.0
        %3176 = vmatpush2.msra.mxu0 0.0
        %3177 = vmatprep.subr.mxu0 0.0
        %3178 = vmatpush2.msra.mxu0 0.0
        %3179 = vmatprep.subr.mxu0 0.0
        %3180 = vmatpush2.msra.mxu0 0.0
        %3181 = vmatprep.subr.mxu0 0.0
        %3182 = vmatpush2.msra.mxu0 0.0
        %3183 = vmatprep.mubr.f32.mxu0 0.0
        %3184 = vmatmul.mubr.f32.gmra.mxu0 %v3117
        %v3185 = vpop.f32.mrf.mxu0
        %v3186 = vadd.f32 0.0, %v3185
        %v3187 = vpop.f32.mrf.mxu0
        %3188 = vdwg.mxu0
        %v3190 = vsel %vm2385, %v2102, 0
        %3192 = vmatprep.subr.mxu0 0.0
        %3193 = vmatpush1.msra.mxu0 0.0
        %3194 = vmatprep.subr.mxu0 0.0
        %3195 = vmatpush1.msra.mxu0 0.0
        %3196 = vmatprep.subr.mxu0 0.0
        %3197 = vmatpush1.msra.mxu0 0.0
        %3198 = vmatprep.subr.mxu0 0.0
        %3199 = vmatpush1.msra.mxu0 0.0
        %3200 = vmatprep.subr.mxu0 0.0
        %3201 = vmatpush1.msra.mxu0 0.0
        %3202 = vmatprep.subr.mxu0 0.0
        %3203 = vmatpush1.msra.mxu0 0.0
        %3204 = vmatprep.subr.mxu0 0.0
        %3205 = vmatpush1.msra.mxu0 0.0
        %3206 = vmatprep.subr.mxu0 0.0
        %3207 = vmatpush1.msra.mxu0 0.0
        %3208 = vmatprep.subr.mxu0 0.0
        %3209 = vmatpush1.msra.mxu0 0.0
        %3210 = vmatprep.subr.mxu0 0.0
        %3211 = vmatpush1.msra.mxu0 0.0
        %3212 = vmatprep.subr.mxu0 0.0
        %3213 = vmatpush1.msra.mxu0 0.0
        %3214 = vmatprep.subr.mxu0 0.0
        %3215 = vmatpush1.msra.mxu0 0.0
        %3216 = vmatprep.subr.mxu0 0.0
        %3217 = vmatpush1.msra.mxu0 0.0
        %3218 = vmatprep.subr.mxu0 0.0
        %3219 = vmatpush1.msra.mxu0 0.0
        %3220 = vmatprep.subr.mxu0 0.0
        %3221 = vmatpush1.msra.mxu0 0.0
        %3222 = vmatprep.subr.mxu0 0.0
        %3223 = vmatpush1.msra.mxu0 %v1260
        %3224 = vmatprep.subr.mxu0 0.0
        %3225 = vmatpush2.msra.mxu0 0.0
        %3226 = vmatprep.subr.mxu0 0.0
        %3227 = vmatpush2.msra.mxu0 0.0
        %3228 = vmatprep.subr.mxu0 0.0
        %3229 = vmatpush2.msra.mxu0 0.0
        %3230 = vmatprep.subr.mxu0 0.0
        %3231 = vmatpush2.msra.mxu0 0.0
        %3232 = vmatprep.subr.mxu0 0.0
        %3233 = vmatpush2.msra.mxu0 0.0
        %3234 = vmatprep.subr.mxu0 0.0
        %3235 = vmatpush2.msra.mxu0 0.0
        %3236 = vmatprep.subr.mxu0 0.0
        %3237 = vmatpush2.msra.mxu0 0.0
        %3238 = vmatprep.subr.mxu0 0.0
        %3239 = vmatpush2.msra.mxu0 0.0
        %3240 = vmatprep.subr.mxu0 0.0
        %3241 = vmatpush2.msra.mxu0 0.0
        %3242 = vmatprep.subr.mxu0 0.0
        %3243 = vmatpush2.msra.mxu0 0.0
        %3244 = vmatprep.subr.mxu0 0.0
        %3245 = vmatpush2.msra.mxu0 0.0
        %3246 = vmatprep.subr.mxu0 0.0
        %3247 = vmatpush2.msra.mxu0 0.0
        %3248 = vmatprep.subr.mxu0 0.0
        %3249 = vmatpush2.msra.mxu0 0.0
        %3250 = vmatprep.subr.mxu0 0.0
        %3251 = vmatpush2.msra.mxu0 0.0
        %3252 = vmatprep.subr.mxu0 0.0
        %3253 = vmatpush2.msra.mxu0 0.0
        %3254 = vmatprep.subr.mxu0 0.0
        %3255 = vmatpush2.msra.mxu0 0.0
        %3256 = vmatprep.mubr.f32.mxu0 0.0
        %3257 = vmatmul.mubr.f32.gmra.mxu0 %v3190
        %v3258 = vpop.f32.mrf.mxu0
        %v3259 = vadd.f32 0.0, %v3258
        %v3260 = vpop.f32.mrf.mxu0
        %3261 = vdwg.mxu0
        %v3263 = vsel %vm2385, %v2172, 0
        %3265 = vmatprep.subr.mxu0 0.0
        %3266 = vmatpush1.msra.mxu0 0.0
        %3267 = vmatprep.subr.mxu0 0.0
        %3268 = vmatpush1.msra.mxu0 0.0
        %3269 = vmatprep.subr.mxu0 0.0
        %3270 = vmatpush1.msra.mxu0 0.0
        %3271 = vmatprep.subr.mxu0 0.0
        %3272 = vmatpush1.msra.mxu0 0.0
        %3273 = vmatprep.subr.mxu0 0.0
        %3274 = vmatpush1.msra.mxu0 0.0
        %3275 = vmatprep.subr.mxu0 0.0
        %3276 = vmatpush1.msra.mxu0 0.0
        %3277 = vmatprep.subr.mxu0 0.0
        %3278 = vmatpush1.msra.mxu0 0.0
        %3279 = vmatprep.subr.mxu0 0.0
        %3280 = vmatpush1.msra.mxu0 0.0
        %3281 = vmatprep.subr.mxu0 0.0
        %3282 = vmatpush1.msra.mxu0 0.0
        %3283 = vmatprep.subr.mxu0 0.0
        %3284 = vmatpush1.msra.mxu0 0.0
        %3285 = vmatprep.subr.mxu0 0.0
        %3286 = vmatpush1.msra.mxu0 0.0
        %3287 = vmatprep.subr.mxu0 0.0
        %3288 = vmatpush1.msra.mxu0 0.0
        %3289 = vmatprep.subr.mxu0 0.0
        %3290 = vmatpush1.msra.mxu0 0.0
        %3291 = vmatprep.subr.mxu0 0.0
        %3292 = vmatpush1.msra.mxu0 0.0
        %3293 = vmatprep.subr.mxu0 0.0
        %3294 = vmatpush1.msra.mxu0 0.0
        %3295 = vmatprep.subr.mxu0 0.0
        %3296 = vmatpush1.msra.mxu0 %v1261
        %3297 = vmatprep.subr.mxu0 0.0
        %3298 = vmatpush2.msra.mxu0 0.0
        %3299 = vmatprep.subr.mxu0 0.0
        %3300 = vmatpush2.msra.mxu0 0.0
        %3301 = vmatprep.subr.mxu0 0.0
        %3302 = vmatpush2.msra.mxu0 0.0
        %3303 = vmatprep.subr.mxu0 0.0
        %3304 = vmatpush2.msra.mxu0 0.0
        %3305 = vmatprep.subr.mxu0 0.0
        %3306 = vmatpush2.msra.mxu0 0.0
        %3307 = vmatprep.subr.mxu0 0.0
        %3308 = vmatpush2.msra.mxu0 0.0
        %3309 = vmatprep.subr.mxu0 0.0
        %3310 = vmatpush2.msra.mxu0 0.0
        %3311 = vmatprep.subr.mxu0 0.0
        %3312 = vmatpush2.msra.mxu0 0.0
        %3313 = vmatprep.subr.mxu0 0.0
        %3314 = vmatpush2.msra.mxu0 0.0
        %3315 = vmatprep.subr.mxu0 0.0
        %3316 = vmatpush2.msra.mxu0 0.0
        %3317 = vmatprep.subr.mxu0 0.0
        %3318 = vmatpush2.msra.mxu0 0.0
        %3319 = vmatprep.subr.mxu0 0.0
        %3320 = vmatpush2.msra.mxu0 0.0
        %3321 = vmatprep.subr.mxu0 0.0
        %3322 = vmatpush2.msra.mxu0 0.0
        %3323 = vmatprep.subr.mxu0 0.0
        %3324 = vmatpush2.msra.mxu0 0.0
        %3325 = vmatprep.subr.mxu0 0.0
        %3326 = vmatpush2.msra.mxu0 0.0
        %3327 = vmatprep.subr.mxu0 0.0
        %3328 = vmatpush2.msra.mxu0 0.0
        %3329 = vmatprep.mubr.f32.mxu0 0.0
        %3330 = vmatmul.mubr.f32.gmra.mxu0 %v3263
        %v3331 = vpop.f32.mrf.mxu0
        %v3332 = vadd.f32 0.0, %v3331
        %v3333 = vpop.f32.mrf.mxu0
        %3334 = vdwg.mxu0
        %v3336 = vsel %vm2385, %v2242, 0
        %3338 = vmatprep.subr.mxu0 0.0
        %3339 = vmatpush1.msra.mxu0 0.0
        %3340 = vmatprep.subr.mxu0 0.0
        %3341 = vmatpush1.msra.mxu0 0.0
        %3342 = vmatprep.subr.mxu0 0.0
        %3343 = vmatpush1.msra.mxu0 0.0
        %3344 = vmatprep.subr.mxu0 0.0
        %3345 = vmatpush1.msra.mxu0 0.0
        %3346 = vmatprep.subr.mxu0 0.0
        %3347 = vmatpush1.msra.mxu0 0.0
        %3348 = vmatprep.subr.mxu0 0.0
        %3349 = vmatpush1.msra.mxu0 0.0
        %3350 = vmatprep.subr.mxu0 0.0
        %3351 = vmatpush1.msra.mxu0 0.0
        %3352 = vmatprep.subr.mxu0 0.0
        %3353 = vmatpush1.msra.mxu0 0.0
        %3354 = vmatprep.subr.mxu0 0.0
        %3355 = vmatpush1.msra.mxu0 0.0
        %3356 = vmatprep.subr.mxu0 0.0
        %3357 = vmatpush1.msra.mxu0 0.0
        %3358 = vmatprep.subr.mxu0 0.0
        %3359 = vmatpush1.msra.mxu0 0.0
        %3360 = vmatprep.subr.mxu0 0.0
        %3361 = vmatpush1.msra.mxu0 0.0
        %3362 = vmatprep.subr.mxu0 0.0
        %3363 = vmatpush1.msra.mxu0 0.0
        %3364 = vmatprep.subr.mxu0 0.0
        %3365 = vmatpush1.msra.mxu0 0.0
        %3366 = vmatprep.subr.mxu0 0.0
        %3367 = vmatpush1.msra.mxu0 0.0
        %3368 = vmatprep.subr.mxu0 0.0
        %3369 = vmatpush1.msra.mxu0 %v1262
        %3370 = vmatprep.subr.mxu0 0.0
        %3371 = vmatpush2.msra.mxu0 0.0
        %3372 = vmatprep.subr.mxu0 0.0
        %3373 = vmatpush2.msra.mxu0 0.0
        %3374 = vmatprep.subr.mxu0 0.0
        %3375 = vmatpush2.msra.mxu0 0.0
        %3376 = vmatprep.subr.mxu0 0.0
        %3377 = vmatpush2.msra.mxu0 0.0
        %3378 = vmatprep.subr.mxu0 0.0
        %3379 = vmatpush2.msra.mxu0 0.0
        %3380 = vmatprep.subr.mxu0 0.0
        %3381 = vmatpush2.msra.mxu0 0.0
        %3382 = vmatprep.subr.mxu0 0.0
        %3383 = vmatpush2.msra.mxu0 0.0
        %3384 = vmatprep.subr.mxu0 0.0
        %3385 = vmatpush2.msra.mxu0 0.0
        %3386 = vmatprep.subr.mxu0 0.0
        %3387 = vmatpush2.msra.mxu0 0.0
        %3388 = vmatprep.subr.mxu0 0.0
        %3389 = vmatpush2.msra.mxu0 0.0
        %3390 = vmatprep.subr.mxu0 0.0
        %3391 = vmatpush2.msra.mxu0 0.0
        %3392 = vmatprep.subr.mxu0 0.0
        %3393 = vmatpush2.msra.mxu0 0.0
        %3394 = vmatprep.subr.mxu0 0.0
        %3395 = vmatpush2.msra.mxu0 0.0
        %3396 = vmatprep.subr.mxu0 0.0
        %3397 = vmatpush2.msra.mxu0 0.0
        %3398 = vmatprep.subr.mxu0 0.0
        %3399 = vmatpush2.msra.mxu0 0.0
        %3400 = vmatprep.subr.mxu0 0.0
        %3401 = vmatpush2.msra.mxu0 0.0
        %3402 = vmatprep.mubr.f32.mxu0 0.0
        %3403 = vmatmul.mubr.f32.gmra.mxu0 %v3336
        %v3404 = vpop.f32.mrf.mxu0
        %v3405 = vadd.f32 0.0, %v3404
        %v3406 = vpop.f32.mrf.mxu0
        %3407 = vdwg.mxu0
        %v3409 = vsel %vm2385, %v2312, 0
        %3411 = vmatprep.subr.mxu0 0.0
        %3412 = vmatpush1.msra.mxu0 0.0
        %3413 = vmatprep.subr.mxu0 0.0
        %3414 = vmatpush1.msra.mxu0 0.0
        %3415 = vmatprep.subr.mxu0 0.0
        %3416 = vmatpush1.msra.mxu0 0.0
        %3417 = vmatprep.subr.mxu0 0.0
        %3418 = vmatpush1.msra.mxu0 0.0
        %3419 = vmatprep.subr.mxu0 0.0
        %3420 = vmatpush1.msra.mxu0 0.0
        %3421 = vmatprep.subr.mxu0 0.0
        %3422 = vmatpush1.msra.mxu0 0.0
        %3423 = vmatprep.subr.mxu0 0.0
        %3424 = vmatpush1.msra.mxu0 0.0
        %3425 = vmatprep.subr.mxu0 0.0
        %3426 = vmatpush1.msra.mxu0 0.0
        %3427 = vmatprep.subr.mxu0 0.0
        %3428 = vmatpush1.msra.mxu0 0.0
        %3429 = vmatprep.subr.mxu0 0.0
        %3430 = vmatpush1.msra.mxu0 0.0
        %3431 = vmatprep.subr.mxu0 0.0
        %3432 = vmatpush1.msra.mxu0 0.0
        %3433 = vmatprep.subr.mxu0 0.0
        %3434 = vmatpush1.msra.mxu0 0.0
        %3435 = vmatprep.subr.mxu0 0.0
        %3436 = vmatpush1.msra.mxu0 0.0
        %3437 = vmatprep.subr.mxu0 0.0
        %3438 = vmatpush1.msra.mxu0 0.0
        %3439 = vmatprep.subr.mxu0 0.0
        %3440 = vmatpush1.msra.mxu0 0.0
        %3441 = vmatprep.subr.mxu0 0.0
        %3442 = vmatpush1.msra.mxu0 %v1263
        %3443 = vmatprep.subr.mxu0 0.0
        %3444 = vmatpush2.msra.mxu0 0.0
        %3445 = vmatprep.subr.mxu0 0.0
        %3446 = vmatpush2.msra.mxu0 0.0
        %3447 = vmatprep.subr.mxu0 0.0
        %3448 = vmatpush2.msra.mxu0 0.0
        %3449 = vmatprep.subr.mxu0 0.0
        %3450 = vmatpush2.msra.mxu0 0.0
        %3451 = vmatprep.subr.mxu0 0.0
        %3452 = vmatpush2.msra.mxu0 0.0
        %3453 = vmatprep.subr.mxu0 0.0
        %3454 = vmatpush2.msra.mxu0 0.0
        %3455 = vmatprep.subr.mxu0 0.0
        %3456 = vmatpush2.msra.mxu0 0.0
        %3457 = vmatprep.subr.mxu0 0.0
        %3458 = vmatpush2.msra.mxu0 0.0
        %3459 = vmatprep.subr.mxu0 0.0
        %3460 = vmatpush2.msra.mxu0 0.0
        %3461 = vmatprep.subr.mxu0 0.0
        %3462 = vmatpush2.msra.mxu0 0.0
        %3463 = vmatprep.subr.mxu0 0.0
        %3464 = vmatpush2.msra.mxu0 0.0
        %3465 = vmatprep.subr.mxu0 0.0
        %3466 = vmatpush2.msra.mxu0 0.0
        %3467 = vmatprep.subr.mxu0 0.0
        %3468 = vmatpush2.msra.mxu0 0.0
        %3469 = vmatprep.subr.mxu0 0.0
        %3470 = vmatpush2.msra.mxu0 0.0
        %3471 = vmatprep.subr.mxu0 0.0
        %3472 = vmatpush2.msra.mxu0 0.0
        %3473 = vmatprep.subr.mxu0 0.0
        %3474 = vmatpush2.msra.mxu0 0.0
        %3475 = vmatprep.mubr.f32.mxu0 0.0
        %3476 = vmatmul.mubr.f32.gmra.mxu0 %v3409
        %v3477 = vpop.f32.mrf.mxu0
        %v3478 = vadd.f32 0.0, %v3477
        %v3479 = vpop.f32.mrf.mxu0
        %3480 = vdwg.mxu0
        %v3482 = vsel %vm2385, %v2382, 0
        %3484 = vmatprep.subr.mxu0 0.0
        %3485 = vmatpush1.msra.mxu0 0.0
        %3486 = vmatprep.subr.mxu0 0.0
        %3487 = vmatpush1.msra.mxu0 0.0
        %3488 = vmatprep.subr.mxu0 0.0
        %3489 = vmatpush1.msra.mxu0 0.0
        %3490 = vmatprep.subr.mxu0 0.0
        %3491 = vmatpush1.msra.mxu0 0.0
        %3492 = vmatprep.subr.mxu0 0.0
        %3493 = vmatpush1.msra.mxu0 0.0
        %3494 = vmatprep.subr.mxu0 0.0
        %3495 = vmatpush1.msra.mxu0 0.0
        %3496 = vmatprep.subr.mxu0 0.0
        %3497 = vmatpush1.msra.mxu0 0.0
        %3498 = vmatprep.subr.mxu0 0.0
        %3499 = vmatpush1.msra.mxu0 0.0
        %3500 = vmatprep.subr.mxu0 0.0
        %3501 = vmatpush1.msra.mxu0 0.0
        %3502 = vmatprep.subr.mxu0 0.0
        %3503 = vmatpush1.msra.mxu0 0.0
        %3504 = vmatprep.subr.mxu0 0.0
        %3505 = vmatpush1.msra.mxu0 0.0
        %3506 = vmatprep.subr.mxu0 0.0
        %3507 = vmatpush1.msra.mxu0 0.0
        %3508 = vmatprep.subr.mxu0 0.0
        %3509 = vmatpush1.msra.mxu0 0.0
        %3510 = vmatprep.subr.mxu0 0.0
        %3511 = vmatpush1.msra.mxu0 0.0
        %3512 = vmatprep.subr.mxu0 0.0
        %3513 = vmatpush1.msra.mxu0 0.0
        %3514 = vmatprep.subr.mxu0 0.0
        %3515 = vmatpush1.msra.mxu0 %v1264
        %3516 = vmatprep.subr.mxu0 0.0
        %3517 = vmatpush2.msra.mxu0 0.0
        %3518 = vmatprep.subr.mxu0 0.0
        %3519 = vmatpush2.msra.mxu0 0.0
        %3520 = vmatprep.subr.mxu0 0.0
        %3521 = vmatpush2.msra.mxu0 0.0
        %3522 = vmatprep.subr.mxu0 0.0
        %3523 = vmatpush2.msra.mxu0 0.0
        %3524 = vmatprep.subr.mxu0 0.0
        %3525 = vmatpush2.msra.mxu0 0.0
        %3526 = vmatprep.subr.mxu0 0.0
        %3527 = vmatpush2.msra.mxu0 0.0
        %3528 = vmatprep.subr.mxu0 0.0
        %3529 = vmatpush2.msra.mxu0 0.0
        %3530 = vmatprep.subr.mxu0 0.0
        %3531 = vmatpush2.msra.mxu0 0.0
        %3532 = vmatprep.subr.mxu0 0.0
        %3533 = vmatpush2.msra.mxu0 0.0
        %3534 = vmatprep.subr.mxu0 0.0
        %3535 = vmatpush2.msra.mxu0 0.0
        %3536 = vmatprep.subr.mxu0 0.0
        %3537 = vmatpush2.msra.mxu0 0.0
        %3538 = vmatprep.subr.mxu0 0.0
        %3539 = vmatpush2.msra.mxu0 0.0
        %3540 = vmatprep.subr.mxu0 0.0
        %3541 = vmatpush2.msra.mxu0 0.0
        %3542 = vmatprep.subr.mxu0 0.0
        %3543 = vmatpush2.msra.mxu0 0.0
        %3544 = vmatprep.subr.mxu0 0.0
        %3545 = vmatpush2.msra.mxu0 0.0
        %3546 = vmatprep.subr.mxu0 0.0
        %3547 = vmatpush2.msra.mxu0 0.0
        %3548 = vmatprep.mubr.f32.mxu0 0.0
        %3549 = vmatmul.mubr.f32.gmra.mxu0 %v3482
        %v3550 = vpop.f32.mrf.mxu0
        %v3551 = vadd.f32 0.0, %v3550
        %v3552 = vpop.f32.mrf.mxu0
        %3553 = vdwg.mxu0
        %v3554 = vmul.f32 %v2456, 0.088388346
        %v3555 = vmul.f32 %v2529, 0.088388346
        %v3556 = vmul.f32 %v2602, 0.088388346
        %v3557 = vmul.f32 %v2675, 0.088388346
        %v3558 = vmul.f32 %v2748, 0.088388346
        %v3559 = vmul.f32 %v2821, 0.088388346
        %v3560 = vmul.f32 %v2894, 0.088388346
        %v3561 = vmul.f32 %v2967, 0.088388346
        %v3562 = vmul.f32 %v3040, 0.088388346
        %v3563 = vmul.f32 %v3113, 0.088388346
        %v3564 = vmul.f32 %v3186, 0.088388346
        %v3565 = vmul.f32 %v3259, 0.088388346
        %v3566 = vmul.f32 %v3332, 0.088388346
        %v3567 = vmul.f32 %v3405, 0.088388346
        %v3568 = vmul.f32 %v3478, 0.088388346
        %v3569 = vmul.f32 %v3551, 0.088388346
        %v3570 = vmul.f32 %v3554, 1.442695
        %v3571 = vpow.pop %v3570
        %v3572 = vmul.f32 %v3555, 1.442695
        %v3573 = vpow.pop %v3572
        %v3574 = vmul.f32 %v3556, 1.442695
        %v3575 = vpow.pop %v3574
        %v3576 = vmul.f32 %v3557, 1.442695
        %v3577 = vpow.pop %v3576
        %v3578 = vmul.f32 %v3558, 1.442695
        %v3579 = vpow.pop %v3578
        %v3580 = vmul.f32 %v3559, 1.442695
        %v3581 = vpow.pop %v3580
        %v3582 = vmul.f32 %v3560, 1.442695
        %v3583 = vpow.pop %v3582
        %v3584 = vmul.f32 %v3561, 1.442695
        %v3585 = vpow.pop %v3584
        %v3586 = vmul.f32 %v3562, 1.442695
        %v3587 = vpow.pop %v3586
        %v3588 = vmul.f32 %v3563, 1.442695
        %v3589 = vpow.pop %v3588
        %v3590 = vmul.f32 %v3564, 1.442695
        %v3591 = vpow.pop %v3590
        %v3592 = vmul.f32 %v3565, 1.442695
        %v3593 = vpow.pop %v3592
        %v3594 = vmul.f32 %v3566, 1.442695
        %v3595 = vpow.pop %v3594
        %v3596 = vmul.f32 %v3567, 1.442695
        %v3597 = vpow.pop %v3596
        %v3598 = vmul.f32 %v3568, 1.442695
        %v3599 = vpow.pop %v3598
        %v3600 = vmul.f32 %v3569, 1.442695
        %v3601 = vpow.pop %v3600
        %v3602 = vsel %vm957, %v3571, 0.0
        %v3603 = vrot.slane %v3602, 4
        %v3604 = vadd.f32 %v3602, %v3603
        %v3605 = vrot.slane %v3604, 2
        %v3606 = vadd.f32 %v3604, %v3605
        %v3607 = vrot.slane %v3606, 1
        %v3608 = vadd.f32 %v3606, %v3607
        %v3609 = vsel %vm957, %v3573, 0.0
        %v3610 = vrot.slane %v3609, 4
        %v3611 = vadd.f32 %v3609, %v3610
        %v3612 = vrot.slane %v3611, 2
        %v3613 = vadd.f32 %v3611, %v3612
        %v3614 = vrot.slane %v3613, 1
        %v3615 = vadd.f32 %v3613, %v3614
        %v3616 = vsel %vm957, %v3575, 0.0
        %v3617 = vrot.slane %v3616, 4
        %v3618 = vadd.f32 %v3616, %v3617
        %v3619 = vrot.slane %v3618, 2
        %v3620 = vadd.f32 %v3618, %v3619
        %v3621 = vrot.slane %v3620, 1
        %v3622 = vadd.f32 %v3620, %v3621
        %v3623 = vsel %vm957, %v3577, 0.0
        %v3624 = vrot.slane %v3623, 4
        %v3625 = vadd.f32 %v3623, %v3624
        %v3626 = vrot.slane %v3625, 2
        %v3627 = vadd.f32 %v3625, %v3626
        %v3628 = vrot.slane %v3627, 1
        %v3629 = vadd.f32 %v3627, %v3628
        %v3630 = vsel %vm957, %v3579, 0.0
        %v3631 = vrot.slane %v3630, 4
        %v3632 = vadd.f32 %v3630, %v3631
        %v3633 = vrot.slane %v3632, 2
        %v3634 = vadd.f32 %v3632, %v3633
        %v3635 = vrot.slane %v3634, 1
        %v3636 = vadd.f32 %v3634, %v3635
        %v3637 = vsel %vm957, %v3581, 0.0
        %v3638 = vrot.slane %v3637, 4
        %v3639 = vadd.f32 %v3637, %v3638
        %v3640 = vrot.slane %v3639, 2
        %v3641 = vadd.f32 %v3639, %v3640
        %v3642 = vrot.slane %v3641, 1
        %v3643 = vadd.f32 %v3641, %v3642
        %v3644 = vsel %vm957, %v3583, 0.0
        %v3645 = vrot.slane %v3644, 4
        %v3646 = vadd.f32 %v3644, %v3645
        %v3647 = vrot.slane %v3646, 2
        %v3648 = vadd.f32 %v3646, %v3647
        %v3649 = vrot.slane %v3648, 1
        %v3650 = vadd.f32 %v3648, %v3649
        %v3651 = vsel %vm957, %v3585, 0.0
        %v3652 = vrot.slane %v3651, 4
        %v3653 = vadd.f32 %v3651, %v3652
        %v3654 = vrot.slane %v3653, 2
        %v3655 = vadd.f32 %v3653, %v3654
        %v3656 = vrot.slane %v3655, 1
        %v3657 = vadd.f32 %v3655, %v3656
        %v3658 = vsel %vm957, %v3587, 0.0
        %v3659 = vrot.slane %v3658, 4
        %v3660 = vadd.f32 %v3658, %v3659
        %v3661 = vrot.slane %v3660, 2
        %v3662 = vadd.f32 %v3660, %v3661
        %v3663 = vrot.slane %v3662, 1
        %v3664 = vadd.f32 %v3662, %v3663
        %v3665 = vsel %vm957, %v3589, 0.0
        %v3666 = vrot.slane %v3665, 4
        %v3667 = vadd.f32 %v3665, %v3666
        %v3668 = vrot.slane %v3667, 2
        %v3669 = vadd.f32 %v3667, %v3668
        %v3670 = vrot.slane %v3669, 1
        %v3671 = vadd.f32 %v3669, %v3670
        %v3672 = vsel %vm957, %v3591, 0.0
        %v3673 = vrot.slane %v3672, 4
        %v3674 = vadd.f32 %v3672, %v3673
        %v3675 = vrot.slane %v3674, 2
        %v3676 = vadd.f32 %v3674, %v3675
        %v3677 = vrot.slane %v3676, 1
        %v3678 = vadd.f32 %v3676, %v3677
        %v3679 = vsel %vm957, %v3593, 0.0
        %v3680 = vrot.slane %v3679, 4
        %v3681 = vadd.f32 %v3679, %v3680
        %v3682 = vrot.slane %v3681, 2
        %v3683 = vadd.f32 %v3681, %v3682
        %v3684 = vrot.slane %v3683, 1
        %v3685 = vadd.f32 %v3683, %v3684
        %v3686 = vsel %vm957, %v3595, 0.0
        %v3687 = vrot.slane %v3686, 4
        %v3688 = vadd.f32 %v3686, %v3687
        %v3689 = vrot.slane %v3688, 2
        %v3690 = vadd.f32 %v3688, %v3689
        %v3691 = vrot.slane %v3690, 1
        %v3692 = vadd.f32 %v3690, %v3691
        %v3693 = vsel %vm957, %v3597, 0.0
        %v3694 = vrot.slane %v3693, 4
        %v3695 = vadd.f32 %v3693, %v3694
        %v3696 = vrot.slane %v3695, 2
        %v3697 = vadd.f32 %v3695, %v3696
        %v3698 = vrot.slane %v3697, 1
        %v3699 = vadd.f32 %v3697, %v3698
        %v3700 = vsel %vm957, %v3599, 0.0
        %v3701 = vrot.slane %v3700, 4
        %v3702 = vadd.f32 %v3700, %v3701
        %v3703 = vrot.slane %v3702, 2
        %v3704 = vadd.f32 %v3702, %v3703
        %v3705 = vrot.slane %v3704, 1
        %v3706 = vadd.f32 %v3704, %v3705
        %v3707 = vsel %vm957, %v3601, 0.0
        %v3708 = vrot.slane %v3707, 4
        %v3709 = vadd.f32 %v3707, %v3708
        %v3710 = vrot.slane %v3709, 2
        %v3711 = vadd.f32 %v3709, %v3710
        %v3712 = vrot.slane %v3711, 1
        %v3713 = vadd.f32 %v3711, %v3712
        %v3714 = vrcp.pop %v3608
        %v3715 = vrcp.pop %v3615
        %v3716 = vrcp.pop %v3622
        %v3717 = vrcp.pop %v3629
        %v3718 = vrcp.pop %v3636
        %v3719 = vrcp.pop %v3643
        %v3720 = vrcp.pop %v3650
        %v3721 = vrcp.pop %v3657
        %v3722 = vrcp.pop %v3664
        %v3723 = vrcp.pop %v3671
        %v3724 = vrcp.pop %v3678
        %v3725 = vrcp.pop %v3685
        %v3726 = vrcp.pop %v3692
        %v3727 = vrcp.pop %v3699
        %v3728 = vrcp.pop %v3706
        %v3729 = vrcp.pop %v3713
        %v3730 = vmul.f32 %v3571, %v3714
        %v3731 = vmul.f32 %v3573, %v3715
        %v3732 = vmul.f32 %v3575, %v3716
        %v3733 = vmul.f32 %v3577, %v3717
        %v3734 = vmul.f32 %v3579, %v3718
        %v3735 = vmul.f32 %v3581, %v3719
        %v3736 = vmul.f32 %v3583, %v3720
        %v3737 = vmul.f32 %v3585, %v3721
        %v3738 = vmul.f32 %v3587, %v3722
        %v3739 = vmul.f32 %v3589, %v3723
        %v3740 = vmul.f32 %v3591, %v3724
        %v3741 = vmul.f32 %v3593, %v3725
        %v3742 = vmul.f32 %v3595, %v3726
        %v3743 = vmul.f32 %v3597, %v3727
        %v3744 = vmul.f32 %v3599, %v3728
        %v3745 = vmul.f32 %v3601, %v3729
        %v3746 = vld [vmem:[%s5] sm:$0xf]
        %v3748 = vsel %vm957, %v3730, 0
        %v3751 = vsel %vm957, %v3731, 0
        %v3754 = vsel %vm957, %v3732, 0
        %v3757 = vsel %vm957, %v3733, 0
        %v3760 = vsel %vm957, %v3734, 0
        %v3763 = vsel %vm957, %v3735, 0
        %v3766 = vsel %vm957, %v3736, 0
        %v3769 = vsel %vm957, %v3737, 0
        %v3772 = vsel %vm957, %v3738, 0
        %v3775 = vsel %vm957, %v3739, 0
        %v3778 = vsel %vm957, %v3740, 0
        %v3781 = vsel %vm957, %v3741, 0
        %v3784 = vsel %vm957, %v3742, 0
        %v3787 = vsel %vm957, %v3743, 0
        %v3790 = vsel %vm957, %v3744, 0
        %v3793 = vsel %vm957, %v3745, 0
        %vm3795 = vcmask 1043456
        %v3797 = vsel %vm3795, %v3746, 0
        %3799 = vmatprep.subr.mxu0 0.0
        %3800 = vmatpush1.msra.mxu0 0.0
        %3801 = vmatprep.subr.mxu0 0.0
        %3802 = vmatpush1.msra.mxu0 0.0
        %3803 = vmatprep.subr.mxu0 0.0
        %3804 = vmatpush1.msra.mxu0 0.0
        %3805 = vmatprep.subr.mxu0 0.0
        %3806 = vmatpush1.msra.mxu0 0.0
        %3807 = vmatprep.subr.mxu0 0.0
        %3808 = vmatpush1.msra.mxu0 0.0
        %3809 = vmatprep.subr.mxu0 0.0
        %3810 = vmatpush1.msra.mxu0 0.0
        %3811 = vmatprep.subr.mxu0 0.0
        %3812 = vmatpush1.msra.mxu0 0.0
        %3813 = vmatprep.subr.mxu0 0.0
        %3814 = vmatpush1.msra.mxu0 0.0
        %3815 = vmatprep.subr.mxu0 0.0
        %3816 = vmatpush1.msra.mxu0 0.0
        %3817 = vmatprep.subr.mxu0 0.0
        %3818 = vmatpush1.msra.mxu0 0.0
        %3819 = vmatprep.subr.mxu0 0.0
        %3820 = vmatpush1.msra.mxu0 0.0
        %3821 = vmatprep.subr.mxu0 0.0
        %3822 = vmatpush1.msra.mxu0 0.0
        %3823 = vmatprep.subr.mxu0 0.0
        %3824 = vmatpush1.msra.mxu0 0.0
        %3825 = vmatprep.subr.mxu0 0.0
        %3826 = vmatpush1.msra.mxu0 0.0
        %3827 = vmatprep.subr.mxu0 0.0
        %3828 = vmatpush1.msra.mxu0 0.0
        %3829 = vmatprep.subr.mxu0 0.0
        %3830 = vmatpush1.msra.mxu0 %v3797
        %3831 = vmatprep.subr.mxu0 0.0
        %3832 = vmatpush2.msra.mxu0 0.0
        %3833 = vmatprep.subr.mxu0 0.0
        %3834 = vmatpush2.msra.mxu0 0.0
        %3835 = vmatprep.subr.mxu0 0.0
        %3836 = vmatpush2.msra.mxu0 0.0
        %3837 = vmatprep.subr.mxu0 0.0
        %3838 = vmatpush2.msra.mxu0 0.0
        %3839 = vmatprep.subr.mxu0 0.0
        %3840 = vmatpush2.msra.mxu0 0.0
        %3841 = vmatprep.subr.mxu0 0.0
        %3842 = vmatpush2.msra.mxu0 0.0
        %3843 = vmatprep.subr.mxu0 0.0
        %3844 = vmatpush2.msra.mxu0 0.0
        %3845 = vmatprep.subr.mxu0 0.0
        %3846 = vmatpush2.msra.mxu0 0.0
        %3847 = vmatprep.subr.mxu0 0.0
        %3848 = vmatpush2.msra.mxu0 0.0
        %3849 = vmatprep.subr.mxu0 0.0
        %3850 = vmatpush2.msra.mxu0 0.0
        %3851 = vmatprep.subr.mxu0 0.0
        %3852 = vmatpush2.msra.mxu0 0.0
        %3853 = vmatprep.subr.mxu0 0.0
        %3854 = vmatpush2.msra.mxu0 0.0
        %3855 = vmatprep.subr.mxu0 0.0
        %3856 = vmatpush2.msra.mxu0 0.0
        %3857 = vmatprep.subr.mxu0 0.0
        %3858 = vmatpush2.msra.mxu0 0.0
        %3859 = vmatprep.subr.mxu0 0.0
        %3860 = vmatpush2.msra.mxu0 0.0
        %3861 = vmatprep.subr.mxu0 0.0
        %3862 = vmatpush2.msra.mxu0 0.0
        %3863 = vmatprep.mubr.f32.mxu0 0.0
        %3864 = vmatmul.mubr.f32.gmra.mxu0 %v3748
        %v3865 = vpop.f32.mrf.mxu0
        %v3866 = vadd.f32 0.0, %v3865
        %v3867 = vpop.f32.mrf.mxu0
        %3868 = vmatprep.mubr.f32.mxu0 0.0
        %3869 = vmatmul.mubr.f32.gmra.mxu0 %v3751
        %v3870 = vpop.f32.mrf.mxu0
        %v3871 = vadd.f32 0.0, %v3870
        %v3872 = vpop.f32.mrf.mxu0
        %3873 = vmatprep.mubr.f32.mxu0 0.0
        %3874 = vmatmul.mubr.f32.gmra.mxu0 %v3754
        %v3875 = vpop.f32.mrf.mxu0
        %v3876 = vadd.f32 0.0, %v3875
        %v3877 = vpop.f32.mrf.mxu0
        %3878 = vmatprep.mubr.f32.mxu0 0.0
        %3879 = vmatmul.mubr.f32.gmra.mxu0 %v3757
        %v3880 = vpop.f32.mrf.mxu0
        %v3881 = vadd.f32 0.0, %v3880
        %v3882 = vpop.f32.mrf.mxu0
        %3883 = vmatprep.mubr.f32.mxu0 0.0
        %3884 = vmatmul.mubr.f32.gmra.mxu0 %v3760
        %v3885 = vpop.f32.mrf.mxu0
        %v3886 = vadd.f32 0.0, %v3885
        %v3887 = vpop.f32.mrf.mxu0
        %3888 = vmatprep.mubr.f32.mxu0 0.0
        %3889 = vmatmul.mubr.f32.gmra.mxu0 %v3763
        %v3890 = vpop.f32.mrf.mxu0
        %v3891 = vadd.f32 0.0, %v3890
        %v3892 = vpop.f32.mrf.mxu0
        %3893 = vmatprep.mubr.f32.mxu0 0.0
        %3894 = vmatmul.mubr.f32.gmra.mxu0 %v3766
        %v3895 = vpop.f32.mrf.mxu0
        %v3896 = vadd.f32 0.0, %v3895
        %v3897 = vpop.f32.mrf.mxu0
        %3898 = vmatprep.mubr.f32.mxu0 0.0
        %3899 = vmatmul.mubr.f32.gmra.mxu0 %v3769
        %v3900 = vpop.f32.mrf.mxu0
        %v3901 = vadd.f32 0.0, %v3900
        %v3902 = vpop.f32.mrf.mxu0
        %3903 = vmatprep.mubr.f32.mxu0 0.0
        %3904 = vmatmul.mubr.f32.gmra.mxu0 %v3772
        %v3905 = vpop.f32.mrf.mxu0
        %v3906 = vadd.f32 0.0, %v3905
        %v3907 = vpop.f32.mrf.mxu0
        %3908 = vmatprep.mubr.f32.mxu0 0.0
        %3909 = vmatmul.mubr.f32.gmra.mxu0 %v3775
        %v3910 = vpop.f32.mrf.mxu0
        %v3911 = vadd.f32 0.0, %v3910
        %v3912 = vpop.f32.mrf.mxu0
        %3913 = vmatprep.mubr.f32.mxu0 0.0
        %3914 = vmatmul.mubr.f32.gmra.mxu0 %v3778
        %v3915 = vpop.f32.mrf.mxu0
        %v3916 = vadd.f32 0.0, %v3915
        %v3917 = vpop.f32.mrf.mxu0
        %3918 = vmatprep.mubr.f32.mxu0 0.0
        %3919 = vmatmul.mubr.f32.gmra.mxu0 %v3781
        %v3920 = vpop.f32.mrf.mxu0
        %v3921 = vadd.f32 0.0, %v3920
        %v3922 = vpop.f32.mrf.mxu0
        %3923 = vmatprep.mubr.f32.mxu0 0.0
        %3924 = vmatmul.mubr.f32.gmra.mxu0 %v3784
        %v3925 = vpop.f32.mrf.mxu0
        %v3926 = vadd.f32 0.0, %v3925
        %v3927 = vpop.f32.mrf.mxu0
        %3928 = vmatprep.mubr.f32.mxu0 0.0
        %3929 = vmatmul.mubr.f32.gmra.mxu0 %v3787
        %v3930 = vpop.f32.mrf.mxu0
        %v3931 = vadd.f32 0.0, %v3930
        %v3932 = vpop.f32.mrf.mxu0
        %3933 = vmatprep.mubr.f32.mxu0 0.0
        %3934 = vmatmul.mubr.f32.gmra.mxu0 %v3790
        %v3935 = vpop.f32.mrf.mxu0
        %v3936 = vadd.f32 0.0, %v3935
        %v3937 = vpop.f32.mrf.mxu0
        %3938 = vmatprep.mubr.f32.mxu0 0.0
        %3939 = vmatmul.mubr.f32.gmra.mxu0 %v3793
        %v3940 = vpop.f32.mrf.mxu0
        %v3941 = vadd.f32 0.0, %v3940
        %v3942 = vpop.f32.mrf.mxu0
        %3943 = vdwg.mxu0
        %v3944 = vmul.f32 %v3866, %v679
        %v3945 = vmul.f32 %v3871, %v684
        %v3946 = vmul.f32 %v3876, %v689
        %v3947 = vmul.f32 %v3881, %v694
        %v3948 = vmul.f32 %v3886, %v699
        %v3949 = vmul.f32 %v3891, %v704
        %v3950 = vmul.f32 %v3896, %v709
        %v3951 = vmul.f32 %v3901, %v714
        %v3952 = vmul.f32 %v3906, %v719
        %v3953 = vmul.f32 %v3911, %v724
        %v3954 = vmul.f32 %v3916, %v729
        %v3955 = vmul.f32 %v3921, %v734
        %v3956 = vmul.f32 %v3926, %v739
        %v3957 = vmul.f32 %v3931, %v744
        %v3958 = vmul.f32 %v3936, %v749
        %v3959 = vmul.f32 %v3941, %v754
        %vm3960 = vcmask 130048
        %v3961 = vsel %vm3960, %v3944, 0.0
        %v3962 = vrot.slane %v3961, 4
        %v3963 = vadd.f32 %v3961, %v3962
        %v3964 = vrot.slane %v3963, 2
        %v3965 = vadd.f32 %v3963, %v3964
        %v3966 = vrot.slane %v3965, 1
        %v3967 = vadd.f32 %v3965, %v3966
        %v3968 = vsel %vm3960, %v3945, 0.0
        %v3969 = vrot.slane %v3968, 4
        %v3970 = vadd.f32 %v3968, %v3969
        %v3971 = vrot.slane %v3970, 2
        %v3972 = vadd.f32 %v3970, %v3971
        %v3973 = vrot.slane %v3972, 1
        %v3974 = vadd.f32 %v3972, %v3973
        %v3975 = vsel %vm3960, %v3946, 0.0
        %v3976 = vrot.slane %v3975, 4
        %v3977 = vadd.f32 %v3975, %v3976
        %v3978 = vrot.slane %v3977, 2
        %v3979 = vadd.f32 %v3977, %v3978
        %v3980 = vrot.slane %v3979, 1
        %v3981 = vadd.f32 %v3979, %v3980
        %v3982 = vsel %vm3960, %v3947, 0.0
        %v3983 = vrot.slane %v3982, 4
        %v3984 = vadd.f32 %v3982, %v3983
        %v3985 = vrot.slane %v3984, 2
        %v3986 = vadd.f32 %v3984, %v3985
        %v3987 = vrot.slane %v3986, 1
        %v3988 = vadd.f32 %v3986, %v3987
        %v3989 = vsel %vm3960, %v3948, 0.0
        %v3990 = vrot.slane %v3989, 4
        %v3991 = vadd.f32 %v3989, %v3990
        %v3992 = vrot.slane %v3991, 2
        %v3993 = vadd.f32 %v3991, %v3992
        %v3994 = vrot.slane %v3993, 1
        %v3995 = vadd.f32 %v3993, %v3994
        %v3996 = vsel %vm3960, %v3949, 0.0
        %v3997 = vrot.slane %v3996, 4
        %v3998 = vadd.f32 %v3996, %v3997
        %v3999 = vrot.slane %v3998, 2
        %v4000 = vadd.f32 %v3998, %v3999
        %v4001 = vrot.slane %v4000, 1
        %v4002 = vadd.f32 %v4000, %v4001
        %v4003 = vsel %vm3960, %v3950, 0.0
        %v4004 = vrot.slane %v4003, 4
        %v4005 = vadd.f32 %v4003, %v4004
        %v4006 = vrot.slane %v4005, 2
        %v4007 = vadd.f32 %v4005, %v4006
        %v4008 = vrot.slane %v4007, 1
        %v4009 = vadd.f32 %v4007, %v4008
        %v4010 = vsel %vm3960, %v3951, 0.0
        %v4011 = vrot.slane %v4010, 4
        %v4012 = vadd.f32 %v4010, %v4011
        %v4013 = vrot.slane %v4012, 2
        %v4014 = vadd.f32 %v4012, %v4013
        %v4015 = vrot.slane %v4014, 1
        %v4016 = vadd.f32 %v4014, %v4015
        %v4017 = vsel %vm3960, %v3952, 0.0
        %v4018 = vrot.slane %v4017, 4
        %v4019 = vadd.f32 %v4017, %v4018
        %v4020 = vrot.slane %v4019, 2
        %v4021 = vadd.f32 %v4019, %v4020
        %v4022 = vrot.slane %v4021, 1
        %v4023 = vadd.f32 %v4021, %v4022
        %v4024 = vsel %vm3960, %v3953, 0.0
        %v4025 = vrot.slane %v4024, 4
        %v4026 = vadd.f32 %v4024, %v4025
        %v4027 = vrot.slane %v4026, 2
        %v4028 = vadd.f32 %v4026, %v4027
        %v4029 = vrot.slane %v4028, 1
        %v4030 = vadd.f32 %v4028, %v4029
        %v4031 = vsel %vm3960, %v3954, 0.0
        %v4032 = vrot.slane %v4031, 4
        %v4033 = vadd.f32 %v4031, %v4032
        %v4034 = vrot.slane %v4033, 2
        %v4035 = vadd.f32 %v4033, %v4034
        %v4036 = vrot.slane %v4035, 1
        %v4037 = vadd.f32 %v4035, %v4036
        %v4038 = vsel %vm3960, %v3955, 0.0
        %v4039 = vrot.slane %v4038, 4
        %v4040 = vadd.f32 %v4038, %v4039
        %v4041 = vrot.slane %v4040, 2
        %v4042 = vadd.f32 %v4040, %v4041
        %v4043 = vrot.slane %v4042, 1
        %v4044 = vadd.f32 %v4042, %v4043
        %v4045 = vsel %vm3960, %v3956, 0.0
        %v4046 = vrot.slane %v4045, 4
        %v4047 = vadd.f32 %v4045, %v4046
        %v4048 = vrot.slane %v4047, 2
        %v4049 = vadd.f32 %v4047, %v4048
        %v4050 = vrot.slane %v4049, 1
        %v4051 = vadd.f32 %v4049, %v4050
        %v4052 = vsel %vm3960, %v3957, 0.0
        %v4053 = vrot.slane %v4052, 4
        %v4054 = vadd.f32 %v4052, %v4053
        %v4055 = vrot.slane %v4054, 2
        %v4056 = vadd.f32 %v4054, %v4055
        %v4057 = vrot.slane %v4056, 1
        %v4058 = vadd.f32 %v4056, %v4057
        %v4059 = vsel %vm3960, %v3958, 0.0
        %v4060 = vrot.slane %v4059, 4
        %v4061 = vadd.f32 %v4059, %v4060
        %v4062 = vrot.slane %v4061, 2
        %v4063 = vadd.f32 %v4061, %v4062
        %v4064 = vrot.slane %v4063, 1
        %v4065 = vadd.f32 %v4063, %v4064
        %v4066 = vsel %vm3960, %v3959, 0.0
        %v4067 = vrot.slane %v4066, 4
        %v4068 = vadd.f32 %v4066, %v4067
        %v4069 = vrot.slane %v4068, 2
        %v4070 = vadd.f32 %v4068, %v4069
        %v4071 = vrot.slane %v4070, 1
        %v4072 = vadd.f32 %v4070, %v4071
        %v4073 = vld [vmem:[%s6] sm:$0xff]
        %v4074 = vld [vmem:[%s6 + $0x8] sm:$0xff]
        %v4075 = vld [vmem:[%s7] sm:$0x1]
        %v4077 = vlaneseq
        %v4078 = vshrl.u32 %v4077, 7
        %v4079 = vsub.s32 0, %v4078
        %v4080 = vrot.slane %v4075, %v4079
        %vm4098 = vcmask 1041409
        %v4099 = vsel %vm4098, %v3974, %v3967
        %vm4100 = vcmask 1042434
        %v4101 = vsel %vm4100, %v3981, %v4099
        %vm4102 = vcmask 1043459
        %v4103 = vsel %vm4102, %v3988, %v4101
        %vm4104 = vcmask 1044484
        %v4105 = vsel %vm4104, %v3995, %v4103
        %vm4106 = vcmask 1045509
        %v4107 = vsel %vm4106, %v4002, %v4105
        %vm4108 = vcmask 1046534
        %v4109 = vsel %vm4108, %v4009, %v4107
        %vm4110 = vcmask 1047559
        %v4111 = vsel %vm4110, %v4016, %v4109
        %v4112 = vsel %vm4098, %v4030, %v4023
        %v4113 = vsel %vm4100, %v4037, %v4112
        %v4114 = vsel %vm4102, %v4044, %v4113
        %v4115 = vsel %vm4104, %v4051, %v4114
        %v4116 = vsel %vm4106, %v4058, %v4115
        %v4117 = vsel %vm4108, %v4065, %v4116
        %v4118 = vsel %vm4110, %v4072, %v4117
        %v4119 = vsel %vm3960, %v4111, 0
        %v4121 = vsel %vm3960, %v4118, 0
        %4123 = vmatprep.subr.mxu0 0.0
        %4124 = vmatpush1.msra.mxu0 0.0
        %4125 = vmatprep.subr.mxu0 0.0
        %4126 = vmatpush1.msra.mxu0 0.0
        %4127 = vmatprep.subr.mxu0 0.0
        %4128 = vmatpush1.msra.mxu0 0.0
        %4129 = vmatprep.subr.mxu0 0.0
        %4130 = vmatpush1.msra.mxu0 0.0
        %4131 = vmatprep.subr.mxu0 0.0
        %4132 = vmatpush1.msra.mxu0 0.0
        %4133 = vmatprep.subr.mxu0 0.0
        %4134 = vmatpush1.msra.mxu0 0.0
        %4135 = vmatprep.subr.mxu0 0.0
        %4136 = vmatpush1.msra.mxu0 0.0
        %4137 = vmatprep.subr.mxu0 0.0
        %4138 = vmatpush1.msra.mxu0 0.0
        %4139 = vmatprep.subr.mxu0 0.0
        %4140 = vmatpush1.msra.mxu0 0.0
        %4141 = vmatprep.subr.mxu0 0.0
        %4142 = vmatpush1.msra.mxu0 0.0
        %4143 = vmatprep.subr.mxu0 0.0
        %4144 = vmatpush1.msra.mxu0 0.0
        %4145 = vmatprep.subr.mxu0 0.0
        %4146 = vmatpush1.msra.mxu0 0.0
        %4147 = vmatprep.subr.mxu0 0.0
        %4148 = vmatpush1.msra.mxu0 0.0
        %4149 = vmatprep.subr.mxu0 0.0
        %4150 = vmatpush1.msra.mxu0 0.0
        %4151 = vmatprep.subr.mxu0 0.0
        %4152 = vmatpush1.msra.mxu0 %v4074
        %4153 = vmatprep.subr.mxu0 0.0
        %4154 = vmatpush1.msra.mxu0 %v4073
        %4155 = vmatprep.subr.mxu0 0.0
        %4156 = vmatpush2.msra.mxu0 0.0
        %4157 = vmatprep.subr.mxu0 0.0
        %4158 = vmatpush2.msra.mxu0 0.0
        %4159 = vmatprep.subr.mxu0 0.0
        %4160 = vmatpush2.msra.mxu0 0.0
        %4161 = vmatprep.subr.mxu0 0.0
        %4162 = vmatpush2.msra.mxu0 0.0
        %4163 = vmatprep.subr.mxu0 0.0
        %4164 = vmatpush2.msra.mxu0 0.0
        %4165 = vmatprep.subr.mxu0 0.0
        %4166 = vmatpush2.msra.mxu0 0.0
        %4167 = vmatprep.subr.mxu0 0.0
        %4168 = vmatpush2.msra.mxu0 0.0
        %4169 = vmatprep.subr.mxu0 0.0
        %4170 = vmatpush2.msra.mxu0 0.0
        %4171 = vmatprep.subr.mxu0 0.0
        %4172 = vmatpush2.msra.mxu0 0.0
        %4173 = vmatprep.subr.mxu0 0.0
        %4174 = vmatpush2.msra.mxu0 0.0
        %4175 = vmatprep.subr.mxu0 0.0
        %4176 = vmatpush2.msra.mxu0 0.0
        %4177 = vmatprep.subr.mxu0 0.0
        %4178 = vmatpush2.msra.mxu0 0.0
        %4179 = vmatprep.subr.mxu0 0.0
        %4180 = vmatpush2.msra.mxu0 0.0
        %4181 = vmatprep.subr.mxu0 0.0
        %4182 = vmatpush2.msra.mxu0 0.0
        %4183 = vmatprep.subr.mxu0 0.0
        %4184 = vmatpush2.msra.mxu0 0.0
        %4185 = vmatprep.subr.mxu0 0.0
        %4186 = vmatpush2.msra.mxu0 0.0
        %4187 = vmatprep.mubr.f32.mxu0 0.0
        %4188 = vmatmul.mubr.f32.gmra.mxu0 %v4119
        %v4189 = vpop.f32.mrf.mxu0
        %v4190 = vadd.f32 %v4080, %v4189
        %v4191 = vpop.f32.mrf.mxu0
        %4192 = vmatprep.mubr.f32.mxu0 0.0
        %4193 = vmatmul.mubr.f32.gmra.mxu0 %v4121
        %v4194 = vpop.f32.mrf.mxu0
        %v4195 = vadd.f32 %v4080, %v4194
        %v4196 = vpop.f32.mrf.mxu0
        %4197 = vdwg.mxu0
        %4198 = vst.msk [vmem:[%s355] sm:$0xff] %vm957, %v4190
        %4199 = vst.msk [vmem:[%s355 + $0x8] sm:$0xff] %vm957, %v4195
        %s4200 = smul.u32 2, %s23
        %p4201 = scmp.lt.s32.totalorder %s4200, 3
        %s4202 = scalar_select %p4201, %s4200, 3
        %s4203 = smul.addr %s4202, 8
        %s4204 = scalar_lea.vmem %s8, %s4203
        // Predicated region
        $region65: #{tpu_custom_call.1} parent=51 // pred_check
          %p4205 = pneg %p214
        $region66: #{tpu_custom_call.1} parent=51 // pred_check_branch
          %4207 = sbr.rel (%p4205) target = $region68
        $region67: #{tpu_custom_call.1} parent=51 // pred_region
          %s4208 = smul.u32 2, %s23
        $region68: #{tpu_custom_call.1} parent=51 // pred_fallthru
          _
      $region52: #{tpu_custom_call.1} parent=5 // pred_fallthru
        _
      %p4209 = scmp.le.s32.totalorder 2, %s18
      // Predicated region
      $region69: #{tpu_custom_call.1} parent=5 // pred_check
        %p4210 = pneg %p4209
      $region70: #{tpu_custom_call.1} parent=5 // pred_check_branch
        %4212 = sbr.rel (%p4210) target = $region72
      $region71: #{tpu_custom_call.1} parent=5 // pred_region
        %s4213 = ssub.s32 %s18, 2
        // Predicated region
        $region73: #{tpu_custom_call.1} parent=71 // pred_check
          %p4214 = pneg %p220
        $region74: #{tpu_custom_call.1} parent=71 // pred_check_branch
          %4216 = sbr.rel (%p4214) target = $region76
        $region75: #{tpu_custom_call.1} parent=71 // pred_region
          %s4217 = smul.u32 2, %s24
          %p4218 = scmp.lt.s32.totalorder %s4217, 3
          %s4219 = scalar_select %p4218, %s4217, 3
          %s4220 = smul.addr %s4219, 8
          %s4221 = scalar_lea.vmem %s8, %s4220
        $region76: #{tpu_custom_call.1} parent=71 // pred_fallthru
          _
      $region72: #{tpu_custom_call.1} parent=5 // pred_fallthru
        _
    $region6: #{tpu_custom_call.1} parent=1 // loop_footer
      %s22 = sadd.s32 1, %s18
    $region7: #{tpu_custom_call.1} parent=1 // loop_footer_branch
      %17 = sbr.rel target = $region3
    $region8: #{tpu_custom_call.1} parent=1 // loop_exit
      _
    %4222 = vsyncpa [#allocation3], 1
    %s4223 = scalar_lea.sflag [#allocation3], 1
    %4224 = vsyncpa %s4223, 1
    %4225 = vsyncpa [#allocation5], 1

</llo_original>
